<compile_context>
chip_gen: v7x
topology: tpu7x:2x2x1
jax: 0.10.0
libtpu: 0.0.40
codegen_flags: <defaults>
</compile_context>

<pallas_src>
import functools

import jax
import jax.numpy as jnp
import numpy as np
from jax.experimental import pallas as pl
from jax.experimental.pallas import tpu as pltpu


# ------------------------------ Pallas kernel -------------------------------


def _msm_kernel(x_ref, coef_ref, out_ref, xp_scr, o1p_scr,
                *, k, dil, pad, h, w):
    """Fused MultiShapeKernel forward on one (C_TILE, H, W) slab.

    x_ref    : (1, CT, H, W)      input slab
    coef_ref : (1, CT, 1, R)      per-channel coefficients,
                                  R = 2K + K^2 + 11, laid out as
                                  [fH taps | fW taps | fsq taps |
                                   insH, lamb_lH, lamb_hH,
                                   insW, lamb_lW, lamb_hW,
                                   ins_sq, lamb_l_sq, lamb_h_sq, gamma, beta]
    out_ref  : (1, CT, H, W)      final output  gamma*out2 + beta*x + x2
    xp_scr   : (CT, H+2p, W+2p)   VMEM scratch: reflect-padded x
    o1p_scr  : (CT, H+2p, W)      VMEM scratch: H-reflect-padded out1
    """
    kk = k * k
    base = 2 * k + kk
    x = x_ref[0]                                    # (CT, H, W)
    co = coef_ref[0]                                # (CT, 1, R)

    def cf(r):                                      # per-channel scalar
        return co[:, :, r:r + 1]                    # (CT, 1, 1)

    # ---- build the reflect-padded copy of x in VMEM (no HBM pad pass) ----
    xp_scr[:, pad:pad + h, pad:pad + w] = x
    for i in range(pad):                            # reflect columns (W axis)
        xp_scr[:, pad:pad + h, i:i + 1] = x[:, :, pad - i:pad - i + 1]
        xp_scr[:, pad:pad + h, pad + w + i:pad + w + i + 1] = \
            x[:, :, w - 2 - i:w - 1 - i]
    for i in range(pad):                            # reflect rows (H axis)
        xp_scr[:, i:i + 1, :] = xp_scr[:, 2 * pad - i:2 * pad - i + 1, :]
        xp_scr[:, pad + h + i:pad + h + i + 1, :] = \
            xp_scr[:, pad + h - 2 - i:pad + h - 1 - i, :]

    # ---- spatial_strip_att (H=True): dynamic 1xK depthwise conv along W ----
    # TODO(synk): taps use static offset slices; pltpu.roll + edge masks would
    # move the shift work onto the XLU if the kernel ever becomes ld/st bound.
    acc_h = jnp.zeros_like(x)
    for t in range(k):
        acc_h = acc_h + cf(t) * xp_scr[:, pad:pad + h, t * dil:t * dil + w]
    gap_w = jnp.mean(x, axis=2, keepdims=True)      # (CT, H, 1)
    ins_h = cf(base + 0)
    out1 = (acc_h * (ins_h + 1.0) - ins_h * gap_w) * cf(base + 1) \
        + x * (cf(base + 2) + 1.0)

    # ---- dynamic_filter: dynamic KxK depthwise conv ----
    acc_q = jnp.zeros_like(x)
    for a in range(k):
        for b in range(k):
            acc_q = acc_q + cf(2 * k + a * k + b) * \
                xp_scr[:, a * dil:a * dil + h, b * dil:b * dil + w]
    gap_g = jnp.mean(gap_w, axis=1, keepdims=True)  # (CT, 1, 1) -- reuse gap_w
    ins_q = cf(base + 6)
    x2 = (acc_q * (ins_q + 1.0) - ins_q * gap_g) * cf(base + 7) \
        + x * (cf(base + 8) + 1.0)

    # ---- spatial_strip_att (H=False): dynamic Kx1 depthwise conv along H ----
    o1p_scr[:, pad:pad + h, :] = out1
    for i in range(pad):
        o1p_scr[:, i:i + 1, :] = out1[:, pad - i:pad - i + 1, :]
        o1p_scr[:, pad + h + i:pad + h + i + 1, :] = \
            out1[:, h - 2 - i:h - 1 - i, :]
    acc_w = jnp.zeros_like(x)
    for t in range(k):
        acc_w = acc_w + cf(k + t) * o1p_scr[:, t * dil:t * dil + h, :]
    gap_h = jnp.mean(out1, axis=1, keepdims=True)   # (CT, 1, W)
    ins_w = cf(base + 3)
    out2 = (acc_w * (ins_w + 1.0) - ins_w * gap_h) * cf(base + 4) \
        + out1 * (cf(base + 5) + 1.0)

    # ---- cubic_attention combine + MultiShapeKernel sum ----
    out_ref[0] = cf(base + 9) * out2 + cf(base + 10) * x + x2


# ------------------------------- glue / wrapper -----------------------------


def _vmem_limit_bytes():
    # Generation-aware scoped-VMEM request (v5e/v6e: 128 MiB phys, v7x: 64 MiB).
    try:
        cap = int(pltpu.get_tpu_info().vmem_capacity_bytes)
    except Exception:
        cap = 64 * 1024 * 1024                       # conservative (v7x-sized)
    return int(min(cap * 3 // 4, 96 * 1024 * 1024))


def _pick_c_tile(c, h, w, pad, vmem_limit):
    """Largest channel tile whose per-step working set fits the VMEM budget."""
    bpe = 4                                          # f32
    img = h * w
    per_chan = bpe * (
        2 * img                                      # x block (double-buffered)
        + 2 * img                                    # out block (double-buffered)
        + (h + 2 * pad) * (w + 2 * pad)              # xp scratch
        + (h + 2 * pad) * w                          # o1p scratch
        + 6 * img                                    # live temporaries
    ) + 2 * 8 * 128 * bpe                            # coef block (tile-padded)
    budget = (vmem_limit * 2) // 3                   # headroom for pipelining
    # TODO(synk): add an H-tiling (spatial) fallback with a pad-row halo for
    # images so large that even c_tile=1 exceeds the budget.
    return int(max(1, min(c, budget // per_chan)))


def multi_shape_kernel_forward(x, params, *, kernel_size=3, dilation=1,
                               group=2, c_tile=None):
    n, c, h, w = x.shape
    k = kernel_size
    kk = k * k
    cpg = c // group
    pad = dilation * (k - 1) // 2
    f32 = jnp.float32
    # TODO(synk): a lane-dense (W padded to 128) output layout and bf16 HBM I/O
    # would further cut masked stores / traffic but break the f32 1e-4 check.
    x = x.astype(f32)

    # ------- filter generation (tiny: global pools + 1x1 convs) -------
    colsum = jnp.sum(x, axis=2)                                  # (N, C, W)
    ap_x = jnp.sum(colsum, axis=2) / (h * w)                     # (N, C)

    fH = jnp.tanh(ap_x @ params['w_conv_H'].astype(f32).T).reshape(n, group, k)
    fH_ck = jnp.repeat(fH, cpg, axis=1)                          # (N, C, K)

    v = ap_x @ params['w_conv_sq'].astype(f32).T                 # (N, G*KK)
    # TODO(synk): BatchNorm2d implemented in eval/inference mode (running
    # stats), not training-mode batch statistics.
    v = (v - params['bn_mean']) / jnp.sqrt(params['bn_var'] + 1e-5)
    v = v * params['bn_gamma'] + params['bn_beta']
    fsq_ck = jnp.repeat(jnp.tanh(v).reshape(n, group, kk), cpg, axis=1)

    # W-strip filter needs the per-channel global mean of out1; compute it
    # analytically from column means of x so out1 never touches HBM.
    colmean = colsum / h                                         # (N, C, W)
    colmean_p = jnp.pad(colmean, ((0, 0), (0, 0), (pad, pad)), mode='reflect')
    wm = jnp.stack([jnp.mean(colmean_p[:, :, t * dilation:t * dilation + w],
                             axis=2) for t in range(k)], axis=2)  # (N, C, K)
    mean_acc = jnp.sum(fH_ck * wm, axis=2)                       # (N, C)
    ins_H = params['inside_all_H'].astype(f32)[None, :]
    ap_o1 = (mean_acc * (ins_H + 1.0) - ins_H * ap_x) \
        * params['lamb_l_H'].astype(f32)[None, :] \
        + ap_x * (params['lamb_h_H'].astype(f32)[None, :] + 1.0)
    fW = jnp.tanh(ap_o1 @ params['w_conv_W'].astype(f32).T).reshape(n, group, k)
    fW_ck = jnp.repeat(fW, cpg, axis=1)                          # (N, C, K)

    # ------- packed per-channel coefficient slab: (N, C, 1, R) -------
    def chan_col(name):                                          # (C,)->(N,C,1)
        return jnp.broadcast_to(params[name].astype(f32)[None, :, None],
                                (n, c, 1))

    coef = jnp.concatenate(
        [fH_ck, fW_ck, fsq_ck,
         chan_col('inside_all_H'), chan_col('lamb_l_H'), chan_col('lamb_h_H'),
         chan_col('inside_all_W'), chan_col('lamb_l_W'), chan_col('lamb_h_W'),
         chan_col('inside_all_sq'), chan_col('lamb_l_sq'),
         chan_col('lamb_h_sq'), chan_col('gamma'), chan_col('beta')],
        axis=2)[:, :, None, :]                                   # (N, C, 1, R)
    r_coef = 2 * k + kk + 11

    # ------- tiling / single fused pallas_call -------
    vmem_limit = _vmem_limit_bytes()
    if c_tile is None:
        c_tile = _pick_c_tile(c, h, w, pad, vmem_limit)
    c_tile = int(max(1, min(c, c_tile)))
    grid = (n, pl.cdiv(c, c_tile))

    img_spec = pl.BlockSpec((1, c_tile, h, w), lambda b, ci: (b, ci, 0, 0))
    coef_spec = pl.BlockSpec((1, c_tile, 1, r_coef),
                             lambda b, ci: (b, ci, 0, 0))

    out = pl.pallas_call(
        functools.partial(_msm_kernel, k=k, dil=dilation, pad=pad, h=h, w=w),
        grid=grid,
        in_specs=[img_spec, coef_spec],
        out_specs=img_spec,
        out_shape=jax.ShapeDtypeStruct((n, c, h, w), f32),
        scratch_shapes=[
            pltpu.VMEM((c_tile, h + 2 * pad, w + 2 * pad), f32),
            pltpu.VMEM((c_tile, h + 2 * pad, w), f32),
        ],
        compiler_params=pltpu.CompilerParams(
            dimension_semantics=("parallel", "parallel"),
            vmem_limit_bytes=vmem_limit),
    )(x, coef)
    return out


# ------------------------- deterministic parameter init ---------------------


def init_params(key, dim, kernel_size=3, group=2):
    k = kernel_size
    keys = jax.random.split(key, 16)

    def nrm(kk_, shape, scale=0.1):
        return scale * jax.random.normal(kk_, shape, dtype=jnp.float32)

    return {
        'w_conv_H': nrm(keys[0], (group * k, dim)),
        'w_conv_W': nrm(keys[1], (group * k, dim)),
        'w_conv_sq': nrm(keys[2], (group * k * k, dim)),
        'bn_gamma': jnp.ones((group * k * k,), jnp.float32),
        'bn_beta': jnp.zeros((group * k * k,), jnp.float32),
        'bn_mean': jnp.zeros((group * k * k,), jnp.float32),
        'bn_var': jnp.ones((group * k * k,), jnp.float32),
        'inside_all_H': nrm(keys[3], (dim,)),
        'lamb_l_H': nrm(keys[4], (dim,)),
        'lamb_h_H': nrm(keys[5], (dim,)),
        'inside_all_W': nrm(keys[6], (dim,)),
        'lamb_l_W': nrm(keys[7], (dim,)),
        'lamb_h_W': nrm(keys[8], (dim,)),
        'inside_all_sq': nrm(keys[9], (dim,)),
        'lamb_l_sq': nrm(keys[10], (dim,)),
        'lamb_h_sq': nrm(keys[11], (dim,)),
        'gamma': nrm(keys[12], (dim,)),
        'beta': 1.0 + nrm(keys[13], (dim,)),
    }


# ------------------------------ pure-JAX reference ---------------------------


def reference_forward(x, params, *, kernel_size=3, dilation=1, group=2):
    n, c, h, w = x.shape
    k = kernel_size
    cpg = c // group
    pad = dilation * (k - 1) // 2

    def bcast(v):
        return v[None, :, None, None]

    def strip(xin, wconv, inside_all, lamb_l, lamb_h, H=True):
        ap = jnp.mean(xin, axis=(2, 3))
        filt = jnp.tanh(ap @ wconv.T).reshape(n, group, k)
        filt_c = jnp.repeat(filt, cpg, axis=1)                    # (N, C, K)
        if H:
            xp = jnp.pad(xin, ((0, 0), (0, 0), (0, 0), (pad, pad)),
                         mode='reflect')
            acc = sum(filt_c[:, :, t][:, :, None, None] *
                      xp[:, :, :, t * dilation:t * dilation + w]
                      for t in range(k))
            gap = jnp.mean(xin, axis=3, keepdims=True)
        else:
            xp = jnp.pad(xin, ((0, 0), (0, 0), (pad, pad), (0, 0)),
                         mode='reflect')
            acc = sum(filt_c[:, :, t][:, :, None, None] *
                      xp[:, :, t * dilation:t * dilation + h, :]
                      for t in range(k))
            gap = jnp.mean(xin, axis=2, keepdims=True)
        ia = bcast(inside_all)
        out_low = (acc * (ia + 1.0) - ia * gap) * bcast(lamb_l)
        return out_low + xin * (bcast(lamb_h) + 1.0)

    def square(xin):
        ap = jnp.mean(xin, axis=(2, 3))
        v = ap @ params['w_conv_sq'].T
        v = (v - params['bn_mean']) / jnp.sqrt(params['bn_var'] + 1e-5)
        v = v * params['bn_gamma'] + params['bn_beta']
        filt = jnp.tanh(v).reshape(n, group, k * k)
        filt_c = jnp.repeat(filt, cpg, axis=1)
        xp = jnp.pad(xin, ((0, 0), (0, 0), (pad, pad), (pad, pad)),
                     mode='reflect')
        acc = 0.0
        for a in range(k):
            for b in range(k):
                acc = acc + filt_c[:, :, a * k + b][:, :, None, None] * \
                    xp[:, :, a * dilation:a * dilation + h,
                       b * dilation:b * dilation + w]
        gap = jnp.mean(xin, axis=(2, 3), keepdims=True)
        ia = bcast(params['inside_all_sq'])
        out_low = (acc * (ia + 1.0) - ia * gap) * bcast(params['lamb_l_sq'])
        return out_low + xin * (bcast(params['lamb_h_sq']) + 1.0)

    out1 = strip(x, params['w_conv_H'], params['inside_all_H'],
                 params['lamb_l_H'], params['lamb_h_H'], H=True)
    out2 = strip(out1, params['w_conv_W'], params['inside_all_W'],
                 params['lamb_l_W'], params['lamb_h_W'], H=False)
    x1 = bcast(params['gamma']) * out2 + bcast(params['beta']) * x
    x2 = square(x)
    return x1 + x2


# ----------------------------------- main ------------------------------------


if __name__ == "__main__":
    key = jax.random.PRNGKey(0)
    kx, kp = jax.random.split(key)

    n, dim, h, w = 2, 8, 16, 16
    group, ksz, dil = 2, 3, 1

    x = jax.random.normal(kx, (n, dim, h, w), dtype=jnp.float32)
    params = init_params(kp, dim, kernel_size=ksz, group=group)

    ref = reference_forward(x, params, kernel_size=ksz, dilation=dil,
                            group=group)

    # default tiling (whole channel axis in one block)
    fwd = jax.jit(functools.partial(multi_shape_kernel_forward,
                                    kernel_size=ksz, dilation=dil, group=group))
    out = jax.block_until_ready(fwd(x, params))
    np.testing.assert_allclose(np.asarray(out), np.asarray(ref),
                               rtol=1e-4, atol=1e-4)

    # also exercise the channel-tiled path (grid with multiple channel blocks)
    fwd_tiled = jax.jit(functools.partial(multi_shape_kernel_forward,
                                          kernel_size=ksz, dilation=dil,
                                          group=group, c_tile=4))
    out_tiled = jax.block_until_ready(fwd_tiled(x, params))
    np.testing.assert_allclose(np.asarray(out_tiled), np.asarray(ref),
                               rtol=1e-4, atol=1e-4)

    print("KERNEL_OK")
</pallas_src>

<mosaic_0001>
module attributes {stable_mosaic.version = 11 : i64} {
  func.func @_msm_kernel(%arg0: i32, %arg1: i32, %arg2: memref<1x8x16x16xf32, #tpu.memory_space<vmem>>, %arg3: memref<1x8x1x26xf32, #tpu.memory_space<vmem>>, %arg4: memref<1x8x16x16xf32, #tpu.memory_space<vmem>>, %arg5: memref<8x18x18xf32, #tpu.memory_space<vmem>>, %arg6: memref<8x18x16xf32, #tpu.memory_space<vmem>>) attributes {dimension_semantics = [#tpu.dimension_semantics<parallel>, #tpu.dimension_semantics<parallel>], iteration_bounds = array<i64: 2, 1>, scalar_prefetch = 0 : i64, scratch_operands = 2 : i64, tpu.core_type = #tpu.core_type<tc>, window_params = [{transform_indices = @transform_0, window_bounds = array<i64: 1, 8, 16, 16>}, {transform_indices = @transform_1, window_bounds = array<i64: 1, 8, 1, 26>}, {transform_indices = @transform_2, window_bounds = array<i64: 1, 8, 16, 16>}]} {
    %c0 = arith.constant 0 : index
    %c0_0 = arith.constant 0 : index
    %c0_1 = arith.constant 0 : index
    %c0_2 = arith.constant 0 : index
    %0 = vector.load %arg2[%c0, %c0_0, %c0_1, %c0_2] : memref<1x8x16x16xf32, #tpu.memory_space<vmem>>, vector<1x8x16x16xf32>
    %1 = vector.shape_cast %0 : vector<1x8x16x16xf32> to vector<8x16x16xf32>
    %c0_3 = arith.constant 0 : index
    %c0_4 = arith.constant 0 : index
    %c0_5 = arith.constant 0 : index
    %c0_6 = arith.constant 0 : index
    %2 = vector.load %arg3[%c0_3, %c0_4, %c0_5, %c0_6] : memref<1x8x1x26xf32, #tpu.memory_space<vmem>>, vector<1x8x1x26xf32>
    %3 = vector.shape_cast %2 : vector<1x8x1x26xf32> to vector<8x1x26xf32>
    %c0_7 = arith.constant 0 : index
    %c1 = arith.constant 1 : index
    %c1_8 = arith.constant 1 : index
    %4 = vector.load %arg5[%c0_7, %c1, %c1_8] : memref<8x18x18xf32, #tpu.memory_space<vmem>>, vector<8x16x16xf32>
    tpu.vector_store %arg5[%c0_7, %c1, %c1_8], %1 {strides = array<i32>} : memref<8x18x18xf32, #tpu.memory_space<vmem>>, vector<8x16x16xf32>,
    %5 = vector.extract_strided_slice %1 {offsets = [0, 0, 1], sizes = [8, 16, 1], strides = [1, 1, 1]} : vector<8x16x16xf32> to vector<8x16x1xf32>
    %c0_9 = arith.constant 0 : index
    %c1_10 = arith.constant 1 : index
    %c0_11 = arith.constant 0 : index
    %6 = vector.load %arg5[%c0_9, %c1_10, %c0_11] : memref<8x18x18xf32, #tpu.memory_space<vmem>>, vector<8x16x1xf32>
    tpu.vector_store %arg5[%c0_9, %c1_10, %c0_11], %5 {strides = array<i32>} : memref<8x18x18xf32, #tpu.memory_space<vmem>>, vector<8x16x1xf32>,
    %7 = vector.extract_strided_slice %1 {offsets = [0, 0, 14], sizes = [8, 16, 1], strides = [1, 1, 1]} : vector<8x16x16xf32> to vector<8x16x1xf32>
    %c0_12 = arith.constant 0 : index
    %c1_13 = arith.constant 1 : index
    %c17 = arith.constant 17 : index
    %8 = vector.load %arg5[%c0_12, %c1_13, %c17] : memref<8x18x18xf32, #tpu.memory_space<vmem>>, vector<8x16x1xf32>
    tpu.vector_store %arg5[%c0_12, %c1_13, %c17], %7 {strides = array<i32>} : memref<8x18x18xf32, #tpu.memory_space<vmem>>, vector<8x16x1xf32>,
    %c0_14 = arith.constant 0 : index
    %c2 = arith.constant 2 : index
    %c0_15 = arith.constant 0 : index
    %9 = vector.load %arg5[%c0_14, %c2, %c0_15] : memref<8x18x18xf32, #tpu.memory_space<vmem>>, vector<8x1x18xf32>
    %c0_16 = arith.constant 0 : index
    %c0_17 = arith.constant 0 : index
    %c0_18 = arith.constant 0 : index
    %10 = vector.load %arg5[%c0_16, %c0_17, %c0_18] : memref<8x18x18xf32, #tpu.memory_space<vmem>>, vector<8x1x18xf32>
    tpu.vector_store %arg5[%c0_16, %c0_17, %c0_18], %9 {strides = array<i32>} : memref<8x18x18xf32, #tpu.memory_space<vmem>>, vector<8x1x18xf32>,
    %c0_19 = arith.constant 0 : index
    %c15 = arith.constant 15 : index
    %c0_20 = arith.constant 0 : index
    %11 = vector.load %arg5[%c0_19, %c15, %c0_20] : memref<8x18x18xf32, #tpu.memory_space<vmem>>, vector<8x1x18xf32>
    %c0_21 = arith.constant 0 : index
    %c17_22 = arith.constant 17 : index
    %c0_23 = arith.constant 0 : index
    %12 = vector.load %arg5[%c0_21, %c17_22, %c0_23] : memref<8x18x18xf32, #tpu.memory_space<vmem>>, vector<8x1x18xf32>
    tpu.vector_store %arg5[%c0_21, %c17_22, %c0_23], %11 {strides = array<i32>} : memref<8x18x18xf32, #tpu.memory_space<vmem>>, vector<8x1x18xf32>,
    %cst = arith.constant 0.000000e+00 : f32
    %13 = vector.broadcast %cst : f32 to vector<8x16x16xf32>
    %14 = vector.extract_strided_slice %3 {offsets = [0, 0, 0], sizes = [8, 1, 1], strides = [1, 1, 1]} : vector<8x1x26xf32> to vector<8x1x1xf32>
    %c0_24 = arith.constant 0 : index
    %c1_25 = arith.constant 1 : index
    %c0_26 = arith.constant 0 : index
    %15 = vector.load %arg5[%c0_24, %c1_25, %c0_26] : memref<8x18x18xf32, #tpu.memory_space<vmem>>, vector<8x16x16xf32>
    %16 = vector.broadcast %14 : vector<8x1x1xf32> to vector<8x16x16xf32>
    %17 = arith.mulf %16, %15 : vector<8x16x16xf32>
    %18 = arith.addf %13, %17 : vector<8x16x16xf32>
    %19 = vector.extract_strided_slice %3 {offsets = [0, 0, 1], sizes = [8, 1, 1], strides = [1, 1, 1]} : vector<8x1x26xf32> to vector<8x1x1xf32>
    %c0_27 = arith.constant 0 : index
    %c1_28 = arith.constant 1 : index
    %c1_29 = arith.constant 1 : index
    %20 = vector.load %arg5[%c0_27, %c1_28, %c1_29] : memref<8x18x18xf32, #tpu.memory_space<vmem>>, vector<8x16x16xf32>
    %21 = vector.broadcast %19 : vector<8x1x1xf32> to vector<8x16x16xf32>
    %22 = arith.mulf %21, %20 : vector<8x16x16xf32>
    %23 = arith.addf %18, %22 : vector<8x16x16xf32>
    %24 = vector.extract_strided_slice %3 {offsets = [0, 0, 2], sizes = [8, 1, 1], strides = [1, 1, 1]} : vector<8x1x26xf32> to vector<8x1x1xf32>
    %c0_30 = arith.constant 0 : index
    %c1_31 = arith.constant 1 : index
    %c2_32 = arith.constant 2 : index
    %25 = vector.load %arg5[%c0_30, %c1_31, %c2_32] : memref<8x18x18xf32, #tpu.memory_space<vmem>>, vector<8x16x16xf32>
    %26 = vector.broadcast %24 : vector<8x1x1xf32> to vector<8x16x16xf32>
    %27 = arith.mulf %26, %25 : vector<8x16x16xf32>
    %28 = arith.addf %23, %27 : vector<8x16x16xf32>
    %cst_33 = arith.constant dense<0.000000e+00> : vector<8x16xf32>
    %29 = vector.multi_reduction <add>, %1, %cst_33 [2] : vector<8x16x16xf32> to vector<8x16xf32>
    %30 = vector.shape_cast %29 : vector<8x16xf32> to vector<8x16x1xf32>
    %cst_34 = arith.constant 1.600000e+01 : f32
    %31 = vector.broadcast %cst_34 : f32 to vector<8x16x1xf32>
    %32 = arith.divf %30, %31 : vector<8x16x1xf32>
    %33 = vector.extract_strided_slice %3 {offsets = [0, 0, 15], sizes = [8, 1, 1], strides = [1, 1, 1]} : vector<8x1x26xf32> to vector<8x1x1xf32>
    %cst_35 = arith.constant 1.000000e+00 : f32
    %34 = vector.broadcast %cst_35 : f32 to vector<8x1x1xf32>
    %35 = arith.addf %33, %34 : vector<8x1x1xf32>
    %36 = vector.broadcast %35 : vector<8x1x1xf32> to vector<8x16x16xf32>
    %37 = arith.mulf %28, %36 : vector<8x16x16xf32>
    %38 = vector.broadcast %33 : vector<8x1x1xf32> to vector<8x16x1xf32>
    %39 = arith.mulf %38, %32 : vector<8x16x1xf32>
    %40 = vector.broadcast %39 : vector<8x16x1xf32> to vector<8x16x16xf32>
    %41 = arith.subf %37, %40 : vector<8x16x16xf32>
    %42 = vector.extract_strided_slice %3 {offsets = [0, 0, 16], sizes = [8, 1, 1], strides = [1, 1, 1]} : vector<8x1x26xf32> to vector<8x1x1xf32>
    %43 = vector.broadcast %42 : vector<8x1x1xf32> to vector<8x16x16xf32>
    %44 = arith.mulf %41, %43 : vector<8x16x16xf32>
    %45 = vector.extract_strided_slice %3 {offsets = [0, 0, 17], sizes = [8, 1, 1], strides = [1, 1, 1]} : vector<8x1x26xf32> to vector<8x1x1xf32>
    %cst_36 = arith.constant 1.000000e+00 : f32
    %46 = vector.broadcast %cst_36 : f32 to vector<8x1x1xf32>
    %47 = arith.addf %45, %46 : vector<8x1x1xf32>
    %48 = vector.broadcast %47 : vector<8x1x1xf32> to vector<8x16x16xf32>
    %49 = arith.mulf %1, %48 : vector<8x16x16xf32>
    %50 = arith.addf %44, %49 : vector<8x16x16xf32>
    %cst_37 = arith.constant 0.000000e+00 : f32
    %51 = vector.broadcast %cst_37 : f32 to vector<8x16x16xf32>
    %52 = vector.extract_strided_slice %3 {offsets = [0, 0, 6], sizes = [8, 1, 1], strides = [1, 1, 1]} : vector<8x1x26xf32> to vector<8x1x1xf32>
    %c0_38 = arith.constant 0 : index
    %c0_39 = arith.constant 0 : index
    %c0_40 = arith.constant 0 : index
    %53 = vector.load %arg5[%c0_38, %c0_39, %c0_40] : memref<8x18x18xf32, #tpu.memory_space<vmem>>, vector<8x16x16xf32>
    %54 = vector.broadcast %52 : vector<8x1x1xf32> to vector<8x16x16xf32>
    %55 = arith.mulf %54, %53 : vector<8x16x16xf32>
    %56 = arith.addf %51, %55 : vector<8x16x16xf32>
    %57 = vector.extract_strided_slice %3 {offsets = [0, 0, 7], sizes = [8, 1, 1], strides = [1, 1, 1]} : vector<8x1x26xf32> to vector<8x1x1xf32>
    %c0_41 = arith.constant 0 : index
    %c0_42 = arith.constant 0 : index
    %c1_43 = arith.constant 1 : index
    %58 = vector.load %arg5[%c0_41, %c0_42, %c1_43] : memref<8x18x18xf32, #tpu.memory_space<vmem>>, vector<8x16x16xf32>
    %59 = vector.broadcast %57 : vector<8x1x1xf32> to vector<8x16x16xf32>
    %60 = arith.mulf %59, %58 : vector<8x16x16xf32>
    %61 = arith.addf %56, %60 : vector<8x16x16xf32>
    %62 = vector.extract_strided_slice %3 {offsets = [0, 0, 8], sizes = [8, 1, 1], strides = [1, 1, 1]} : vector<8x1x26xf32> to vector<8x1x1xf32>
    %c0_44 = arith.constant 0 : index
    %c0_45 = arith.constant 0 : index
    %c2_46 = arith.constant 2 : index
    %63 = vector.load %arg5[%c0_44, %c0_45, %c2_46] : memref<8x18x18xf32, #tpu.memory_space<vmem>>, vector<8x16x16xf32>
    %64 = vector.broadcast %62 : vector<8x1x1xf32> to vector<8x16x16xf32>
    %65 = arith.mulf %64, %63 : vector<8x16x16xf32>
    %66 = arith.addf %61, %65 : vector<8x16x16xf32>
    %67 = vector.extract_strided_slice %3 {offsets = [0, 0, 9], sizes = [8, 1, 1], strides = [1, 1, 1]} : vector<8x1x26xf32> to vector<8x1x1xf32>
    %c0_47 = arith.constant 0 : index
    %c1_48 = arith.constant 1 : index
    %c0_49 = arith.constant 0 : index
    %68 = vector.load %arg5[%c0_47, %c1_48, %c0_49] : memref<8x18x18xf32, #tpu.memory_space<vmem>>, vector<8x16x16xf32>
    %69 = vector.broadcast %67 : vector<8x1x1xf32> to vector<8x16x16xf32>
    %70 = arith.mulf %69, %68 : vector<8x16x16xf32>
    %71 = arith.addf %66, %70 : vector<8x16x16xf32>
    %72 = vector.extract_strided_slice %3 {offsets = [0, 0, 10], sizes = [8, 1, 1], strides = [1, 1, 1]} : vector<8x1x26xf32> to vector<8x1x1xf32>
    %c0_50 = arith.constant 0 : index
    %c1_51 = arith.constant 1 : index
    %c1_52 = arith.constant 1 : index
    %73 = vector.load %arg5[%c0_50, %c1_51, %c1_52] : memref<8x18x18xf32, #tpu.memory_space<vmem>>, vector<8x16x16xf32>
    %74 = vector.broadcast %72 : vector<8x1x1xf32> to vector<8x16x16xf32>
    %75 = arith.mulf %74, %73 : vector<8x16x16xf32>
    %76 = arith.addf %71, %75 : vector<8x16x16xf32>
    %77 = vector.extract_strided_slice %3 {offsets = [0, 0, 11], sizes = [8, 1, 1], strides = [1, 1, 1]} : vector<8x1x26xf32> to vector<8x1x1xf32>
    %c0_53 = arith.constant 0 : index
    %c1_54 = arith.constant 1 : index
    %c2_55 = arith.constant 2 : index
    %78 = vector.load %arg5[%c0_53, %c1_54, %c2_55] : memref<8x18x18xf32, #tpu.memory_space<vmem>>, vector<8x16x16xf32>
    %79 = vector.broadcast %77 : vector<8x1x1xf32> to vector<8x16x16xf32>
    %80 = arith.mulf %79, %78 : vector<8x16x16xf32>
    %81 = arith.addf %76, %80 : vector<8x16x16xf32>
    %82 = vector.extract_strided_slice %3 {offsets = [0, 0, 12], sizes = [8, 1, 1], strides = [1, 1, 1]} : vector<8x1x26xf32> to vector<8x1x1xf32>
    %c0_56 = arith.constant 0 : index
    %c2_57 = arith.constant 2 : index
    %c0_58 = arith.constant 0 : index
    %83 = vector.load %arg5[%c0_56, %c2_57, %c0_58] : memref<8x18x18xf32, #tpu.memory_space<vmem>>, vector<8x16x16xf32>
    %84 = vector.broadcast %82 : vector<8x1x1xf32> to vector<8x16x16xf32>
    %85 = arith.mulf %84, %83 : vector<8x16x16xf32>
    %86 = arith.addf %81, %85 : vector<8x16x16xf32>
    %87 = vector.extract_strided_slice %3 {offsets = [0, 0, 13], sizes = [8, 1, 1], strides = [1, 1, 1]} : vector<8x1x26xf32> to vector<8x1x1xf32>
    %c0_59 = arith.constant 0 : index
    %c2_60 = arith.constant 2 : index
    %c1_61 = arith.constant 1 : index
    %88 = vector.load %arg5[%c0_59, %c2_60, %c1_61] : memref<8x18x18xf32, #tpu.memory_space<vmem>>, vector<8x16x16xf32>
    %89 = vector.broadcast %87 : vector<8x1x1xf32> to vector<8x16x16xf32>
    %90 = arith.mulf %89, %88 : vector<8x16x16xf32>
    %91 = arith.addf %86, %90 : vector<8x16x16xf32>
    %92 = vector.extract_strided_slice %3 {offsets = [0, 0, 14], sizes = [8, 1, 1], strides = [1, 1, 1]} : vector<8x1x26xf32> to vector<8x1x1xf32>
    %c0_62 = arith.constant 0 : index
    %c2_63 = arith.constant 2 : index
    %c2_64 = arith.constant 2 : index
    %93 = vector.load %arg5[%c0_62, %c2_63, %c2_64] : memref<8x18x18xf32, #tpu.memory_space<vmem>>, vector<8x16x16xf32>
    %94 = vector.broadcast %92 : vector<8x1x1xf32> to vector<8x16x16xf32>
    %95 = arith.mulf %94, %93 : vector<8x16x16xf32>
    %96 = arith.addf %91, %95 : vector<8x16x16xf32>
    %cst_65 = arith.constant dense<0.000000e+00> : vector<8x1xf32>
    %97 = vector.multi_reduction <add>, %32, %cst_65 [1] : vector<8x16x1xf32> to vector<8x1xf32>
    %98 = vector.shape_cast %97 : vector<8x1xf32> to vector<8x1x1xf32>
    %cst_66 = arith.constant 1.600000e+01 : f32
    %99 = vector.broadcast %cst_66 : f32 to vector<8x1x1xf32>
    %100 = arith.divf %98, %99 : vector<8x1x1xf32>
    %101 = vector.extract_strided_slice %3 {offsets = [0, 0, 21], sizes = [8, 1, 1], strides = [1, 1, 1]} : vector<8x1x26xf32> to vector<8x1x1xf32>
    %cst_67 = arith.constant 1.000000e+00 : f32
    %102 = vector.broadcast %cst_67 : f32 to vector<8x1x1xf32>
    %103 = arith.addf %101, %102 : vector<8x1x1xf32>
    %104 = vector.broadcast %103 : vector<8x1x1xf32> to vector<8x16x16xf32>
    %105 = arith.mulf %96, %104 : vector<8x16x16xf32>
    %106 = arith.mulf %101, %100 : vector<8x1x1xf32>
    %107 = vector.broadcast %106 : vector<8x1x1xf32> to vector<8x16x16xf32>
    %108 = arith.subf %105, %107 : vector<8x16x16xf32>
    %109 = vector.extract_strided_slice %3 {offsets = [0, 0, 22], sizes = [8, 1, 1], strides = [1, 1, 1]} : vector<8x1x26xf32> to vector<8x1x1xf32>
    %110 = vector.broadcast %109 : vector<8x1x1xf32> to vector<8x16x16xf32>
    %111 = arith.mulf %108, %110 : vector<8x16x16xf32>
    %112 = vector.extract_strided_slice %3 {offsets = [0, 0, 23], sizes = [8, 1, 1], strides = [1, 1, 1]} : vector<8x1x26xf32> to vector<8x1x1xf32>
    %cst_68 = arith.constant 1.000000e+00 : f32
    %113 = vector.broadcast %cst_68 : f32 to vector<8x1x1xf32>
    %114 = arith.addf %112, %113 : vector<8x1x1xf32>
    %115 = vector.broadcast %114 : vector<8x1x1xf32> to vector<8x16x16xf32>
    %116 = arith.mulf %1, %115 : vector<8x16x16xf32>
    %117 = arith.addf %111, %116 : vector<8x16x16xf32>
    %c0_69 = arith.constant 0 : index
    %c1_70 = arith.constant 1 : index
    %c0_71 = arith.constant 0 : index
    %118 = vector.load %arg6[%c0_69, %c1_70, %c0_71] : memref<8x18x16xf32, #tpu.memory_space<vmem>>, vector<8x16x16xf32>
    tpu.vector_store %arg6[%c0_69, %c1_70, %c0_71], %50 {strides = array<i32>} : memref<8x18x16xf32, #tpu.memory_space<vmem>>, vector<8x16x16xf32>,
    %119 = vector.extract_strided_slice %50 {offsets = [0, 1, 0], sizes = [8, 1, 16], strides = [1, 1, 1]} : vector<8x16x16xf32> to vector<8x1x16xf32>
    %c0_72 = arith.constant 0 : index
    %c0_73 = arith.constant 0 : index
    %c0_74 = arith.constant 0 : index
    %120 = vector.load %arg6[%c0_72, %c0_73, %c0_74] : memref<8x18x16xf32, #tpu.memory_space<vmem>>, vector<8x1x16xf32>
    tpu.vector_store %arg6[%c0_72, %c0_73, %c0_74], %119 {strides = array<i32>} : memref<8x18x16xf32, #tpu.memory_space<vmem>>, vector<8x1x16xf32>,
    %121 = vector.extract_strided_slice %50 {offsets = [0, 14, 0], sizes = [8, 1, 16], strides = [1, 1, 1]} : vector<8x16x16xf32> to vector<8x1x16xf32>
    %c0_75 = arith.constant 0 : index
    %c17_76 = arith.constant 17 : index
    %c0_77 = arith.constant 0 : index
    %122 = vector.load %arg6[%c0_75, %c17_76, %c0_77] : memref<8x18x16xf32, #tpu.memory_space<vmem>>, vector<8x1x16xf32>
    tpu.vector_store %arg6[%c0_75, %c17_76, %c0_77], %121 {strides = array<i32>} : memref<8x18x16xf32, #tpu.memory_space<vmem>>, vector<8x1x16xf32>,
    %cst_78 = arith.constant 0.000000e+00 : f32
    %123 = vector.broadcast %cst_78 : f32 to vector<8x16x16xf32>
    %124 = vector.extract_strided_slice %3 {offsets = [0, 0, 3], sizes = [8, 1, 1], strides = [1, 1, 1]} : vector<8x1x26xf32> to vector<8x1x1xf32>
    %c0_79 = arith.constant 0 : index
    %c0_80 = arith.constant 0 : index
    %c0_81 = arith.constant 0 : index
    %125 = vector.load %arg6[%c0_79, %c0_80, %c0_81] : memref<8x18x16xf32, #tpu.memory_space<vmem>>, vector<8x16x16xf32>
    %126 = vector.broadcast %124 : vector<8x1x1xf32> to vector<8x16x16xf32>
    %127 = arith.mulf %126, %125 : vector<8x16x16xf32>
    %128 = arith.addf %123, %127 : vector<8x16x16xf32>
    %129 = vector.extract_strided_slice %3 {offsets = [0, 0, 4], sizes = [8, 1, 1], strides = [1, 1, 1]} : vector<8x1x26xf32> to vector<8x1x1xf32>
    %c0_82 = arith.constant 0 : index
    %c1_83 = arith.constant 1 : index
    %c0_84 = arith.constant 0 : index
    %130 = vector.load %arg6[%c0_82, %c1_83, %c0_84] : memref<8x18x16xf32, #tpu.memory_space<vmem>>, vector<8x16x16xf32>
    %131 = vector.broadcast %129 : vector<8x1x1xf32> to vector<8x16x16xf32>
    %132 = arith.mulf %131, %130 : vector<8x16x16xf32>
    %133 = arith.addf %128, %132 : vector<8x16x16xf32>
    %134 = vector.extract_strided_slice %3 {offsets = [0, 0, 5], sizes = [8, 1, 1], strides = [1, 1, 1]} : vector<8x1x26xf32> to vector<8x1x1xf32>
    %c0_85 = arith.constant 0 : index
    %c2_86 = arith.constant 2 : index
    %c0_87 = arith.constant 0 : index
    %135 = vector.load %arg6[%c0_85, %c2_86, %c0_87] : memref<8x18x16xf32, #tpu.memory_space<vmem>>, vector<8x16x16xf32>
    %136 = vector.broadcast %134 : vector<8x1x1xf32> to vector<8x16x16xf32>
    %137 = arith.mulf %136, %135 : vector<8x16x16xf32>
    %138 = arith.addf %133, %137 : vector<8x16x16xf32>
    %cst_88 = arith.constant dense<0.000000e+00> : vector<8x16xf32>
    %139 = vector.multi_reduction <add>, %50, %cst_88 [1] : vector<8x16x16xf32> to vector<8x16xf32>
    %140 = vector.shape_cast %139 : vector<8x16xf32> to vector<8x1x16xf32>
    %cst_89 = arith.constant 1.600000e+01 : f32
    %141 = vector.broadcast %cst_89 : f32 to vector<8x1x16xf32>
    %142 = arith.divf %140, %141 : vector<8x1x16xf32>
    %143 = vector.extract_strided_slice %3 {offsets = [0, 0, 18], sizes = [8, 1, 1], strides = [1, 1, 1]} : vector<8x1x26xf32> to vector<8x1x1xf32>
    %cst_90 = arith.constant 1.000000e+00 : f32
    %144 = vector.broadcast %cst_90 : f32 to vector<8x1x1xf32>
    %145 = arith.addf %143, %144 : vector<8x1x1xf32>
    %146 = vector.broadcast %145 : vector<8x1x1xf32> to vector<8x16x16xf32>
    %147 = arith.mulf %138, %146 : vector<8x16x16xf32>
    %148 = vector.broadcast %143 : vector<8x1x1xf32> to vector<8x1x16xf32>
    %149 = arith.mulf %148, %142 : vector<8x1x16xf32>
    %150 = vector.broadcast %149 : vector<8x1x16xf32> to vector<8x16x16xf32>
    %151 = arith.subf %147, %150 : vector<8x16x16xf32>
    %152 = vector.extract_strided_slice %3 {offsets = [0, 0, 19], sizes = [8, 1, 1], strides = [1, 1, 1]} : vector<8x1x26xf32> to vector<8x1x1xf32>
    %153 = vector.broadcast %152 : vector<8x1x1xf32> to vector<8x16x16xf32>
    %154 = arith.mulf %151, %153 : vector<8x16x16xf32>
    %155 = vector.extract_strided_slice %3 {offsets = [0, 0, 20], sizes = [8, 1, 1], strides = [1, 1, 1]} : vector<8x1x26xf32> to vector<8x1x1xf32>
    %cst_91 = arith.constant 1.000000e+00 : f32
    %156 = vector.broadcast %cst_91 : f32 to vector<8x1x1xf32>
    %157 = arith.addf %155, %156 : vector<8x1x1xf32>
    %158 = vector.broadcast %157 : vector<8x1x1xf32> to vector<8x16x16xf32>
    %159 = arith.mulf %50, %158 : vector<8x16x16xf32>
    %160 = arith.addf %154, %159 : vector<8x16x16xf32>
    %161 = vector.extract_strided_slice %3 {offsets = [0, 0, 24], sizes = [8, 1, 1], strides = [1, 1, 1]} : vector<8x1x26xf32> to vector<8x1x1xf32>
    %162 = vector.broadcast %161 : vector<8x1x1xf32> to vector<8x16x16xf32>
    %163 = arith.mulf %162, %160 : vector<8x16x16xf32>
    %164 = vector.extract_strided_slice %3 {offsets = [0, 0, 25], sizes = [8, 1, 1], strides = [1, 1, 1]} : vector<8x1x26xf32> to vector<8x1x1xf32>
    %165 = vector.broadcast %164 : vector<8x1x1xf32> to vector<8x16x16xf32>
    %166 = arith.mulf %165, %1 : vector<8x16x16xf32>
    %167 = arith.addf %163, %166 : vector<8x16x16xf32>
    %168 = arith.addf %167, %117 : vector<8x16x16xf32>
    %c0_92 = arith.constant 0 : index
    %c0_93 = arith.constant 0 : index
    %c0_94 = arith.constant 0 : index
    %c0_95 = arith.constant 0 : index
    %169 = vector.load %arg4[%c0_92, %c0_93, %c0_94, %c0_95] : memref<1x8x16x16xf32, #tpu.memory_space<vmem>>, vector<1x8x16x16xf32>
    %170 = vector.shape_cast %169 : vector<1x8x16x16xf32> to vector<8x16x16xf32>
    %171 = vector.shape_cast %168 : vector<8x16x16xf32> to vector<1x8x16x16xf32>
    tpu.vector_store %arg4[%c0_92, %c0_93, %c0_94, %c0_95], %171 {strides = array<i32>} : memref<1x8x16x16xf32, #tpu.memory_space<vmem>>, vector<1x8x16x16xf32>,
    return
  }
  func.func @transform_0(%arg0: i32, %arg1: i32) -> (i32, i32, i32, i32) {
    %c0_i32 = arith.constant 0 : i32
    %c0_i32_0 = arith.constant 0 : i32
    %c0_i32_1 = arith.constant 0 : i32
    return %arg0, %arg1, %c0_i32, %c0_i32_0 : i32, i32, i32, i32
  }
  func.func @transform_1(%arg0: i32, %arg1: i32) -> (i32, i32, i32, i32) {
    %c0_i32 = arith.constant 0 : i32
    %c0_i32_0 = arith.constant 0 : i32
    %c0_i32_1 = arith.constant 0 : i32
    return %arg0, %arg1, %c0_i32, %c0_i32_0 : i32, i32, i32, i32
  }
  func.func @transform_2(%arg0: i32, %arg1: i32) -> (i32, i32, i32, i32) {
    %c0_i32 = arith.constant 0 : i32
    %c0_i32_0 = arith.constant 0 : i32
    %c0_i32_1 = arith.constant 0 : i32
    return %arg0, %arg1, %c0_i32, %c0_i32_0 : i32, i32, i32, i32
  }
}

</mosaic_0001>

<llo_original>
// kernel: multi_shape_kernel_forward.1
$region0: #{multi_shape_kernel_forward.1}
  #allocation0 [shape = 'u32[]', space=smem, size = 0x4, offset = 0x4, fixed_abs, tag = 'smem constant byte address 0x4 - core index']
  #allocation1 [shape = 'u32[144,128]{1,0:T(1,128)}', space=vmem, size = 0x12000, scoped, tag = 'internal scratch']
  #allocation2 [shape = 'f32[8,18,18]{2,1,0:T(8,128)}', space=vmem, size = 0x18000, scoped, tag = 'scratch operand']
  #allocation3 [shape = 'f32[8,18,16]{2,1,0:T(8,128)}', space=vmem, size = 0x18000, scoped, tag = 'scratch operand']
  %s0 = inlined_call_operand.vmem [shape: f32[2,8,16,16], index: 0, kind: input, shape index: {}]
  %s1 = inlined_call_operand.vmem [shape: f32[2,8,1,26], index: 1, kind: input, shape index: {}]
  %s2 = inlined_call_operand.hbm [shape: f32[2,8,16,16], index: 2, kind: output, shape index: {}]
  %s3 = sld [smem:[#allocation0]]
  $region41: #{multi_shape_kernel_forward.1} parent=0
    _
  %s5 = ssub.s32 1, %s3
  %s6 = scalar_select 0, %s5, %s3
  $region1: #{multi_shape_kernel_forward.1} parent=0
    #allocation4 [shape = 'u8[131072]{0}', space=vmem, size = 0x20000, scoped, tag = 'output window, operand 0']
    #allocation5 [shape = 's32[2]{0}', space=sflag, size = 0x8, scoped, tag = 'scoped memory for multi_shape_kernel_forward.1']
    %7 = vsyncpa [#allocation5], 0
    %s8 = scalar_lea.sflag [#allocation5], 1
    %9 = vsyncpa %s8, 0
    loop: start=0, step=1, limit=4
    $region2: #{multi_shape_kernel_forward.1} parent=1 // loop_pre_header
      _
    $region3: #{multi_shape_kernel_forward.1} parent=1 // loop_header
      %s11 = sphi 0, %s15
      %p12 = scmp.ge.s32.totalorder %s11, 4
      %s18 = sphi 0, %s30
      %s19 = sphi 0, %s26
      %s20 = sphi 0, %s18
      %s21 = sphi 0, %s19
      %s22 = sphi 0, %s20
      %s23 = sphi 0, %s21
      %s35 = sphi 0, %s37
      %s38 = sphi 0, %s35
      %s39 = sphi 0, %s38
      %s55 = sphi 0, %s39
      %s63 = sphi 0, %s65
      %s66 = sphi 0, %s63
      %s67 = sphi 0, %s66
      %s83 = sphi 0, %s67
      %s91 = sphi 0, %s93
      %s94 = sphi 0, %s91
      %s95 = sphi 0, %s94
      %s111 = sphi 0, %s95
    $region4: #{multi_shape_kernel_forward.1} parent=1 // loop_header_branch
      %14 = sbr.rel (%p12) target = $region8
    $region5: #{multi_shape_kernel_forward.1} parent=1 // loop_body
      %s16 = ssub.s32 %s11, 1
      %s17 = ssub.s32 %s11, 2
      %s24 = sadd.s32 1, %s19
      %p25 = scmp.ge.s32.totalorder %s24, 1
      %s26 = scalar_select %p25, 0, %s24
      %s27 = sadd.s32 1, %s18
      %s28 = scalar_select %p25, %s27, %s18
      %p29 = scmp.ge.s32.totalorder %s28, 2
      %s30 = scalar_select %p29, 0, %s28
      %s31 = ssub.s32 %s18, %s30
      %s32 = ssub.s32 %s19, %s26
      %s33 = sor.u32 %s31, %s32
      %p34 = scmp.eq.s32.totalorder %s33, 0
      %s36 = sadd.s32 %s35, 1
      %s37 = scalar_select %p34, %s35, %s36
      %p40 = pneg %p34
      %p41 = scmp.eq.s32.totalorder %s11, 1
      %p42 = por %p40, %p41
      %p43 = scmp.ne.s32.totalorder %s35, %s38
      %p44 = scmp.eq.s32.totalorder %s11, 0
      %p45 = por %p43, %p44
      %p46 = scmp.ne.s32.totalorder %s35, %s38
      %p47 = scmp.eq.s32.totalorder %s16, 1
      %p48 = por %p46, %p47
      %p49 = scmp.ne.s32.totalorder %s38, %s39
      %p50 = scmp.eq.s32.totalorder %s16, 0
      %p51 = por %p49, %p50
      %p52 = scmp.ne.s32.totalorder %s38, %s39
      %p53 = scmp.eq.s32.totalorder %s17, 1
      %p54 = por %p52, %p53
      %p56 = scmp.ne.s32.totalorder %s39, %s55
      %p57 = scmp.eq.s32.totalorder %s17, 0
      %p58 = por %p56, %p57
      %s59 = ssub.s32 %s18, %s30
      %s60 = ssub.s32 %s19, %s26
      %s61 = sor.u32 %s59, %s60
      %p62 = scmp.eq.s32.totalorder %s61, 0
      %s64 = sadd.s32 %s63, 1
      %s65 = scalar_select %p62, %s63, %s64
      %p68 = pneg %p62
      %p69 = scmp.eq.s32.totalorder %s11, 1
      %p70 = por %p68, %p69
      %p71 = scmp.ne.s32.totalorder %s63, %s66
      %p72 = scmp.eq.s32.totalorder %s11, 0
      %p73 = por %p71, %p72
      %p74 = scmp.ne.s32.totalorder %s63, %s66
      %p75 = scmp.eq.s32.totalorder %s16, 1
      %p76 = por %p74, %p75
      %p77 = scmp.ne.s32.totalorder %s66, %s67
      %p78 = scmp.eq.s32.totalorder %s16, 0
      %p79 = por %p77, %p78
      %p80 = scmp.ne.s32.totalorder %s66, %s67
      %p81 = scmp.eq.s32.totalorder %s17, 1
      %p82 = por %p80, %p81
      %p84 = scmp.ne.s32.totalorder %s67, %s83
      %p85 = scmp.eq.s32.totalorder %s17, 0
      %p86 = por %p84, %p85
      %s87 = ssub.s32 %s18, %s30
      %s88 = ssub.s32 %s19, %s26
      %s89 = sor.u32 %s87, %s88
      %p90 = scmp.eq.s32.totalorder %s89, 0
      %s92 = sadd.s32 %s91, 1
      %s93 = scalar_select %p90, %s91, %s92
      %p96 = pneg %p90
      %p97 = scmp.eq.s32.totalorder %s11, 1
      %p98 = por %p96, %p97
      %p99 = scmp.ne.s32.totalorder %s91, %s94
      %p100 = scmp.eq.s32.totalorder %s11, 0
      %p101 = por %p99, %p100
      %p102 = scmp.ne.s32.totalorder %s91, %s94
      %p103 = scmp.eq.s32.totalorder %s16, 1
      %p104 = por %p102, %p103
      %p105 = scmp.ne.s32.totalorder %s94, %s95
      %p106 = scmp.eq.s32.totalorder %s16, 0
      %p107 = por %p105, %p106
      %p108 = scmp.ne.s32.totalorder %s94, %s95
      %p109 = scmp.eq.s32.totalorder %s17, 1
      %p110 = por %p108, %p109
      %p112 = scmp.ne.s32.totalorder %s95, %s111
      %p113 = scmp.eq.s32.totalorder %s17, 0
      %p114 = por %p112, %p113
      %p115 = scmp.le.s32.totalorder 1, %s11
      %p116 = scmp.lt.s32.totalorder %s11, 3
      %p117 = pnand %p115, %p116
      %p118 = pneg %p117
      // Predicated region
      $region9: #{multi_shape_kernel_forward.1} parent=5 // pred_check
        _
      $region10: #{multi_shape_kernel_forward.1} parent=5 // pred_check_branch
        %120 = sbr.rel (%p117) target = $region12
      $region11: #{multi_shape_kernel_forward.1} parent=5 // pred_region
        %s121 = ssub.s32 %s11, 1
      $region12: #{multi_shape_kernel_forward.1} parent=5 // pred_fallthru
        _
      %p122 = scmp.lt.s32.totalorder %s11, 2
      // Predicated region
      $region13: #{multi_shape_kernel_forward.1} parent=5 // pred_check
        %p123 = pneg %p122
      $region14: #{multi_shape_kernel_forward.1} parent=5 // pred_check_branch
        %125 = sbr.rel (%p123) target = $region16
      $region15: #{multi_shape_kernel_forward.1} parent=5 // pred_region
        // Predicated region
        $region17: #{multi_shape_kernel_forward.1} parent=15 // pred_check
          %p126 = pneg %p45
        $region18: #{multi_shape_kernel_forward.1} parent=15 // pred_check_branch
          %128 = sbr.rel (%p126) target = $region20
        $region19: #{multi_shape_kernel_forward.1} parent=15 // pred_region
          %s129 = smul.u32 8, %s19
          %p130 = scmp.lt.s32.totalorder %s18, 1
          %s131 = scalar_select %p130, %s18, 1
          %p132 = scmp.lt.s32.totalorder %s129, 7
          %s133 = scalar_select %p132, %s129, 7
          %s134 = smul.addr %s133, 2
          %s135 = smul.addr %s131, 16
          %s136 = sadd.s32 %s134, %s135
          %s137 = smul.addr %s136, 8
          %s138 = scalar_lea.vmem %s0, %s137
          %s139 = smul.u32 8, %s19
        $region20: #{multi_shape_kernel_forward.1} parent=15 // pred_fallthru
          _
        // Predicated region
        $region21: #{multi_shape_kernel_forward.1} parent=15 // pred_check
          %p140 = pneg %p73
        $region22: #{multi_shape_kernel_forward.1} parent=15 // pred_check_branch
          %142 = sbr.rel (%p140) target = $region24
        $region23: #{multi_shape_kernel_forward.1} parent=15 // pred_region
          %s143 = smul.u32 8, %s19
          %p144 = scmp.lt.s32.totalorder %s18, 1
          %s145 = scalar_select %p144, %s18, 1
          %p146 = scmp.lt.s32.totalorder %s143, 7
          %s147 = scalar_select %p146, %s143, 7
          %s148 = smul.addr %s145, 8
          %s149 = sadd.s32 %s147, %s148
          %s150 = scalar_lea.vmem %s1, %s149
          %s151 = smul.u32 8, %s19
        $region24: #{multi_shape_kernel_forward.1} parent=15 // pred_fallthru
          _
      $region16: #{multi_shape_kernel_forward.1} parent=5 // pred_fallthru
        _
      %p152 = scmp.le.s32.totalorder 1, %s11
      %p153 = scmp.lt.s32.totalorder %s11, 3
      %p154 = pnand %p152, %p153
      %p155 = pneg %p154
      // Predicated region
      $region25: #{multi_shape_kernel_forward.1} parent=5 // pred_check
        _
      $region26: #{multi_shape_kernel_forward.1} parent=5 // pred_check_branch
        %157 = sbr.rel (%p154) target = $region28
      $region27: #{multi_shape_kernel_forward.1} parent=5 // pred_region
        %s158 = ssub.s32 %s11, 1
        %s159 = smul.u32 8, %s21
        %p160 = scmp.lt.s32.totalorder %s20, 1
        %s161 = scalar_select %p160, %s20, 1
        %p162 = scmp.lt.s32.totalorder %s159, 7
        %s163 = scalar_select %p162, %s159, 7
        %s164 = smul.addr %s163, 2
        %s165 = smul.addr %s161, 16
        %s166 = sadd.s32 %s164, %s165
        %s167 = smul.addr %s166, 8
        %s168 = scalar_lea.vmem %s0, %s167
        %p169 = pneg %p51
        %p170 = pneg %p48
        %s171 = smul.u32 8, %s21
        %p172 = scmp.lt.s32.totalorder %s20, 1
        %s173 = scalar_select %p172, %s20, 1
        %p174 = scmp.lt.s32.totalorder %s171, 7
        %s175 = scalar_select %p174, %s171, 7
        %s176 = smul.addr %s173, 8
        %s177 = sadd.s32 %s175, %s176
        %s178 = scalar_lea.vmem %s1, %s177
        %p179 = pneg %p79
        %p180 = pneg %p76
        %p181 = pneg %p107
        %p182 = pneg %p104
        %s183 = sand.u32 %s94, 1
        %s184 = scalar_lea.sflag [#allocation5], %s183
        %s185 = sand.u32 %s94, 1
        %s186 = smul.addr %s185, 128
        %s187 = scalar_lea.vmem [#allocation4], %s186
        %s188 = smul.u32 8, %s21
        %p189 = scmp.lt.s32.totalorder %s20, 1
        %s190 = scalar_select %p189, %s20, 1
        %p191 = scmp.lt.s32.totalorder %s188, 7
        %s192 = scalar_select %p191, %s188, 7
        %s193 = smul.addr %s192, 2
        %s194 = smul.addr %s190, 16
        %s195 = sadd.s32 %s193, %s194
        %s196 = smul.addr %s195, 8
        %s197 = scalar_lea.vmem %s0, %s196
        %s198 = smul.u32 8, %s21
        %s199 = smul.u32 8, %s21
        %p200 = scmp.lt.s32.totalorder %s20, 1
        %s201 = scalar_select %p200, %s20, 1
        %p202 = scmp.lt.s32.totalorder %s199, 7
        %s203 = scalar_select %p202, %s199, 7
        %s204 = smul.addr %s201, 8
        %s205 = sadd.s32 %s203, %s204
        %s206 = scalar_lea.vmem %s1, %s205
        %s207 = smul.u32 8, %s21
        %s208 = smul.u32 8, %s21
        %v209 = vld [vmem:[%s197] sm:$0xff]
        %v210 = vld [vmem:[%s197 + $0x8] sm:$0xff]
        %v211 = vld [vmem:[%s197 + $0x10] sm:$0xff]
        %v212 = vld [vmem:[%s197 + $0x18] sm:$0xff]
        %v213 = vld [vmem:[%s197 + $0x20] sm:$0xff]
        %v214 = vld [vmem:[%s197 + $0x28] sm:$0xff]
        %v215 = vld [vmem:[%s197 + $0x30] sm:$0xff]
        %v216 = vld [vmem:[%s197 + $0x38] sm:$0xff]
        %v217 = vld [vmem:[%s197 + $0x40] sm:$0xff]
        %v218 = vld [vmem:[%s197 + $0x48] sm:$0xff]
        %v219 = vld [vmem:[%s197 + $0x50] sm:$0xff]
        %v220 = vld [vmem:[%s197 + $0x58] sm:$0xff]
        %v221 = vld [vmem:[%s197 + $0x60] sm:$0xff]
        %v222 = vld [vmem:[%s197 + $0x68] sm:$0xff]
        %v223 = vld [vmem:[%s197 + $0x70] sm:$0xff]
        %v224 = vld [vmem:[%s197 + $0x78] sm:$0xff]
        %v225 = vld [vmem:[%s206] sm:$0x1]
        %v226 = vld [vmem:[%s206 + $0x1] sm:$0x1]
        %v227 = vld [vmem:[%s206 + $0x2] sm:$0x1]
        %v228 = vld [vmem:[%s206 + $0x3] sm:$0x1]
        %v229 = vld [vmem:[%s206 + $0x4] sm:$0x1]
        %v230 = vld [vmem:[%s206 + $0x5] sm:$0x1]
        %v231 = vld [vmem:[%s206 + $0x6] sm:$0x1]
        %v232 = vld [vmem:[%s206 + $0x7] sm:$0x1]
        %249 = vrot.lane.b32.xlu0 %v209, 1
        %v250 = vpop.permute.xlu0 %249
        %251 = vrot.lane.b32.xlu0 %v210, 1
        %v252 = vpop.permute.xlu0 %251
        %253 = vrot.lane.b32.xlu0 %v211, 1
        %v254 = vpop.permute.xlu0 %253
        %255 = vrot.lane.b32.xlu0 %v212, 1
        %v256 = vpop.permute.xlu0 %255
        %257 = vrot.lane.b32.xlu0 %v213, 1
        %v258 = vpop.permute.xlu0 %257
        %259 = vrot.lane.b32.xlu0 %v214, 1
        %v260 = vpop.permute.xlu0 %259
        %261 = vrot.lane.b32.xlu0 %v215, 1
        %v262 = vpop.permute.xlu0 %261
        %263 = vrot.lane.b32.xlu0 %v216, 1
        %v264 = vpop.permute.xlu0 %263
        %265 = vrot.lane.b32.xlu0 %v217, 1
        %v266 = vpop.permute.xlu0 %265
        %267 = vrot.lane.b32.xlu0 %v218, 1
        %v268 = vpop.permute.xlu0 %267
        %269 = vrot.lane.b32.xlu0 %v219, 1
        %v270 = vpop.permute.xlu0 %269
        %271 = vrot.lane.b32.xlu0 %v220, 1
        %v272 = vpop.permute.xlu0 %271
        %273 = vrot.lane.b32.xlu0 %v221, 1
        %v274 = vpop.permute.xlu0 %273
        %275 = vrot.lane.b32.xlu0 %v222, 1
        %v276 = vpop.permute.xlu0 %275
        %277 = vrot.lane.b32.xlu0 %v223, 1
        %v278 = vpop.permute.xlu0 %277
        %279 = vrot.lane.b32.xlu0 %v224, 1
        %v280 = vpop.permute.xlu0 %279
        %vm297 = vcmask 138248
        %298 = vst.msk [vmem:[#allocation2 + $0x1] sm:$0xff] %vm297, %v250
        %299 = vst.msk [vmem:[#allocation2 + $0x9] sm:$0xff] %vm297, %v252
        %300 = vst.msk [vmem:[#allocation2 + $0x19] sm:$0xff] %vm297, %v254
        %301 = vst.msk [vmem:[#allocation2 + $0x21] sm:$0xff] %vm297, %v256
        %302 = vst.msk [vmem:[#allocation2 + $0x31] sm:$0xff] %vm297, %v258
        %303 = vst.msk [vmem:[#allocation2 + $0x39] sm:$0xff] %vm297, %v260
        %304 = vst.msk [vmem:[#allocation2 + $0x49] sm:$0xff] %vm297, %v262
        %305 = vst.msk [vmem:[#allocation2 + $0x51] sm:$0xff] %vm297, %v264
        %306 = vst.msk [vmem:[#allocation2 + $0x61] sm:$0xff] %vm297, %v266
        %307 = vst.msk [vmem:[#allocation2 + $0x69] sm:$0xff] %vm297, %v268
        %308 = vst.msk [vmem:[#allocation2 + $0x79] sm:$0xff] %vm297, %v270
        %309 = vst.msk [vmem:[#allocation2 + $0x81] sm:$0xff] %vm297, %v272
        %310 = vst.msk [vmem:[#allocation2 + $0x91] sm:$0xff] %vm297, %v274
        %311 = vst.msk [vmem:[#allocation2 + $0x99] sm:$0xff] %vm297, %v276
        %312 = vst.msk [vmem:[#allocation2 + $0xa9] sm:$0xff] %vm297, %v278
        %313 = vst.msk [vmem:[#allocation2 + $0xb1] sm:$0xff] %vm297, %v280
        %314 = vrot.lane.b32.xlu0 %v209, 127
        %v315 = vpop.permute.xlu0 %314
        %316 = vrot.lane.b32.xlu0 %v210, 127
        %v317 = vpop.permute.xlu0 %316
        %318 = vrot.lane.b32.xlu0 %v211, 127
        %v319 = vpop.permute.xlu0 %318
        %320 = vrot.lane.b32.xlu0 %v212, 127
        %v321 = vpop.permute.xlu0 %320
        %322 = vrot.lane.b32.xlu0 %v213, 127
        %v323 = vpop.permute.xlu0 %322
        %324 = vrot.lane.b32.xlu0 %v214, 127
        %v325 = vpop.permute.xlu0 %324
        %326 = vrot.lane.b32.xlu0 %v215, 127
        %v327 = vpop.permute.xlu0 %326
        %328 = vrot.lane.b32.xlu0 %v216, 127
        %v329 = vpop.permute.xlu0 %328
        %330 = vrot.lane.b32.xlu0 %v217, 127
        %v331 = vpop.permute.xlu0 %330
        %332 = vrot.lane.b32.xlu0 %v218, 127
        %v333 = vpop.permute.xlu0 %332
        %334 = vrot.lane.b32.xlu0 %v219, 127
        %v335 = vpop.permute.xlu0 %334
        %336 = vrot.lane.b32.xlu0 %v220, 127
        %v337 = vpop.permute.xlu0 %336
        %338 = vrot.lane.b32.xlu0 %v221, 127
        %v339 = vpop.permute.xlu0 %338
        %340 = vrot.lane.b32.xlu0 %v222, 127
        %v341 = vpop.permute.xlu0 %340
        %342 = vrot.lane.b32.xlu0 %v223, 127
        %v343 = vpop.permute.xlu0 %342
        %344 = vrot.lane.b32.xlu0 %v224, 127
        %v345 = vpop.permute.xlu0 %344
        %vm362 = vcmask 7168
        %363 = vst.msk [vmem:[#allocation2 + $0x1] sm:$0xff] %vm362, %v315
        %364 = vst.msk [vmem:[#allocation2 + $0x9] sm:$0xff] %vm362, %v317
        %365 = vst.msk [vmem:[#allocation2 + $0x19] sm:$0xff] %vm362, %v319
        %366 = vst.msk [vmem:[#allocation2 + $0x21] sm:$0xff] %vm362, %v321
        %367 = vst.msk [vmem:[#allocation2 + $0x31] sm:$0xff] %vm362, %v323
        %368 = vst.msk [vmem:[#allocation2 + $0x39] sm:$0xff] %vm362, %v325
        %369 = vst.msk [vmem:[#allocation2 + $0x49] sm:$0xff] %vm362, %v327
        %370 = vst.msk [vmem:[#allocation2 + $0x51] sm:$0xff] %vm362, %v329
        %371 = vst.msk [vmem:[#allocation2 + $0x61] sm:$0xff] %vm362, %v331
        %372 = vst.msk [vmem:[#allocation2 + $0x69] sm:$0xff] %vm362, %v333
        %373 = vst.msk [vmem:[#allocation2 + $0x79] sm:$0xff] %vm362, %v335
        %374 = vst.msk [vmem:[#allocation2 + $0x81] sm:$0xff] %vm362, %v337
        %375 = vst.msk [vmem:[#allocation2 + $0x91] sm:$0xff] %vm362, %v339
        %376 = vst.msk [vmem:[#allocation2 + $0x99] sm:$0xff] %vm362, %v341
        %377 = vst.msk [vmem:[#allocation2 + $0xa9] sm:$0xff] %vm362, %v343
        %378 = vst.msk [vmem:[#allocation2 + $0xb1] sm:$0xff] %vm362, %v345
        %379 = vrot.lane.b32.xlu0 %v209, 3
        %v380 = vpop.permute.xlu0 %379
        %381 = vrot.lane.b32.xlu0 %v210, 3
        %v382 = vpop.permute.xlu0 %381
        %383 = vrot.lane.b32.xlu0 %v211, 3
        %v384 = vpop.permute.xlu0 %383
        %385 = vrot.lane.b32.xlu0 %v212, 3
        %v386 = vpop.permute.xlu0 %385
        %387 = vrot.lane.b32.xlu0 %v213, 3
        %v388 = vpop.permute.xlu0 %387
        %389 = vrot.lane.b32.xlu0 %v214, 3
        %v390 = vpop.permute.xlu0 %389
        %391 = vrot.lane.b32.xlu0 %v215, 3
        %v392 = vpop.permute.xlu0 %391
        %393 = vrot.lane.b32.xlu0 %v216, 3
        %v394 = vpop.permute.xlu0 %393
        %395 = vrot.lane.b32.xlu0 %v217, 3
        %v396 = vpop.permute.xlu0 %395
        %397 = vrot.lane.b32.xlu0 %v218, 3
        %v398 = vpop.permute.xlu0 %397
        %399 = vrot.lane.b32.xlu0 %v219, 3
        %v400 = vpop.permute.xlu0 %399
        %401 = vrot.lane.b32.xlu0 %v220, 3
        %v402 = vpop.permute.xlu0 %401
        %403 = vrot.lane.b32.xlu0 %v221, 3
        %v404 = vpop.permute.xlu0 %403
        %405 = vrot.lane.b32.xlu0 %v222, 3
        %v406 = vpop.permute.xlu0 %405
        %407 = vrot.lane.b32.xlu0 %v223, 3
        %v408 = vpop.permute.xlu0 %407
        %409 = vrot.lane.b32.xlu0 %v224, 3
        %v410 = vpop.permute.xlu0 %409
        %vm427 = vcmask 146568
        %428 = vst.msk [vmem:[#allocation2 + $0x1] sm:$0xff] %vm427, %v380
        %429 = vst.msk [vmem:[#allocation2 + $0x9] sm:$0xff] %vm427, %v382
        %430 = vst.msk [vmem:[#allocation2 + $0x19] sm:$0xff] %vm427, %v384
        %431 = vst.msk [vmem:[#allocation2 + $0x21] sm:$0xff] %vm427, %v386
        %432 = vst.msk [vmem:[#allocation2 + $0x31] sm:$0xff] %vm427, %v388
        %433 = vst.msk [vmem:[#allocation2 + $0x39] sm:$0xff] %vm427, %v390
        %434 = vst.msk [vmem:[#allocation2 + $0x49] sm:$0xff] %vm427, %v392
        %435 = vst.msk [vmem:[#allocation2 + $0x51] sm:$0xff] %vm427, %v394
        %436 = vst.msk [vmem:[#allocation2 + $0x61] sm:$0xff] %vm427, %v396
        %437 = vst.msk [vmem:[#allocation2 + $0x69] sm:$0xff] %vm427, %v398
        %438 = vst.msk [vmem:[#allocation2 + $0x79] sm:$0xff] %vm427, %v400
        %439 = vst.msk [vmem:[#allocation2 + $0x81] sm:$0xff] %vm427, %v402
        %440 = vst.msk [vmem:[#allocation2 + $0x91] sm:$0xff] %vm427, %v404
        %441 = vst.msk [vmem:[#allocation2 + $0x99] sm:$0xff] %vm427, %v406
        %442 = vst.msk [vmem:[#allocation2 + $0xa9] sm:$0xff] %vm427, %v408
        %443 = vst.msk [vmem:[#allocation2 + $0xb1] sm:$0xff] %vm427, %v410
        %v444 = vld [vmem:[#allocation2 + $0x2] sm:$0x1]
        %v445 = vld [vmem:[#allocation2 + $0x1a] sm:$0x1]
        %v446 = vld [vmem:[#allocation2 + $0x32] sm:$0x1]
        %v447 = vld [vmem:[#allocation2 + $0x4a] sm:$0x1]
        %v448 = vld [vmem:[#allocation2 + $0x62] sm:$0x1]
        %v449 = vld [vmem:[#allocation2 + $0x7a] sm:$0x1]
        %v450 = vld [vmem:[#allocation2 + $0x92] sm:$0x1]
        %v451 = vld [vmem:[#allocation2 + $0xaa] sm:$0x1]
        %vm452 = vcmask 139264
        %453 = vst.msk [vmem:[#allocation2] sm:$0x1] %vm452, %v444
        %454 = vst.msk [vmem:[#allocation2 + $0x18] sm:$0x1] %vm452, %v445
        %455 = vst.msk [vmem:[#allocation2 + $0x30] sm:$0x1] %vm452, %v446
        %456 = vst.msk [vmem:[#allocation2 + $0x48] sm:$0x1] %vm452, %v447
        %457 = vst.msk [vmem:[#allocation2 + $0x60] sm:$0x1] %vm452, %v448
        %458 = vst.msk [vmem:[#allocation2 + $0x78] sm:$0x1] %vm452, %v449
        %459 = vst.msk [vmem:[#allocation2 + $0x90] sm:$0x1] %vm452, %v450
        %460 = vst.msk [vmem:[#allocation2 + $0xa8] sm:$0x1] %vm452, %v451
        %v461 = vld [vmem:[#allocation2 + $0xf] sm:$0x1]
        %v462 = vld [vmem:[#allocation2 + $0x27] sm:$0x1]
        %v463 = vld [vmem:[#allocation2 + $0x3f] sm:$0x1]
        %v464 = vld [vmem:[#allocation2 + $0x57] sm:$0x1]
        %v465 = vld [vmem:[#allocation2 + $0x6f] sm:$0x1]
        %v466 = vld [vmem:[#allocation2 + $0x87] sm:$0x1]
        %v467 = vld [vmem:[#allocation2 + $0x9f] sm:$0x1]
        %v468 = vld [vmem:[#allocation2 + $0xb7] sm:$0x1]
        %469 = vst.msk [vmem:[#allocation2 + $0x11] sm:$0x1] %vm452, %v461
        %470 = vst.msk [vmem:[#allocation2 + $0x29] sm:$0x1] %vm452, %v462
        %471 = vst.msk [vmem:[#allocation2 + $0x41] sm:$0x1] %vm452, %v463
        %472 = vst.msk [vmem:[#allocation2 + $0x59] sm:$0x1] %vm452, %v464
        %473 = vst.msk [vmem:[#allocation2 + $0x71] sm:$0x1] %vm452, %v465
        %474 = vst.msk [vmem:[#allocation2 + $0x89] sm:$0x1] %vm452, %v466
        %475 = vst.msk [vmem:[#allocation2 + $0xa1] sm:$0x1] %vm452, %v467
        %476 = vst.msk [vmem:[#allocation2 + $0xb9] sm:$0x1] %vm452, %v468
        %v477 = vld [vmem:[#allocation2 + $0x1] sm:$0xff]
        %v478 = vld [vmem:[#allocation2 + $0x9] sm:$0xff]
        %v479 = vld [vmem:[#allocation2 + $0x19] sm:$0xff]
        %v480 = vld [vmem:[#allocation2 + $0x21] sm:$0xff]
        %v481 = vld [vmem:[#allocation2 + $0x31] sm:$0xff]
        %v482 = vld [vmem:[#allocation2 + $0x39] sm:$0xff]
        %v483 = vld [vmem:[#allocation2 + $0x49] sm:$0xff]
        %v484 = vld [vmem:[#allocation2 + $0x51] sm:$0xff]
        %v485 = vld [vmem:[#allocation2 + $0x61] sm:$0xff]
        %v486 = vld [vmem:[#allocation2 + $0x69] sm:$0xff]
        %v487 = vld [vmem:[#allocation2 + $0x79] sm:$0xff]
        %v488 = vld [vmem:[#allocation2 + $0x81] sm:$0xff]
        %v489 = vld [vmem:[#allocation2 + $0x91] sm:$0xff]
        %v490 = vld [vmem:[#allocation2 + $0x99] sm:$0xff]
        %v491 = vld [vmem:[#allocation2 + $0xa9] sm:$0xff]
        %v492 = vld [vmem:[#allocation2 + $0xb1] sm:$0xff]
        %v501 = vlaneseq
        %v502 = vshrl.u32 %v501, 7
        %v503 = vsub.s32 0, %v502
        %v504 = vrot.slane %v225, %v503
        %v505 = vlaneseq
        %v506 = vshrl.u32 %v505, 7
        %v507 = vsub.s32 0, %v506
        %v508 = vrot.slane %v226, %v507
        %v509 = vlaneseq
        %v510 = vshrl.u32 %v509, 7
        %v511 = vsub.s32 0, %v510
        %v512 = vrot.slane %v227, %v511
        %v513 = vlaneseq
        %v514 = vshrl.u32 %v513, 7
        %v515 = vsub.s32 0, %v514
        %v516 = vrot.slane %v228, %v515
        %v517 = vlaneseq
        %v518 = vshrl.u32 %v517, 7
        %v519 = vsub.s32 0, %v518
        %v520 = vrot.slane %v229, %v519
        %v521 = vlaneseq
        %v522 = vshrl.u32 %v521, 7
        %v523 = vsub.s32 0, %v522
        %v524 = vrot.slane %v230, %v523
        %v525 = vlaneseq
        %v526 = vshrl.u32 %v525, 7
        %v527 = vsub.s32 0, %v526
        %v528 = vrot.slane %v231, %v527
        %v529 = vlaneseq
        %v530 = vshrl.u32 %v529, 7
        %v531 = vsub.s32 0, %v530
        %v532 = vrot.slane %v232, %v531
        %533 = vset.pattern.permute.xlu0 0
        %534 = vperm.xlu0 %533, %v504
        %v535 = vpop.permute.xlu0 %534
        %537 = vset.pattern.permute.xlu0 0
        %538 = vperm.xlu0 %537, %v508
        %v539 = vpop.permute.xlu0 %538
        %541 = vset.pattern.permute.xlu0 0
        %542 = vperm.xlu0 %541, %v512
        %v543 = vpop.permute.xlu0 %542
        %545 = vset.pattern.permute.xlu0 0
        %546 = vperm.xlu0 %545, %v516
        %v547 = vpop.permute.xlu0 %546
        %549 = vset.pattern.permute.xlu0 0
        %550 = vperm.xlu0 %549, %v520
        %v551 = vpop.permute.xlu0 %550
        %553 = vset.pattern.permute.xlu0 0
        %554 = vperm.xlu0 %553, %v524
        %v555 = vpop.permute.xlu0 %554
        %557 = vset.pattern.permute.xlu0 0
        %558 = vperm.xlu0 %557, %v528
        %v559 = vpop.permute.xlu0 %558
        %561 = vset.pattern.permute.xlu0 0
        %562 = vperm.xlu0 %561, %v532
        %v563 = vpop.permute.xlu0 %562
        %v565 = vmul.f32 %v535, %v477
        %v566 = vmul.f32 %v535, %v478
        %v567 = vmul.f32 %v539, %v479
        %v568 = vmul.f32 %v539, %v480
        %v569 = vmul.f32 %v543, %v481
        %v570 = vmul.f32 %v543, %v482
        %v571 = vmul.f32 %v547, %v483
        %v572 = vmul.f32 %v547, %v484
        %v573 = vmul.f32 %v551, %v485
        %v574 = vmul.f32 %v551, %v486
        %v575 = vmul.f32 %v555, %v487
        %v576 = vmul.f32 %v555, %v488
        %v577 = vmul.f32 %v559, %v489
        %v578 = vmul.f32 %v559, %v490
        %v579 = vmul.f32 %v563, %v491
        %v580 = vmul.f32 %v563, %v492
        %v581 = vadd.f32 %v565, 0.0
        %v582 = vadd.f32 %v566, 0.0
        %v583 = vadd.f32 %v567, 0.0
        %v584 = vadd.f32 %v568, 0.0
        %v585 = vadd.f32 %v569, 0.0
        %v586 = vadd.f32 %v570, 0.0
        %v587 = vadd.f32 %v571, 0.0
        %v588 = vadd.f32 %v572, 0.0
        %v589 = vadd.f32 %v573, 0.0
        %v590 = vadd.f32 %v574, 0.0
        %v591 = vadd.f32 %v575, 0.0
        %v592 = vadd.f32 %v576, 0.0
        %v593 = vadd.f32 %v577, 0.0
        %v594 = vadd.f32 %v578, 0.0
        %v595 = vadd.f32 %v579, 0.0
        %v596 = vadd.f32 %v580, 0.0
        %597 = vset.pattern.permute.xlu0 1
        %598 = vperm.xlu0 %597, %v504
        %v599 = vpop.permute.xlu0 %598
        %601 = vset.pattern.permute.xlu0 1
        %602 = vperm.xlu0 %601, %v508
        %v603 = vpop.permute.xlu0 %602
        %605 = vset.pattern.permute.xlu0 1
        %606 = vperm.xlu0 %605, %v512
        %v607 = vpop.permute.xlu0 %606
        %609 = vset.pattern.permute.xlu0 1
        %610 = vperm.xlu0 %609, %v516
        %v611 = vpop.permute.xlu0 %610
        %613 = vset.pattern.permute.xlu0 1
        %614 = vperm.xlu0 %613, %v520
        %v615 = vpop.permute.xlu0 %614
        %617 = vset.pattern.permute.xlu0 1
        %618 = vperm.xlu0 %617, %v524
        %v619 = vpop.permute.xlu0 %618
        %621 = vset.pattern.permute.xlu0 1
        %622 = vperm.xlu0 %621, %v528
        %v623 = vpop.permute.xlu0 %622
        %625 = vset.pattern.permute.xlu0 1
        %626 = vperm.xlu0 %625, %v532
        %v627 = vpop.permute.xlu0 %626
        %v629 = vmul.f32 %v599, %v477
        %v630 = vmul.f32 %v599, %v478
        %v631 = vmul.f32 %v603, %v479
        %v632 = vmul.f32 %v603, %v480
        %v633 = vmul.f32 %v607, %v481
        %v634 = vmul.f32 %v607, %v482
        %v635 = vmul.f32 %v611, %v483
        %v636 = vmul.f32 %v611, %v484
        %v637 = vmul.f32 %v615, %v485
        %v638 = vmul.f32 %v615, %v486
        %v639 = vmul.f32 %v619, %v487
        %v640 = vmul.f32 %v619, %v488
        %v641 = vmul.f32 %v623, %v489
        %v642 = vmul.f32 %v623, %v490
        %v643 = vmul.f32 %v627, %v491
        %v644 = vmul.f32 %v627, %v492
        %661 = vrot.lane.b32.xlu0 %v629, 127
        %v662 = vpop.permute.xlu0 %661
        %663 = vrot.lane.b32.xlu0 %v630, 127
        %v664 = vpop.permute.xlu0 %663
        %665 = vrot.lane.b32.xlu0 %v631, 127
        %v666 = vpop.permute.xlu0 %665
        %667 = vrot.lane.b32.xlu0 %v632, 127
        %v668 = vpop.permute.xlu0 %667
        %669 = vrot.lane.b32.xlu0 %v633, 127
        %v670 = vpop.permute.xlu0 %669
        %671 = vrot.lane.b32.xlu0 %v634, 127
        %v672 = vpop.permute.xlu0 %671
        %673 = vrot.lane.b32.xlu0 %v635, 127
        %v674 = vpop.permute.xlu0 %673
        %675 = vrot.lane.b32.xlu0 %v636, 127
        %v676 = vpop.permute.xlu0 %675
        %677 = vrot.lane.b32.xlu0 %v637, 127
        %v678 = vpop.permute.xlu0 %677
        %679 = vrot.lane.b32.xlu0 %v638, 127
        %v680 = vpop.permute.xlu0 %679
        %681 = vrot.lane.b32.xlu0 %v639, 127
        %v682 = vpop.permute.xlu0 %681
        %683 = vrot.lane.b32.xlu0 %v640, 127
        %v684 = vpop.permute.xlu0 %683
        %685 = vrot.lane.b32.xlu0 %v641, 127
        %v686 = vpop.permute.xlu0 %685
        %687 = vrot.lane.b32.xlu0 %v642, 127
        %v688 = vpop.permute.xlu0 %687
        %689 = vrot.lane.b32.xlu0 %v643, 127
        %v690 = vpop.permute.xlu0 %689
        %691 = vrot.lane.b32.xlu0 %v644, 127
        %v692 = vpop.permute.xlu0 %691
        %v709 = vadd.f32 %v581, %v662
        %v710 = vadd.f32 %v582, %v664
        %v711 = vadd.f32 %v583, %v666
        %v712 = vadd.f32 %v584, %v668
        %v713 = vadd.f32 %v585, %v670
        %v714 = vadd.f32 %v586, %v672
        %v715 = vadd.f32 %v587, %v674
        %v716 = vadd.f32 %v588, %v676
        %v717 = vadd.f32 %v589, %v678
        %v718 = vadd.f32 %v590, %v680
        %v719 = vadd.f32 %v591, %v682
        %v720 = vadd.f32 %v592, %v684
        %v721 = vadd.f32 %v593, %v686
        %v722 = vadd.f32 %v594, %v688
        %v723 = vadd.f32 %v595, %v690
        %v724 = vadd.f32 %v596, %v692
        %725 = vset.pattern.permute.xlu0 2
        %726 = vperm.xlu0 %725, %v504
        %v727 = vpop.permute.xlu0 %726
        %729 = vset.pattern.permute.xlu0 2
        %730 = vperm.xlu0 %729, %v508
        %v731 = vpop.permute.xlu0 %730
        %733 = vset.pattern.permute.xlu0 2
        %734 = vperm.xlu0 %733, %v512
        %v735 = vpop.permute.xlu0 %734
        %737 = vset.pattern.permute.xlu0 2
        %738 = vperm.xlu0 %737, %v516
        %v739 = vpop.permute.xlu0 %738
        %741 = vset.pattern.permute.xlu0 2
        %742 = vperm.xlu0 %741, %v520
        %v743 = vpop.permute.xlu0 %742
        %745 = vset.pattern.permute.xlu0 2
        %746 = vperm.xlu0 %745, %v524
        %v747 = vpop.permute.xlu0 %746
        %749 = vset.pattern.permute.xlu0 2
        %750 = vperm.xlu0 %749, %v528
        %v751 = vpop.permute.xlu0 %750
        %753 = vset.pattern.permute.xlu0 2
        %754 = vperm.xlu0 %753, %v532
        %v755 = vpop.permute.xlu0 %754
        %v757 = vmul.f32 %v727, %v477
        %v758 = vmul.f32 %v727, %v478
        %v759 = vmul.f32 %v731, %v479
        %v760 = vmul.f32 %v731, %v480
        %v761 = vmul.f32 %v735, %v481
        %v762 = vmul.f32 %v735, %v482
        %v763 = vmul.f32 %v739, %v483
        %v764 = vmul.f32 %v739, %v484
        %v765 = vmul.f32 %v743, %v485
        %v766 = vmul.f32 %v743, %v486
        %v767 = vmul.f32 %v747, %v487
        %v768 = vmul.f32 %v747, %v488
        %v769 = vmul.f32 %v751, %v489
        %v770 = vmul.f32 %v751, %v490
        %v771 = vmul.f32 %v755, %v491
        %v772 = vmul.f32 %v755, %v492
        %789 = vrot.lane.b32.xlu0 %v757, 126
        %v790 = vpop.permute.xlu0 %789
        %791 = vrot.lane.b32.xlu0 %v758, 126
        %v792 = vpop.permute.xlu0 %791
        %793 = vrot.lane.b32.xlu0 %v759, 126
        %v794 = vpop.permute.xlu0 %793
        %795 = vrot.lane.b32.xlu0 %v760, 126
        %v796 = vpop.permute.xlu0 %795
        %797 = vrot.lane.b32.xlu0 %v761, 126
        %v798 = vpop.permute.xlu0 %797
        %799 = vrot.lane.b32.xlu0 %v762, 126
        %v800 = vpop.permute.xlu0 %799
        %801 = vrot.lane.b32.xlu0 %v763, 126
        %v802 = vpop.permute.xlu0 %801
        %803 = vrot.lane.b32.xlu0 %v764, 126
        %v804 = vpop.permute.xlu0 %803
        %805 = vrot.lane.b32.xlu0 %v765, 126
        %v806 = vpop.permute.xlu0 %805
        %807 = vrot.lane.b32.xlu0 %v766, 126
        %v808 = vpop.permute.xlu0 %807
        %809 = vrot.lane.b32.xlu0 %v767, 126
        %v810 = vpop.permute.xlu0 %809
        %811 = vrot.lane.b32.xlu0 %v768, 126
        %v812 = vpop.permute.xlu0 %811
        %813 = vrot.lane.b32.xlu0 %v769, 126
        %v814 = vpop.permute.xlu0 %813
        %815 = vrot.lane.b32.xlu0 %v770, 126
        %v816 = vpop.permute.xlu0 %815
        %817 = vrot.lane.b32.xlu0 %v771, 126
        %v818 = vpop.permute.xlu0 %817
        %819 = vrot.lane.b32.xlu0 %v772, 126
        %v820 = vpop.permute.xlu0 %819
        %v837 = vadd.f32 %v709, %v790
        %v838 = vadd.f32 %v710, %v792
        %v839 = vadd.f32 %v711, %v794
        %v840 = vadd.f32 %v712, %v796
        %v841 = vadd.f32 %v713, %v798
        %v842 = vadd.f32 %v714, %v800
        %v843 = vadd.f32 %v715, %v802
        %v844 = vadd.f32 %v716, %v804
        %v845 = vadd.f32 %v717, %v806
        %v846 = vadd.f32 %v718, %v808
        %v847 = vadd.f32 %v719, %v810
        %v848 = vadd.f32 %v720, %v812
        %v849 = vadd.f32 %v721, %v814
        %v850 = vadd.f32 %v722, %v816
        %v851 = vadd.f32 %v723, %v818
        %v852 = vadd.f32 %v724, %v820
        %vm853 = vcmask 130048
        %v854 = vsel %vm853, %v209, 0.0
        %855 = vadd.xlane.f32.xlu0 %v854
        %v856 = vpop.xlane.xlu0 %855
        %v857 = vsel %vm853, %v210, 0.0
        %858 = vadd.xlane.f32.xlu0 %v857
        %v859 = vpop.xlane.xlu0 %858
        %v860 = vsel %vm853, %v211, 0.0
        %861 = vadd.xlane.f32.xlu0 %v860
        %v862 = vpop.xlane.xlu0 %861
        %v863 = vsel %vm853, %v212, 0.0
        %864 = vadd.xlane.f32.xlu0 %v863
        %v865 = vpop.xlane.xlu0 %864
        %v866 = vsel %vm853, %v213, 0.0
        %867 = vadd.xlane.f32.xlu0 %v866
        %v868 = vpop.xlane.xlu0 %867
        %v869 = vsel %vm853, %v214, 0.0
        %870 = vadd.xlane.f32.xlu0 %v869
        %v871 = vpop.xlane.xlu0 %870
        %v872 = vsel %vm853, %v215, 0.0
        %873 = vadd.xlane.f32.xlu0 %v872
        %v874 = vpop.xlane.xlu0 %873
        %v875 = vsel %vm853, %v216, 0.0
        %876 = vadd.xlane.f32.xlu0 %v875
        %v877 = vpop.xlane.xlu0 %876
        %v878 = vsel %vm853, %v217, 0.0
        %879 = vadd.xlane.f32.xlu0 %v878
        %v880 = vpop.xlane.xlu0 %879
        %v881 = vsel %vm853, %v218, 0.0
        %882 = vadd.xlane.f32.xlu0 %v881
        %v883 = vpop.xlane.xlu0 %882
        %v884 = vsel %vm853, %v219, 0.0
        %885 = vadd.xlane.f32.xlu0 %v884
        %v886 = vpop.xlane.xlu0 %885
        %v887 = vsel %vm853, %v220, 0.0
        %888 = vadd.xlane.f32.xlu0 %v887
        %v889 = vpop.xlane.xlu0 %888
        %v890 = vsel %vm853, %v221, 0.0
        %891 = vadd.xlane.f32.xlu0 %v890
        %v892 = vpop.xlane.xlu0 %891
        %v893 = vsel %vm853, %v222, 0.0
        %894 = vadd.xlane.f32.xlu0 %v893
        %v895 = vpop.xlane.xlu0 %894
        %v896 = vsel %vm853, %v223, 0.0
        %897 = vadd.xlane.f32.xlu0 %v896
        %v898 = vpop.xlane.xlu0 %897
        %v899 = vsel %vm853, %v224, 0.0
        %900 = vadd.xlane.f32.xlu0 %v899
        %v901 = vpop.xlane.xlu0 %900
        %v902 = vrcp.pop 16.0
        %v903 = vmul.f32 %v856, %v902
        %v904 = vmul.f32 %v859, %v902
        %v905 = vmul.f32 %v862, %v902
        %v906 = vmul.f32 %v865, %v902
        %v907 = vmul.f32 %v868, %v902
        %v908 = vmul.f32 %v871, %v902
        %v909 = vmul.f32 %v874, %v902
        %v910 = vmul.f32 %v877, %v902
        %v911 = vmul.f32 %v880, %v902
        %v912 = vmul.f32 %v883, %v902
        %v913 = vmul.f32 %v886, %v902
        %v914 = vmul.f32 %v889, %v902
        %v915 = vmul.f32 %v892, %v902
        %v916 = vmul.f32 %v895, %v902
        %v917 = vmul.f32 %v898, %v902
        %v918 = vmul.f32 %v901, %v902
        %v919 = vadd.f32 %v225, 1.0
        %v920 = vadd.f32 %v226, 1.0
        %v921 = vadd.f32 %v227, 1.0
        %v922 = vadd.f32 %v228, 1.0
        %v923 = vadd.f32 %v229, 1.0
        %v924 = vadd.f32 %v230, 1.0
        %v925 = vadd.f32 %v231, 1.0
        %v926 = vadd.f32 %v232, 1.0
        %v935 = vlaneseq
        %v936 = vshrl.u32 %v935, 7
        %v937 = vsub.s32 0, %v936
        %v938 = vrot.slane %v919, %v937
        %v939 = vlaneseq
        %v940 = vshrl.u32 %v939, 7
        %v941 = vsub.s32 0, %v940
        %v942 = vrot.slane %v920, %v941
        %v943 = vlaneseq
        %v944 = vshrl.u32 %v943, 7
        %v945 = vsub.s32 0, %v944
        %v946 = vrot.slane %v921, %v945
        %v947 = vlaneseq
        %v948 = vshrl.u32 %v947, 7
        %v949 = vsub.s32 0, %v948
        %v950 = vrot.slane %v922, %v949
        %v951 = vlaneseq
        %v952 = vshrl.u32 %v951, 7
        %v953 = vsub.s32 0, %v952
        %v954 = vrot.slane %v923, %v953
        %v955 = vlaneseq
        %v956 = vshrl.u32 %v955, 7
        %v957 = vsub.s32 0, %v956
        %v958 = vrot.slane %v924, %v957
        %v959 = vlaneseq
        %v960 = vshrl.u32 %v959, 7
        %v961 = vsub.s32 0, %v960
        %v962 = vrot.slane %v925, %v961
        %v963 = vlaneseq
        %v964 = vshrl.u32 %v963, 7
        %v965 = vsub.s32 0, %v964
        %v966 = vrot.slane %v926, %v965
        %967 = vset.pattern.permute.xlu0 15
        %968 = vperm.xlu0 %967, %v938
        %v969 = vpop.permute.xlu0 %968
        %971 = vset.pattern.permute.xlu0 15
        %972 = vperm.xlu0 %971, %v942
        %v973 = vpop.permute.xlu0 %972
        %975 = vset.pattern.permute.xlu0 15
        %976 = vperm.xlu0 %975, %v946
        %v977 = vpop.permute.xlu0 %976
        %979 = vset.pattern.permute.xlu0 15
        %980 = vperm.xlu0 %979, %v950
        %v981 = vpop.permute.xlu0 %980
        %983 = vset.pattern.permute.xlu0 15
        %984 = vperm.xlu0 %983, %v954
        %v985 = vpop.permute.xlu0 %984
        %987 = vset.pattern.permute.xlu0 15
        %988 = vperm.xlu0 %987, %v958
        %v989 = vpop.permute.xlu0 %988
        %991 = vset.pattern.permute.xlu0 15
        %992 = vperm.xlu0 %991, %v962
        %v993 = vpop.permute.xlu0 %992
        %995 = vset.pattern.permute.xlu0 15
        %996 = vperm.xlu0 %995, %v966
        %v997 = vpop.permute.xlu0 %996
        %v999 = vmul.f32 %v837, %v969
        %v1000 = vmul.f32 %v838, %v969
        %v1001 = vmul.f32 %v839, %v973
        %v1002 = vmul.f32 %v840, %v973
        %v1003 = vmul.f32 %v841, %v977
        %v1004 = vmul.f32 %v842, %v977
        %v1005 = vmul.f32 %v843, %v981
        %v1006 = vmul.f32 %v844, %v981
        %v1007 = vmul.f32 %v845, %v985
        %v1008 = vmul.f32 %v846, %v985
        %v1009 = vmul.f32 %v847, %v989
        %v1010 = vmul.f32 %v848, %v989
        %v1011 = vmul.f32 %v849, %v993
        %v1012 = vmul.f32 %v850, %v993
        %v1013 = vmul.f32 %v851, %v997
        %v1014 = vmul.f32 %v852, %v997
        %v1023 = vmul.f32 %v504, %v903
        %v1024 = vmul.f32 %v504, %v904
        %v1025 = vmul.f32 %v508, %v905
        %v1026 = vmul.f32 %v508, %v906
        %v1027 = vmul.f32 %v512, %v907
        %v1028 = vmul.f32 %v512, %v908
        %v1029 = vmul.f32 %v516, %v909
        %v1030 = vmul.f32 %v516, %v910
        %v1031 = vmul.f32 %v520, %v911
        %v1032 = vmul.f32 %v520, %v912
        %v1033 = vmul.f32 %v524, %v913
        %v1034 = vmul.f32 %v524, %v914
        %v1035 = vmul.f32 %v528, %v915
        %v1036 = vmul.f32 %v528, %v916
        %v1037 = vmul.f32 %v532, %v917
        %v1038 = vmul.f32 %v532, %v918
        %1040 = vset.pattern.permute.xlu0 15
        %1041 = vperm.xlu0 %1040, %v1023
        %v1042 = vpop.permute.xlu0 %1041
        %1045 = vset.pattern.permute.xlu0 15
        %1046 = vperm.xlu0 %1045, %v1024
        %v1047 = vpop.permute.xlu0 %1046
        %1050 = vset.pattern.permute.xlu0 15
        %1051 = vperm.xlu0 %1050, %v1025
        %v1052 = vpop.permute.xlu0 %1051
        %1055 = vset.pattern.permute.xlu0 15
        %1056 = vperm.xlu0 %1055, %v1026
        %v1057 = vpop.permute.xlu0 %1056
        %1060 = vset.pattern.permute.xlu0 15
        %1061 = vperm.xlu0 %1060, %v1027
        %v1062 = vpop.permute.xlu0 %1061
        %1065 = vset.pattern.permute.xlu0 15
        %1066 = vperm.xlu0 %1065, %v1028
        %v1067 = vpop.permute.xlu0 %1066
        %1070 = vset.pattern.permute.xlu0 15
        %1071 = vperm.xlu0 %1070, %v1029
        %v1072 = vpop.permute.xlu0 %1071
        %1075 = vset.pattern.permute.xlu0 15
        %1076 = vperm.xlu0 %1075, %v1030
        %v1077 = vpop.permute.xlu0 %1076
        %1080 = vset.pattern.permute.xlu0 15
        %1081 = vperm.xlu0 %1080, %v1031
        %v1082 = vpop.permute.xlu0 %1081
        %1085 = vset.pattern.permute.xlu0 15
        %1086 = vperm.xlu0 %1085, %v1032
        %v1087 = vpop.permute.xlu0 %1086
        %1090 = vset.pattern.permute.xlu0 15
        %1091 = vperm.xlu0 %1090, %v1033
        %v1092 = vpop.permute.xlu0 %1091
        %1095 = vset.pattern.permute.xlu0 15
        %1096 = vperm.xlu0 %1095, %v1034
        %v1097 = vpop.permute.xlu0 %1096
        %1100 = vset.pattern.permute.xlu0 15
        %1101 = vperm.xlu0 %1100, %v1035
        %v1102 = vpop.permute.xlu0 %1101
        %1105 = vset.pattern.permute.xlu0 15
        %1106 = vperm.xlu0 %1105, %v1036
        %v1107 = vpop.permute.xlu0 %1106
        %1110 = vset.pattern.permute.xlu0 15
        %1111 = vperm.xlu0 %1110, %v1037
        %v1112 = vpop.permute.xlu0 %1111
        %1115 = vset.pattern.permute.xlu0 15
        %1116 = vperm.xlu0 %1115, %v1038
        %v1117 = vpop.permute.xlu0 %1116
        %v1119 = vsub.f32 %v999, %v1042
        %v1120 = vsub.f32 %v1000, %v1047
        %v1121 = vsub.f32 %v1001, %v1052
        %v1122 = vsub.f32 %v1002, %v1057
        %v1123 = vsub.f32 %v1003, %v1062
        %v1124 = vsub.f32 %v1004, %v1067
        %v1125 = vsub.f32 %v1005, %v1072
        %v1126 = vsub.f32 %v1006, %v1077
        %v1127 = vsub.f32 %v1007, %v1082
        %v1128 = vsub.f32 %v1008, %v1087
        %v1129 = vsub.f32 %v1009, %v1092
        %v1130 = vsub.f32 %v1010, %v1097
        %v1131 = vsub.f32 %v1011, %v1102
        %v1132 = vsub.f32 %v1012, %v1107
        %v1133 = vsub.f32 %v1013, %v1112
        %v1134 = vsub.f32 %v1014, %v1117
        %1135 = vset.pattern.permute.xlu0 16
        %1136 = vperm.xlu0 %1135, %v504
        %v1137 = vpop.permute.xlu0 %1136
        %1139 = vset.pattern.permute.xlu0 16
        %1140 = vperm.xlu0 %1139, %v508
        %v1141 = vpop.permute.xlu0 %1140
        %1143 = vset.pattern.permute.xlu0 16
        %1144 = vperm.xlu0 %1143, %v512
        %v1145 = vpop.permute.xlu0 %1144
        %1147 = vset.pattern.permute.xlu0 16
        %1148 = vperm.xlu0 %1147, %v516
        %v1149 = vpop.permute.xlu0 %1148
        %1151 = vset.pattern.permute.xlu0 16
        %1152 = vperm.xlu0 %1151, %v520
        %v1153 = vpop.permute.xlu0 %1152
        %1155 = vset.pattern.permute.xlu0 16
        %1156 = vperm.xlu0 %1155, %v524
        %v1157 = vpop.permute.xlu0 %1156
        %1159 = vset.pattern.permute.xlu0 16
        %1160 = vperm.xlu0 %1159, %v528
        %v1161 = vpop.permute.xlu0 %1160
        %1163 = vset.pattern.permute.xlu0 16
        %1164 = vperm.xlu0 %1163, %v532
        %v1165 = vpop.permute.xlu0 %1164
        %v1167 = vmul.f32 %v1119, %v1137
        %v1168 = vmul.f32 %v1120, %v1137
        %v1169 = vmul.f32 %v1121, %v1141
        %v1170 = vmul.f32 %v1122, %v1141
        %v1171 = vmul.f32 %v1123, %v1145
        %v1172 = vmul.f32 %v1124, %v1145
        %v1173 = vmul.f32 %v1125, %v1149
        %v1174 = vmul.f32 %v1126, %v1149
        %v1175 = vmul.f32 %v1127, %v1153
        %v1176 = vmul.f32 %v1128, %v1153
        %v1177 = vmul.f32 %v1129, %v1157
        %v1178 = vmul.f32 %v1130, %v1157
        %v1179 = vmul.f32 %v1131, %v1161
        %v1180 = vmul.f32 %v1132, %v1161
        %v1181 = vmul.f32 %v1133, %v1165
        %v1182 = vmul.f32 %v1134, %v1165
        %1183 = vset.pattern.permute.xlu0 17
        %1184 = vperm.xlu0 %1183, %v938
        %v1185 = vpop.permute.xlu0 %1184
        %1187 = vset.pattern.permute.xlu0 17
        %1188 = vperm.xlu0 %1187, %v942
        %v1189 = vpop.permute.xlu0 %1188
        %1191 = vset.pattern.permute.xlu0 17
        %1192 = vperm.xlu0 %1191, %v946
        %v1193 = vpop.permute.xlu0 %1192
        %1195 = vset.pattern.permute.xlu0 17
        %1196 = vperm.xlu0 %1195, %v950
        %v1197 = vpop.permute.xlu0 %1196
        %1199 = vset.pattern.permute.xlu0 17
        %1200 = vperm.xlu0 %1199, %v954
        %v1201 = vpop.permute.xlu0 %1200
        %1203 = vset.pattern.permute.xlu0 17
        %1204 = vperm.xlu0 %1203, %v958
        %v1205 = vpop.permute.xlu0 %1204
        %1207 = vset.pattern.permute.xlu0 17
        %1208 = vperm.xlu0 %1207, %v962
        %v1209 = vpop.permute.xlu0 %1208
        %1211 = vset.pattern.permute.xlu0 17
        %1212 = vperm.xlu0 %1211, %v966
        %v1213 = vpop.permute.xlu0 %1212
        %v1215 = vmul.f32 %v209, %v1185
        %v1216 = vmul.f32 %v210, %v1185
        %v1217 = vmul.f32 %v211, %v1189
        %v1218 = vmul.f32 %v212, %v1189
        %v1219 = vmul.f32 %v213, %v1193
        %v1220 = vmul.f32 %v214, %v1193
        %v1221 = vmul.f32 %v215, %v1197
        %v1222 = vmul.f32 %v216, %v1197
        %v1223 = vmul.f32 %v217, %v1201
        %v1224 = vmul.f32 %v218, %v1201
        %v1225 = vmul.f32 %v219, %v1205
        %v1226 = vmul.f32 %v220, %v1205
        %v1227 = vmul.f32 %v221, %v1209
        %v1228 = vmul.f32 %v222, %v1209
        %v1229 = vmul.f32 %v223, %v1213
        %v1230 = vmul.f32 %v224, %v1213
        %v1231 = vadd.f32 %v1167, %v1215
        %v1232 = vadd.f32 %v1168, %v1216
        %v1233 = vadd.f32 %v1169, %v1217
        %v1234 = vadd.f32 %v1170, %v1218
        %v1235 = vadd.f32 %v1171, %v1219
        %v1236 = vadd.f32 %v1172, %v1220
        %v1237 = vadd.f32 %v1173, %v1221
        %v1238 = vadd.f32 %v1174, %v1222
        %v1239 = vadd.f32 %v1175, %v1223
        %v1240 = vadd.f32 %v1176, %v1224
        %v1241 = vadd.f32 %v1177, %v1225
        %v1242 = vadd.f32 %v1178, %v1226
        %v1243 = vadd.f32 %v1179, %v1227
        %v1244 = vadd.f32 %v1180, %v1228
        %v1245 = vadd.f32 %v1181, %v1229
        %v1246 = vadd.f32 %v1182, %v1230
        %v1247 = vld [vmem:[#allocation2] sm:$0xff]
        %v1248 = vld [vmem:[#allocation2 + $0x8] sm:$0xff]
        %v1249 = vld [vmem:[#allocation2 + $0x18] sm:$0xff]
        %v1250 = vld [vmem:[#allocation2 + $0x20] sm:$0xff]
        %v1251 = vld [vmem:[#allocation2 + $0x30] sm:$0xff]
        %v1252 = vld [vmem:[#allocation2 + $0x38] sm:$0xff]
        %v1253 = vld [vmem:[#allocation2 + $0x48] sm:$0xff]
        %v1254 = vld [vmem:[#allocation2 + $0x50] sm:$0xff]
        %v1255 = vld [vmem:[#allocation2 + $0x60] sm:$0xff]
        %v1256 = vld [vmem:[#allocation2 + $0x68] sm:$0xff]
        %v1257 = vld [vmem:[#allocation2 + $0x78] sm:$0xff]
        %v1258 = vld [vmem:[#allocation2 + $0x80] sm:$0xff]
        %v1259 = vld [vmem:[#allocation2 + $0x90] sm:$0xff]
        %v1260 = vld [vmem:[#allocation2 + $0x98] sm:$0xff]
        %v1261 = vld [vmem:[#allocation2 + $0xa8] sm:$0xff]
        %v1262 = vld [vmem:[#allocation2 + $0xb0] sm:$0xff]
        %1263 = vset.pattern.permute.xlu0 6
        %1264 = vperm.xlu0 %1263, %v504
        %v1265 = vpop.permute.xlu0 %1264
        %1267 = vset.pattern.permute.xlu0 6
        %1268 = vperm.xlu0 %1267, %v508
        %v1269 = vpop.permute.xlu0 %1268
        %1271 = vset.pattern.permute.xlu0 6
        %1272 = vperm.xlu0 %1271, %v512
        %v1273 = vpop.permute.xlu0 %1272
        %1275 = vset.pattern.permute.xlu0 6
        %1276 = vperm.xlu0 %1275, %v516
        %v1277 = vpop.permute.xlu0 %1276
        %1279 = vset.pattern.permute.xlu0 6
        %1280 = vperm.xlu0 %1279, %v520
        %v1281 = vpop.permute.xlu0 %1280
        %1283 = vset.pattern.permute.xlu0 6
        %1284 = vperm.xlu0 %1283, %v524
        %v1285 = vpop.permute.xlu0 %1284
        %1287 = vset.pattern.permute.xlu0 6
        %1288 = vperm.xlu0 %1287, %v528
        %v1289 = vpop.permute.xlu0 %1288
        %1291 = vset.pattern.permute.xlu0 6
        %1292 = vperm.xlu0 %1291, %v532
        %v1293 = vpop.permute.xlu0 %1292
        %v1295 = vmul.f32 %v1265, %v1247
        %v1296 = vmul.f32 %v1265, %v1248
        %v1297 = vmul.f32 %v1269, %v1249
        %v1298 = vmul.f32 %v1269, %v1250
        %v1299 = vmul.f32 %v1273, %v1251
        %v1300 = vmul.f32 %v1273, %v1252
        %v1301 = vmul.f32 %v1277, %v1253
        %v1302 = vmul.f32 %v1277, %v1254
        %v1303 = vmul.f32 %v1281, %v1255
        %v1304 = vmul.f32 %v1281, %v1256
        %v1305 = vmul.f32 %v1285, %v1257
        %v1306 = vmul.f32 %v1285, %v1258
        %v1307 = vmul.f32 %v1289, %v1259
        %v1308 = vmul.f32 %v1289, %v1260
        %v1309 = vmul.f32 %v1293, %v1261
        %v1310 = vmul.f32 %v1293, %v1262
        %v1311 = vadd.f32 %v1295, 0.0
        %v1312 = vadd.f32 %v1296, 0.0
        %v1313 = vadd.f32 %v1297, 0.0
        %v1314 = vadd.f32 %v1298, 0.0
        %v1315 = vadd.f32 %v1299, 0.0
        %v1316 = vadd.f32 %v1300, 0.0
        %v1317 = vadd.f32 %v1301, 0.0
        %v1318 = vadd.f32 %v1302, 0.0
        %v1319 = vadd.f32 %v1303, 0.0
        %v1320 = vadd.f32 %v1304, 0.0
        %v1321 = vadd.f32 %v1305, 0.0
        %v1322 = vadd.f32 %v1306, 0.0
        %v1323 = vadd.f32 %v1307, 0.0
        %v1324 = vadd.f32 %v1308, 0.0
        %v1325 = vadd.f32 %v1309, 0.0
        %v1326 = vadd.f32 %v1310, 0.0
        %1327 = vset.pattern.permute.xlu0 7
        %1328 = vperm.xlu0 %1327, %v504
        %v1329 = vpop.permute.xlu0 %1328
        %1331 = vset.pattern.permute.xlu0 7
        %1332 = vperm.xlu0 %1331, %v508
        %v1333 = vpop.permute.xlu0 %1332
        %1335 = vset.pattern.permute.xlu0 7
        %1336 = vperm.xlu0 %1335, %v512
        %v1337 = vpop.permute.xlu0 %1336
        %1339 = vset.pattern.permute.xlu0 7
        %1340 = vperm.xlu0 %1339, %v516
        %v1341 = vpop.permute.xlu0 %1340
        %1343 = vset.pattern.permute.xlu0 7
        %1344 = vperm.xlu0 %1343, %v520
        %v1345 = vpop.permute.xlu0 %1344
        %1347 = vset.pattern.permute.xlu0 7
        %1348 = vperm.xlu0 %1347, %v524
        %v1349 = vpop.permute.xlu0 %1348
        %1351 = vset.pattern.permute.xlu0 7
        %1352 = vperm.xlu0 %1351, %v528
        %v1353 = vpop.permute.xlu0 %1352
        %1355 = vset.pattern.permute.xlu0 7
        %1356 = vperm.xlu0 %1355, %v532
        %v1357 = vpop.permute.xlu0 %1356
        %v1359 = vmul.f32 %v1329, %v1247
        %v1360 = vmul.f32 %v1329, %v1248
        %v1361 = vmul.f32 %v1333, %v1249
        %v1362 = vmul.f32 %v1333, %v1250
        %v1363 = vmul.f32 %v1337, %v1251
        %v1364 = vmul.f32 %v1337, %v1252
        %v1365 = vmul.f32 %v1341, %v1253
        %v1366 = vmul.f32 %v1341, %v1254
        %v1367 = vmul.f32 %v1345, %v1255
        %v1368 = vmul.f32 %v1345, %v1256
        %v1369 = vmul.f32 %v1349, %v1257
        %v1370 = vmul.f32 %v1349, %v1258
        %v1371 = vmul.f32 %v1353, %v1259
        %v1372 = vmul.f32 %v1353, %v1260
        %v1373 = vmul.f32 %v1357, %v1261
        %v1374 = vmul.f32 %v1357, %v1262
        %1391 = vrot.lane.b32.xlu0 %v1359, 127
        %v1392 = vpop.permute.xlu0 %1391
        %1393 = vrot.lane.b32.xlu0 %v1360, 127
        %v1394 = vpop.permute.xlu0 %1393
        %1395 = vrot.lane.b32.xlu0 %v1361, 127
        %v1396 = vpop.permute.xlu0 %1395
        %1397 = vrot.lane.b32.xlu0 %v1362, 127
        %v1398 = vpop.permute.xlu0 %1397
        %1399 = vrot.lane.b32.xlu0 %v1363, 127
        %v1400 = vpop.permute.xlu0 %1399
        %1401 = vrot.lane.b32.xlu0 %v1364, 127
        %v1402 = vpop.permute.xlu0 %1401
        %1403 = vrot.lane.b32.xlu0 %v1365, 127
        %v1404 = vpop.permute.xlu0 %1403
        %1405 = vrot.lane.b32.xlu0 %v1366, 127
        %v1406 = vpop.permute.xlu0 %1405
        %1407 = vrot.lane.b32.xlu0 %v1367, 127
        %v1408 = vpop.permute.xlu0 %1407
        %1409 = vrot.lane.b32.xlu0 %v1368, 127
        %v1410 = vpop.permute.xlu0 %1409
        %1411 = vrot.lane.b32.xlu0 %v1369, 127
        %v1412 = vpop.permute.xlu0 %1411
        %1413 = vrot.lane.b32.xlu0 %v1370, 127
        %v1414 = vpop.permute.xlu0 %1413
        %1415 = vrot.lane.b32.xlu0 %v1371, 127
        %v1416 = vpop.permute.xlu0 %1415
        %1417 = vrot.lane.b32.xlu0 %v1372, 127
        %v1418 = vpop.permute.xlu0 %1417
        %1419 = vrot.lane.b32.xlu0 %v1373, 127
        %v1420 = vpop.permute.xlu0 %1419
        %1421 = vrot.lane.b32.xlu0 %v1374, 127
        %v1422 = vpop.permute.xlu0 %1421
        %v1439 = vadd.f32 %v1311, %v1392
        %v1440 = vadd.f32 %v1312, %v1394
        %v1441 = vadd.f32 %v1313, %v1396
        %v1442 = vadd.f32 %v1314, %v1398
        %v1443 = vadd.f32 %v1315, %v1400
        %v1444 = vadd.f32 %v1316, %v1402
        %v1445 = vadd.f32 %v1317, %v1404
        %v1446 = vadd.f32 %v1318, %v1406
        %v1447 = vadd.f32 %v1319, %v1408
        %v1448 = vadd.f32 %v1320, %v1410
        %v1449 = vadd.f32 %v1321, %v1412
        %v1450 = vadd.f32 %v1322, %v1414
        %v1451 = vadd.f32 %v1323, %v1416
        %v1452 = vadd.f32 %v1324, %v1418
        %v1453 = vadd.f32 %v1325, %v1420
        %v1454 = vadd.f32 %v1326, %v1422
        %1455 = vset.pattern.permute.xlu0 8
        %1456 = vperm.xlu0 %1455, %v504
        %v1457 = vpop.permute.xlu0 %1456
        %1459 = vset.pattern.permute.xlu0 8
        %1460 = vperm.xlu0 %1459, %v508
        %v1461 = vpop.permute.xlu0 %1460
        %1463 = vset.pattern.permute.xlu0 8
        %1464 = vperm.xlu0 %1463, %v512
        %v1465 = vpop.permute.xlu0 %1464
        %1467 = vset.pattern.permute.xlu0 8
        %1468 = vperm.xlu0 %1467, %v516
        %v1469 = vpop.permute.xlu0 %1468
        %1471 = vset.pattern.permute.xlu0 8
        %1472 = vperm.xlu0 %1471, %v520
        %v1473 = vpop.permute.xlu0 %1472
        %1475 = vset.pattern.permute.xlu0 8
        %1476 = vperm.xlu0 %1475, %v524
        %v1477 = vpop.permute.xlu0 %1476
        %1479 = vset.pattern.permute.xlu0 8
        %1480 = vperm.xlu0 %1479, %v528
        %v1481 = vpop.permute.xlu0 %1480
        %1483 = vset.pattern.permute.xlu0 8
        %1484 = vperm.xlu0 %1483, %v532
        %v1485 = vpop.permute.xlu0 %1484
        %v1487 = vmul.f32 %v1457, %v1247
        %v1488 = vmul.f32 %v1457, %v1248
        %v1489 = vmul.f32 %v1461, %v1249
        %v1490 = vmul.f32 %v1461, %v1250
        %v1491 = vmul.f32 %v1465, %v1251
        %v1492 = vmul.f32 %v1465, %v1252
        %v1493 = vmul.f32 %v1469, %v1253
        %v1494 = vmul.f32 %v1469, %v1254
        %v1495 = vmul.f32 %v1473, %v1255
        %v1496 = vmul.f32 %v1473, %v1256
        %v1497 = vmul.f32 %v1477, %v1257
        %v1498 = vmul.f32 %v1477, %v1258
        %v1499 = vmul.f32 %v1481, %v1259
        %v1500 = vmul.f32 %v1481, %v1260
        %v1501 = vmul.f32 %v1485, %v1261
        %v1502 = vmul.f32 %v1485, %v1262
        %1519 = vrot.lane.b32.xlu0 %v1487, 126
        %v1520 = vpop.permute.xlu0 %1519
        %1521 = vrot.lane.b32.xlu0 %v1488, 126
        %v1522 = vpop.permute.xlu0 %1521
        %1523 = vrot.lane.b32.xlu0 %v1489, 126
        %v1524 = vpop.permute.xlu0 %1523
        %1525 = vrot.lane.b32.xlu0 %v1490, 126
        %v1526 = vpop.permute.xlu0 %1525
        %1527 = vrot.lane.b32.xlu0 %v1491, 126
        %v1528 = vpop.permute.xlu0 %1527
        %1529 = vrot.lane.b32.xlu0 %v1492, 126
        %v1530 = vpop.permute.xlu0 %1529
        %1531 = vrot.lane.b32.xlu0 %v1493, 126
        %v1532 = vpop.permute.xlu0 %1531
        %1533 = vrot.lane.b32.xlu0 %v1494, 126
        %v1534 = vpop.permute.xlu0 %1533
        %1535 = vrot.lane.b32.xlu0 %v1495, 126
        %v1536 = vpop.permute.xlu0 %1535
        %1537 = vrot.lane.b32.xlu0 %v1496, 126
        %v1538 = vpop.permute.xlu0 %1537
        %1539 = vrot.lane.b32.xlu0 %v1497, 126
        %v1540 = vpop.permute.xlu0 %1539
        %1541 = vrot.lane.b32.xlu0 %v1498, 126
        %v1542 = vpop.permute.xlu0 %1541
        %1543 = vrot.lane.b32.xlu0 %v1499, 126
        %v1544 = vpop.permute.xlu0 %1543
        %1545 = vrot.lane.b32.xlu0 %v1500, 126
        %v1546 = vpop.permute.xlu0 %1545
        %1547 = vrot.lane.b32.xlu0 %v1501, 126
        %v1548 = vpop.permute.xlu0 %1547
        %1549 = vrot.lane.b32.xlu0 %v1502, 126
        %v1550 = vpop.permute.xlu0 %1549
        %v1567 = vadd.f32 %v1439, %v1520
        %v1568 = vadd.f32 %v1440, %v1522
        %v1569 = vadd.f32 %v1441, %v1524
        %v1570 = vadd.f32 %v1442, %v1526
        %v1571 = vadd.f32 %v1443, %v1528
        %v1572 = vadd.f32 %v1444, %v1530
        %v1573 = vadd.f32 %v1445, %v1532
        %v1574 = vadd.f32 %v1446, %v1534
        %v1575 = vadd.f32 %v1447, %v1536
        %v1576 = vadd.f32 %v1448, %v1538
        %v1577 = vadd.f32 %v1449, %v1540
        %v1578 = vadd.f32 %v1450, %v1542
        %v1579 = vadd.f32 %v1451, %v1544
        %v1580 = vadd.f32 %v1452, %v1546
        %v1581 = vadd.f32 %v1453, %v1548
        %v1582 = vadd.f32 %v1454, %v1550
        %1583 = vset.pattern.permute.xlu0 9
        %1584 = vperm.xlu0 %1583, %v504
        %v1585 = vpop.permute.xlu0 %1584
        %1587 = vset.pattern.permute.xlu0 9
        %1588 = vperm.xlu0 %1587, %v508
        %v1589 = vpop.permute.xlu0 %1588
        %1591 = vset.pattern.permute.xlu0 9
        %1592 = vperm.xlu0 %1591, %v512
        %v1593 = vpop.permute.xlu0 %1592
        %1595 = vset.pattern.permute.xlu0 9
        %1596 = vperm.xlu0 %1595, %v516
        %v1597 = vpop.permute.xlu0 %1596
        %1599 = vset.pattern.permute.xlu0 9
        %1600 = vperm.xlu0 %1599, %v520
        %v1601 = vpop.permute.xlu0 %1600
        %1603 = vset.pattern.permute.xlu0 9
        %1604 = vperm.xlu0 %1603, %v524
        %v1605 = vpop.permute.xlu0 %1604
        %1607 = vset.pattern.permute.xlu0 9
        %1608 = vperm.xlu0 %1607, %v528
        %v1609 = vpop.permute.xlu0 %1608
        %1611 = vset.pattern.permute.xlu0 9
        %1612 = vperm.xlu0 %1611, %v532
        %v1613 = vpop.permute.xlu0 %1612
        %v1615 = vmul.f32 %v1585, %v477
        %v1616 = vmul.f32 %v1585, %v478
        %v1617 = vmul.f32 %v1589, %v479
        %v1618 = vmul.f32 %v1589, %v480
        %v1619 = vmul.f32 %v1593, %v481
        %v1620 = vmul.f32 %v1593, %v482
        %v1621 = vmul.f32 %v1597, %v483
        %v1622 = vmul.f32 %v1597, %v484
        %v1623 = vmul.f32 %v1601, %v485
        %v1624 = vmul.f32 %v1601, %v486
        %v1625 = vmul.f32 %v1605, %v487
        %v1626 = vmul.f32 %v1605, %v488
        %v1627 = vmul.f32 %v1609, %v489
        %v1628 = vmul.f32 %v1609, %v490
        %v1629 = vmul.f32 %v1613, %v491
        %v1630 = vmul.f32 %v1613, %v492
        %v1631 = vadd.f32 %v1567, %v1615
        %v1632 = vadd.f32 %v1568, %v1616
        %v1633 = vadd.f32 %v1569, %v1617
        %v1634 = vadd.f32 %v1570, %v1618
        %v1635 = vadd.f32 %v1571, %v1619
        %v1636 = vadd.f32 %v1572, %v1620
        %v1637 = vadd.f32 %v1573, %v1621
        %v1638 = vadd.f32 %v1574, %v1622
        %v1639 = vadd.f32 %v1575, %v1623
        %v1640 = vadd.f32 %v1576, %v1624
        %v1641 = vadd.f32 %v1577, %v1625
        %v1642 = vadd.f32 %v1578, %v1626
        %v1643 = vadd.f32 %v1579, %v1627
        %v1644 = vadd.f32 %v1580, %v1628
        %v1645 = vadd.f32 %v1581, %v1629
        %v1646 = vadd.f32 %v1582, %v1630
        %1647 = vset.pattern.permute.xlu0 10
        %1648 = vperm.xlu0 %1647, %v504
        %v1649 = vpop.permute.xlu0 %1648
        %1651 = vset.pattern.permute.xlu0 10
        %1652 = vperm.xlu0 %1651, %v508
        %v1653 = vpop.permute.xlu0 %1652
        %1655 = vset.pattern.permute.xlu0 10
        %1656 = vperm.xlu0 %1655, %v512
        %v1657 = vpop.permute.xlu0 %1656
        %1659 = vset.pattern.permute.xlu0 10
        %1660 = vperm.xlu0 %1659, %v516
        %v1661 = vpop.permute.xlu0 %1660
        %1663 = vset.pattern.permute.xlu0 10
        %1664 = vperm.xlu0 %1663, %v520
        %v1665 = vpop.permute.xlu0 %1664
        %1667 = vset.pattern.permute.xlu0 10
        %1668 = vperm.xlu0 %1667, %v524
        %v1669 = vpop.permute.xlu0 %1668
        %1671 = vset.pattern.permute.xlu0 10
        %1672 = vperm.xlu0 %1671, %v528
        %v1673 = vpop.permute.xlu0 %1672
        %1675 = vset.pattern.permute.xlu0 10
        %1676 = vperm.xlu0 %1675, %v532
        %v1677 = vpop.permute.xlu0 %1676
        %v1679 = vmul.f32 %v1649, %v477
        %v1680 = vmul.f32 %v1649, %v478
        %v1681 = vmul.f32 %v1653, %v479
        %v1682 = vmul.f32 %v1653, %v480
        %v1683 = vmul.f32 %v1657, %v481
        %v1684 = vmul.f32 %v1657, %v482
        %v1685 = vmul.f32 %v1661, %v483
        %v1686 = vmul.f32 %v1661, %v484
        %v1687 = vmul.f32 %v1665, %v485
        %v1688 = vmul.f32 %v1665, %v486
        %v1689 = vmul.f32 %v1669, %v487
        %v1690 = vmul.f32 %v1669, %v488
        %v1691 = vmul.f32 %v1673, %v489
        %v1692 = vmul.f32 %v1673, %v490
        %v1693 = vmul.f32 %v1677, %v491
        %v1694 = vmul.f32 %v1677, %v492
        %1711 = vrot.lane.b32.xlu0 %v1679, 127
        %v1712 = vpop.permute.xlu0 %1711
        %1713 = vrot.lane.b32.xlu0 %v1680, 127
        %v1714 = vpop.permute.xlu0 %1713
        %1715 = vrot.lane.b32.xlu0 %v1681, 127
        %v1716 = vpop.permute.xlu0 %1715
        %1717 = vrot.lane.b32.xlu0 %v1682, 127
        %v1718 = vpop.permute.xlu0 %1717
        %1719 = vrot.lane.b32.xlu0 %v1683, 127
        %v1720 = vpop.permute.xlu0 %1719
        %1721 = vrot.lane.b32.xlu0 %v1684, 127
        %v1722 = vpop.permute.xlu0 %1721
        %1723 = vrot.lane.b32.xlu0 %v1685, 127
        %v1724 = vpop.permute.xlu0 %1723
        %1725 = vrot.lane.b32.xlu0 %v1686, 127
        %v1726 = vpop.permute.xlu0 %1725
        %1727 = vrot.lane.b32.xlu0 %v1687, 127
        %v1728 = vpop.permute.xlu0 %1727
        %1729 = vrot.lane.b32.xlu0 %v1688, 127
        %v1730 = vpop.permute.xlu0 %1729
        %1731 = vrot.lane.b32.xlu0 %v1689, 127
        %v1732 = vpop.permute.xlu0 %1731
        %1733 = vrot.lane.b32.xlu0 %v1690, 127
        %v1734 = vpop.permute.xlu0 %1733
        %1735 = vrot.lane.b32.xlu0 %v1691, 127
        %v1736 = vpop.permute.xlu0 %1735
        %1737 = vrot.lane.b32.xlu0 %v1692, 127
        %v1738 = vpop.permute.xlu0 %1737
        %1739 = vrot.lane.b32.xlu0 %v1693, 127
        %v1740 = vpop.permute.xlu0 %1739
        %1741 = vrot.lane.b32.xlu0 %v1694, 127
        %v1742 = vpop.permute.xlu0 %1741
        %v1759 = vadd.f32 %v1631, %v1712
        %v1760 = vadd.f32 %v1632, %v1714
        %v1761 = vadd.f32 %v1633, %v1716
        %v1762 = vadd.f32 %v1634, %v1718
        %v1763 = vadd.f32 %v1635, %v1720
        %v1764 = vadd.f32 %v1636, %v1722
        %v1765 = vadd.f32 %v1637, %v1724
        %v1766 = vadd.f32 %v1638, %v1726
        %v1767 = vadd.f32 %v1639, %v1728
        %v1768 = vadd.f32 %v1640, %v1730
        %v1769 = vadd.f32 %v1641, %v1732
        %v1770 = vadd.f32 %v1642, %v1734
        %v1771 = vadd.f32 %v1643, %v1736
        %v1772 = vadd.f32 %v1644, %v1738
        %v1773 = vadd.f32 %v1645, %v1740
        %v1774 = vadd.f32 %v1646, %v1742
        %1775 = vset.pattern.permute.xlu0 11
        %1776 = vperm.xlu0 %1775, %v504
        %v1777 = vpop.permute.xlu0 %1776
        %1779 = vset.pattern.permute.xlu0 11
        %1780 = vperm.xlu0 %1779, %v508
        %v1781 = vpop.permute.xlu0 %1780
        %1783 = vset.pattern.permute.xlu0 11
        %1784 = vperm.xlu0 %1783, %v512
        %v1785 = vpop.permute.xlu0 %1784
        %1787 = vset.pattern.permute.xlu0 11
        %1788 = vperm.xlu0 %1787, %v516
        %v1789 = vpop.permute.xlu0 %1788
        %1791 = vset.pattern.permute.xlu0 11
        %1792 = vperm.xlu0 %1791, %v520
        %v1793 = vpop.permute.xlu0 %1792
        %1795 = vset.pattern.permute.xlu0 11
        %1796 = vperm.xlu0 %1795, %v524
        %v1797 = vpop.permute.xlu0 %1796
        %1799 = vset.pattern.permute.xlu0 11
        %1800 = vperm.xlu0 %1799, %v528
        %v1801 = vpop.permute.xlu0 %1800
        %1803 = vset.pattern.permute.xlu0 11
        %1804 = vperm.xlu0 %1803, %v532
        %v1805 = vpop.permute.xlu0 %1804
        %v1807 = vmul.f32 %v1777, %v477
        %v1808 = vmul.f32 %v1777, %v478
        %v1809 = vmul.f32 %v1781, %v479
        %v1810 = vmul.f32 %v1781, %v480
        %v1811 = vmul.f32 %v1785, %v481
        %v1812 = vmul.f32 %v1785, %v482
        %v1813 = vmul.f32 %v1789, %v483
        %v1814 = vmul.f32 %v1789, %v484
        %v1815 = vmul.f32 %v1793, %v485
        %v1816 = vmul.f32 %v1793, %v486
        %v1817 = vmul.f32 %v1797, %v487
        %v1818 = vmul.f32 %v1797, %v488
        %v1819 = vmul.f32 %v1801, %v489
        %v1820 = vmul.f32 %v1801, %v490
        %v1821 = vmul.f32 %v1805, %v491
        %v1822 = vmul.f32 %v1805, %v492
        %1839 = vrot.lane.b32.xlu0 %v1807, 126
        %v1840 = vpop.permute.xlu0 %1839
        %1841 = vrot.lane.b32.xlu0 %v1808, 126
        %v1842 = vpop.permute.xlu0 %1841
        %1843 = vrot.lane.b32.xlu0 %v1809, 126
        %v1844 = vpop.permute.xlu0 %1843
        %1845 = vrot.lane.b32.xlu0 %v1810, 126
        %v1846 = vpop.permute.xlu0 %1845
        %1847 = vrot.lane.b32.xlu0 %v1811, 126
        %v1848 = vpop.permute.xlu0 %1847
        %1849 = vrot.lane.b32.xlu0 %v1812, 126
        %v1850 = vpop.permute.xlu0 %1849
        %1851 = vrot.lane.b32.xlu0 %v1813, 126
        %v1852 = vpop.permute.xlu0 %1851
        %1853 = vrot.lane.b32.xlu0 %v1814, 126
        %v1854 = vpop.permute.xlu0 %1853
        %1855 = vrot.lane.b32.xlu0 %v1815, 126
        %v1856 = vpop.permute.xlu0 %1855
        %1857 = vrot.lane.b32.xlu0 %v1816, 126
        %v1858 = vpop.permute.xlu0 %1857
        %1859 = vrot.lane.b32.xlu0 %v1817, 126
        %v1860 = vpop.permute.xlu0 %1859
        %1861 = vrot.lane.b32.xlu0 %v1818, 126
        %v1862 = vpop.permute.xlu0 %1861
        %1863 = vrot.lane.b32.xlu0 %v1819, 126
        %v1864 = vpop.permute.xlu0 %1863
        %1865 = vrot.lane.b32.xlu0 %v1820, 126
        %v1866 = vpop.permute.xlu0 %1865
        %1867 = vrot.lane.b32.xlu0 %v1821, 126
        %v1868 = vpop.permute.xlu0 %1867
        %1869 = vrot.lane.b32.xlu0 %v1822, 126
        %v1870 = vpop.permute.xlu0 %1869
        %v1887 = vadd.f32 %v1759, %v1840
        %v1888 = vadd.f32 %v1760, %v1842
        %v1889 = vadd.f32 %v1761, %v1844
        %v1890 = vadd.f32 %v1762, %v1846
        %v1891 = vadd.f32 %v1763, %v1848
        %v1892 = vadd.f32 %v1764, %v1850
        %v1893 = vadd.f32 %v1765, %v1852
        %v1894 = vadd.f32 %v1766, %v1854
        %v1895 = vadd.f32 %v1767, %v1856
        %v1896 = vadd.f32 %v1768, %v1858
        %v1897 = vadd.f32 %v1769, %v1860
        %v1898 = vadd.f32 %v1770, %v1862
        %v1899 = vadd.f32 %v1771, %v1864
        %v1900 = vadd.f32 %v1772, %v1866
        %v1901 = vadd.f32 %v1773, %v1868
        %v1902 = vadd.f32 %v1774, %v1870
        %v1903 = vld [vmem:[#allocation2 + $0x2] sm:$0xff]
        %v1904 = vld [vmem:[#allocation2 + $0xa] sm:$0xff]
        %v1905 = vld [vmem:[#allocation2 + $0x1a] sm:$0xff]
        %v1906 = vld [vmem:[#allocation2 + $0x22] sm:$0xff]
        %v1907 = vld [vmem:[#allocation2 + $0x32] sm:$0xff]
        %v1908 = vld [vmem:[#allocation2 + $0x3a] sm:$0xff]
        %v1909 = vld [vmem:[#allocation2 + $0x4a] sm:$0xff]
        %v1910 = vld [vmem:[#allocation2 + $0x52] sm:$0xff]
        %v1911 = vld [vmem:[#allocation2 + $0x62] sm:$0xff]
        %v1912 = vld [vmem:[#allocation2 + $0x6a] sm:$0xff]
        %v1913 = vld [vmem:[#allocation2 + $0x7a] sm:$0xff]
        %v1914 = vld [vmem:[#allocation2 + $0x82] sm:$0xff]
        %v1915 = vld [vmem:[#allocation2 + $0x92] sm:$0xff]
        %v1916 = vld [vmem:[#allocation2 + $0x9a] sm:$0xff]
        %v1917 = vld [vmem:[#allocation2 + $0xaa] sm:$0xff]
        %v1918 = vld [vmem:[#allocation2 + $0xb2] sm:$0xff]
        %1919 = vset.pattern.permute.xlu0 12
        %1920 = vperm.xlu0 %1919, %v504
        %v1921 = vpop.permute.xlu0 %1920
        %1923 = vset.pattern.permute.xlu0 12
        %1924 = vperm.xlu0 %1923, %v508
        %v1925 = vpop.permute.xlu0 %1924
        %1927 = vset.pattern.permute.xlu0 12
        %1928 = vperm.xlu0 %1927, %v512
        %v1929 = vpop.permute.xlu0 %1928
        %1931 = vset.pattern.permute.xlu0 12
        %1932 = vperm.xlu0 %1931, %v516
        %v1933 = vpop.permute.xlu0 %1932
        %1935 = vset.pattern.permute.xlu0 12
        %1936 = vperm.xlu0 %1935, %v520
        %v1937 = vpop.permute.xlu0 %1936
        %1939 = vset.pattern.permute.xlu0 12
        %1940 = vperm.xlu0 %1939, %v524
        %v1941 = vpop.permute.xlu0 %1940
        %1943 = vset.pattern.permute.xlu0 12
        %1944 = vperm.xlu0 %1943, %v528
        %v1945 = vpop.permute.xlu0 %1944
        %1947 = vset.pattern.permute.xlu0 12
        %1948 = vperm.xlu0 %1947, %v532
        %v1949 = vpop.permute.xlu0 %1948
        %v1951 = vmul.f32 %v1921, %v1903
        %v1952 = vmul.f32 %v1921, %v1904
        %v1953 = vmul.f32 %v1925, %v1905
        %v1954 = vmul.f32 %v1925, %v1906
        %v1955 = vmul.f32 %v1929, %v1907
        %v1956 = vmul.f32 %v1929, %v1908
        %v1957 = vmul.f32 %v1933, %v1909
        %v1958 = vmul.f32 %v1933, %v1910
        %v1959 = vmul.f32 %v1937, %v1911
        %v1960 = vmul.f32 %v1937, %v1912
        %v1961 = vmul.f32 %v1941, %v1913
        %v1962 = vmul.f32 %v1941, %v1914
        %v1963 = vmul.f32 %v1945, %v1915
        %v1964 = vmul.f32 %v1945, %v1916
        %v1965 = vmul.f32 %v1949, %v1917
        %v1966 = vmul.f32 %v1949, %v1918
        %v1967 = vadd.f32 %v1887, %v1951
        %v1968 = vadd.f32 %v1888, %v1952
        %v1969 = vadd.f32 %v1889, %v1953
        %v1970 = vadd.f32 %v1890, %v1954
        %v1971 = vadd.f32 %v1891, %v1955
        %v1972 = vadd.f32 %v1892, %v1956
        %v1973 = vadd.f32 %v1893, %v1957
        %v1974 = vadd.f32 %v1894, %v1958
        %v1975 = vadd.f32 %v1895, %v1959
        %v1976 = vadd.f32 %v1896, %v1960
        %v1977 = vadd.f32 %v1897, %v1961
        %v1978 = vadd.f32 %v1898, %v1962
        %v1979 = vadd.f32 %v1899, %v1963
        %v1980 = vadd.f32 %v1900, %v1964
        %v1981 = vadd.f32 %v1901, %v1965
        %v1982 = vadd.f32 %v1902, %v1966
        %1983 = vset.pattern.permute.xlu0 13
        %1984 = vperm.xlu0 %1983, %v504
        %v1985 = vpop.permute.xlu0 %1984
        %1987 = vset.pattern.permute.xlu0 13
        %1988 = vperm.xlu0 %1987, %v508
        %v1989 = vpop.permute.xlu0 %1988
        %1991 = vset.pattern.permute.xlu0 13
        %1992 = vperm.xlu0 %1991, %v512
        %v1993 = vpop.permute.xlu0 %1992
        %1995 = vset.pattern.permute.xlu0 13
        %1996 = vperm.xlu0 %1995, %v516
        %v1997 = vpop.permute.xlu0 %1996
        %1999 = vset.pattern.permute.xlu0 13
        %2000 = vperm.xlu0 %1999, %v520
        %v2001 = vpop.permute.xlu0 %2000
        %2003 = vset.pattern.permute.xlu0 13
        %2004 = vperm.xlu0 %2003, %v524
        %v2005 = vpop.permute.xlu0 %2004
        %2007 = vset.pattern.permute.xlu0 13
        %2008 = vperm.xlu0 %2007, %v528
        %v2009 = vpop.permute.xlu0 %2008
        %2011 = vset.pattern.permute.xlu0 13
        %2012 = vperm.xlu0 %2011, %v532
        %v2013 = vpop.permute.xlu0 %2012
        %v2015 = vmul.f32 %v1985, %v1903
        %v2016 = vmul.f32 %v1985, %v1904
        %v2017 = vmul.f32 %v1989, %v1905
        %v2018 = vmul.f32 %v1989, %v1906
        %v2019 = vmul.f32 %v1993, %v1907
        %v2020 = vmul.f32 %v1993, %v1908
        %v2021 = vmul.f32 %v1997, %v1909
        %v2022 = vmul.f32 %v1997, %v1910
        %v2023 = vmul.f32 %v2001, %v1911
        %v2024 = vmul.f32 %v2001, %v1912
        %v2025 = vmul.f32 %v2005, %v1913
        %v2026 = vmul.f32 %v2005, %v1914
        %v2027 = vmul.f32 %v2009, %v1915
        %v2028 = vmul.f32 %v2009, %v1916
        %v2029 = vmul.f32 %v2013, %v1917
        %v2030 = vmul.f32 %v2013, %v1918
        %2047 = vrot.lane.b32.xlu0 %v2015, 127
        %v2048 = vpop.permute.xlu0 %2047
        %2049 = vrot.lane.b32.xlu0 %v2016, 127
        %v2050 = vpop.permute.xlu0 %2049
        %2051 = vrot.lane.b32.xlu0 %v2017, 127
        %v2052 = vpop.permute.xlu0 %2051
        %2053 = vrot.lane.b32.xlu0 %v2018, 127
        %v2054 = vpop.permute.xlu0 %2053
        %2055 = vrot.lane.b32.xlu0 %v2019, 127
        %v2056 = vpop.permute.xlu0 %2055
        %2057 = vrot.lane.b32.xlu0 %v2020, 127
        %v2058 = vpop.permute.xlu0 %2057
        %2059 = vrot.lane.b32.xlu0 %v2021, 127
        %v2060 = vpop.permute.xlu0 %2059
        %2061 = vrot.lane.b32.xlu0 %v2022, 127
        %v2062 = vpop.permute.xlu0 %2061
        %2063 = vrot.lane.b32.xlu0 %v2023, 127
        %v2064 = vpop.permute.xlu0 %2063
        %2065 = vrot.lane.b32.xlu0 %v2024, 127
        %v2066 = vpop.permute.xlu0 %2065
        %2067 = vrot.lane.b32.xlu0 %v2025, 127
        %v2068 = vpop.permute.xlu0 %2067
        %2069 = vrot.lane.b32.xlu0 %v2026, 127
        %v2070 = vpop.permute.xlu0 %2069
        %2071 = vrot.lane.b32.xlu0 %v2027, 127
        %v2072 = vpop.permute.xlu0 %2071
        %2073 = vrot.lane.b32.xlu0 %v2028, 127
        %v2074 = vpop.permute.xlu0 %2073
        %2075 = vrot.lane.b32.xlu0 %v2029, 127
        %v2076 = vpop.permute.xlu0 %2075
        %2077 = vrot.lane.b32.xlu0 %v2030, 127
        %v2078 = vpop.permute.xlu0 %2077
        %v2095 = vadd.f32 %v1967, %v2048
        %v2096 = vadd.f32 %v1968, %v2050
        %v2097 = vadd.f32 %v1969, %v2052
        %v2098 = vadd.f32 %v1970, %v2054
        %v2099 = vadd.f32 %v1971, %v2056
        %v2100 = vadd.f32 %v1972, %v2058
        %v2101 = vadd.f32 %v1973, %v2060
        %v2102 = vadd.f32 %v1974, %v2062
        %v2103 = vadd.f32 %v1975, %v2064
        %v2104 = vadd.f32 %v1976, %v2066
        %v2105 = vadd.f32 %v1977, %v2068
        %v2106 = vadd.f32 %v1978, %v2070
        %v2107 = vadd.f32 %v1979, %v2072
        %v2108 = vadd.f32 %v1980, %v2074
        %v2109 = vadd.f32 %v1981, %v2076
        %v2110 = vadd.f32 %v1982, %v2078
        %2111 = vset.pattern.permute.xlu0 14
        %2112 = vperm.xlu0 %2111, %v504
        %v2113 = vpop.permute.xlu0 %2112
        %2115 = vset.pattern.permute.xlu0 14
        %2116 = vperm.xlu0 %2115, %v508
        %v2117 = vpop.permute.xlu0 %2116
        %2119 = vset.pattern.permute.xlu0 14
        %2120 = vperm.xlu0 %2119, %v512
        %v2121 = vpop.permute.xlu0 %2120
        %2123 = vset.pattern.permute.xlu0 14
        %2124 = vperm.xlu0 %2123, %v516
        %v2125 = vpop.permute.xlu0 %2124
        %2127 = vset.pattern.permute.xlu0 14
        %2128 = vperm.xlu0 %2127, %v520
        %v2129 = vpop.permute.xlu0 %2128
        %2131 = vset.pattern.permute.xlu0 14
        %2132 = vperm.xlu0 %2131, %v524
        %v2133 = vpop.permute.xlu0 %2132
        %2135 = vset.pattern.permute.xlu0 14
        %2136 = vperm.xlu0 %2135, %v528
        %v2137 = vpop.permute.xlu0 %2136
        %2139 = vset.pattern.permute.xlu0 14
        %2140 = vperm.xlu0 %2139, %v532
        %v2141 = vpop.permute.xlu0 %2140
        %v2143 = vmul.f32 %v2113, %v1903
        %v2144 = vmul.f32 %v2113, %v1904
        %v2145 = vmul.f32 %v2117, %v1905
        %v2146 = vmul.f32 %v2117, %v1906
        %v2147 = vmul.f32 %v2121, %v1907
        %v2148 = vmul.f32 %v2121, %v1908
        %v2149 = vmul.f32 %v2125, %v1909
        %v2150 = vmul.f32 %v2125, %v1910
        %v2151 = vmul.f32 %v2129, %v1911
        %v2152 = vmul.f32 %v2129, %v1912
        %v2153 = vmul.f32 %v2133, %v1913
        %v2154 = vmul.f32 %v2133, %v1914
        %v2155 = vmul.f32 %v2137, %v1915
        %v2156 = vmul.f32 %v2137, %v1916
        %v2157 = vmul.f32 %v2141, %v1917
        %v2158 = vmul.f32 %v2141, %v1918
        %2175 = vrot.lane.b32.xlu0 %v2143, 126
        %v2176 = vpop.permute.xlu0 %2175
        %2177 = vrot.lane.b32.xlu0 %v2144, 126
        %v2178 = vpop.permute.xlu0 %2177
        %2179 = vrot.lane.b32.xlu0 %v2145, 126
        %v2180 = vpop.permute.xlu0 %2179
        %2181 = vrot.lane.b32.xlu0 %v2146, 126
        %v2182 = vpop.permute.xlu0 %2181
        %2183 = vrot.lane.b32.xlu0 %v2147, 126
        %v2184 = vpop.permute.xlu0 %2183
        %2185 = vrot.lane.b32.xlu0 %v2148, 126
        %v2186 = vpop.permute.xlu0 %2185
        %2187 = vrot.lane.b32.xlu0 %v2149, 126
        %v2188 = vpop.permute.xlu0 %2187
        %2189 = vrot.lane.b32.xlu0 %v2150, 126
        %v2190 = vpop.permute.xlu0 %2189
        %2191 = vrot.lane.b32.xlu0 %v2151, 126
        %v2192 = vpop.permute.xlu0 %2191
        %2193 = vrot.lane.b32.xlu0 %v2152, 126
        %v2194 = vpop.permute.xlu0 %2193
        %2195 = vrot.lane.b32.xlu0 %v2153, 126
        %v2196 = vpop.permute.xlu0 %2195
        %2197 = vrot.lane.b32.xlu0 %v2154, 126
        %v2198 = vpop.permute.xlu0 %2197
        %2199 = vrot.lane.b32.xlu0 %v2155, 126
        %v2200 = vpop.permute.xlu0 %2199
        %2201 = vrot.lane.b32.xlu0 %v2156, 126
        %v2202 = vpop.permute.xlu0 %2201
        %2203 = vrot.lane.b32.xlu0 %v2157, 126
        %v2204 = vpop.permute.xlu0 %2203
        %2205 = vrot.lane.b32.xlu0 %v2158, 126
        %v2206 = vpop.permute.xlu0 %2205
        %v2223 = vadd.f32 %v2095, %v2176
        %v2224 = vadd.f32 %v2096, %v2178
        %v2225 = vadd.f32 %v2097, %v2180
        %v2226 = vadd.f32 %v2098, %v2182
        %v2227 = vadd.f32 %v2099, %v2184
        %v2228 = vadd.f32 %v2100, %v2186
        %v2229 = vadd.f32 %v2101, %v2188
        %v2230 = vadd.f32 %v2102, %v2190
        %v2231 = vadd.f32 %v2103, %v2192
        %v2232 = vadd.f32 %v2104, %v2194
        %v2233 = vadd.f32 %v2105, %v2196
        %v2234 = vadd.f32 %v2106, %v2198
        %v2235 = vadd.f32 %v2107, %v2200
        %v2236 = vadd.f32 %v2108, %v2202
        %v2237 = vadd.f32 %v2109, %v2204
        %v2238 = vadd.f32 %v2110, %v2206
        %v2239 = vadd.f32 %v903, %v904
        %v2240 = vrot.slane %v2239, 4
        %v2241 = vadd.f32 %v2239, %v2240
        %v2242 = vrot.slane %v2241, 2
        %v2243 = vadd.f32 %v2241, %v2242
        %v2244 = vrot.slane %v2243, 1
        %v2245 = vadd.f32 %v2243, %v2244
        %v2246 = vadd.f32 %v905, %v906
        %v2247 = vrot.slane %v2246, 4
        %v2248 = vadd.f32 %v2246, %v2247
        %v2249 = vrot.slane %v2248, 2
        %v2250 = vadd.f32 %v2248, %v2249
        %v2251 = vrot.slane %v2250, 1
        %v2252 = vadd.f32 %v2250, %v2251
        %v2253 = vadd.f32 %v907, %v908
        %v2254 = vrot.slane %v2253, 4
        %v2255 = vadd.f32 %v2253, %v2254
        %v2256 = vrot.slane %v2255, 2
        %v2257 = vadd.f32 %v2255, %v2256
        %v2258 = vrot.slane %v2257, 1
        %v2259 = vadd.f32 %v2257, %v2258
        %v2260 = vadd.f32 %v909, %v910
        %v2261 = vrot.slane %v2260, 4
        %v2262 = vadd.f32 %v2260, %v2261
        %v2263 = vrot.slane %v2262, 2
        %v2264 = vadd.f32 %v2262, %v2263
        %v2265 = vrot.slane %v2264, 1
        %v2266 = vadd.f32 %v2264, %v2265
        %v2267 = vadd.f32 %v911, %v912
        %v2268 = vrot.slane %v2267, 4
        %v2269 = vadd.f32 %v2267, %v2268
        %v2270 = vrot.slane %v2269, 2
        %v2271 = vadd.f32 %v2269, %v2270
        %v2272 = vrot.slane %v2271, 1
        %v2273 = vadd.f32 %v2271, %v2272
        %v2274 = vadd.f32 %v913, %v914
        %v2275 = vrot.slane %v2274, 4
        %v2276 = vadd.f32 %v2274, %v2275
        %v2277 = vrot.slane %v2276, 2
        %v2278 = vadd.f32 %v2276, %v2277
        %v2279 = vrot.slane %v2278, 1
        %v2280 = vadd.f32 %v2278, %v2279
        %v2281 = vadd.f32 %v915, %v916
        %v2282 = vrot.slane %v2281, 4
        %v2283 = vadd.f32 %v2281, %v2282
        %v2284 = vrot.slane %v2283, 2
        %v2285 = vadd.f32 %v2283, %v2284
        %v2286 = vrot.slane %v2285, 1
        %v2287 = vadd.f32 %v2285, %v2286
        %v2288 = vadd.f32 %v917, %v918
        %v2289 = vrot.slane %v2288, 4
        %v2290 = vadd.f32 %v2288, %v2289
        %v2291 = vrot.slane %v2290, 2
        %v2292 = vadd.f32 %v2290, %v2291
        %v2293 = vrot.slane %v2292, 1
        %v2294 = vadd.f32 %v2292, %v2293
        %v2295 = vmul.f32 %v2245, %v902
        %v2296 = vmul.f32 %v2252, %v902
        %v2297 = vmul.f32 %v2259, %v902
        %v2298 = vmul.f32 %v2266, %v902
        %v2299 = vmul.f32 %v2273, %v902
        %v2300 = vmul.f32 %v2280, %v902
        %v2301 = vmul.f32 %v2287, %v902
        %v2302 = vmul.f32 %v2294, %v902
        %2303 = vset.pattern.permute.xlu0 21
        %2304 = vperm.xlu0 %2303, %v938
        %v2305 = vpop.permute.xlu0 %2304
        %2307 = vset.pattern.permute.xlu0 21
        %2308 = vperm.xlu0 %2307, %v942
        %v2309 = vpop.permute.xlu0 %2308
        %2311 = vset.pattern.permute.xlu0 21
        %2312 = vperm.xlu0 %2311, %v946
        %v2313 = vpop.permute.xlu0 %2312
        %2315 = vset.pattern.permute.xlu0 21
        %2316 = vperm.xlu0 %2315, %v950
        %v2317 = vpop.permute.xlu0 %2316
        %2319 = vset.pattern.permute.xlu0 21
        %2320 = vperm.xlu0 %2319, %v954
        %v2321 = vpop.permute.xlu0 %2320
        %2323 = vset.pattern.permute.xlu0 21
        %2324 = vperm.xlu0 %2323, %v958
        %v2325 = vpop.permute.xlu0 %2324
        %2327 = vset.pattern.permute.xlu0 21
        %2328 = vperm.xlu0 %2327, %v962
        %v2329 = vpop.permute.xlu0 %2328
        %2331 = vset.pattern.permute.xlu0 21
        %2332 = vperm.xlu0 %2331, %v966
        %v2333 = vpop.permute.xlu0 %2332
        %v2335 = vmul.f32 %v2223, %v2305
        %v2336 = vmul.f32 %v2224, %v2305
        %v2337 = vmul.f32 %v2225, %v2309
        %v2338 = vmul.f32 %v2226, %v2309
        %v2339 = vmul.f32 %v2227, %v2313
        %v2340 = vmul.f32 %v2228, %v2313
        %v2341 = vmul.f32 %v2229, %v2317
        %v2342 = vmul.f32 %v2230, %v2317
        %v2343 = vmul.f32 %v2231, %v2321
        %v2344 = vmul.f32 %v2232, %v2321
        %v2345 = vmul.f32 %v2233, %v2325
        %v2346 = vmul.f32 %v2234, %v2325
        %v2347 = vmul.f32 %v2235, %v2329
        %v2348 = vmul.f32 %v2236, %v2329
        %v2349 = vmul.f32 %v2237, %v2333
        %v2350 = vmul.f32 %v2238, %v2333
        %v2351 = vmul.f32 %v225, %v2295
        %v2352 = vmul.f32 %v226, %v2296
        %v2353 = vmul.f32 %v227, %v2297
        %v2354 = vmul.f32 %v228, %v2298
        %v2355 = vmul.f32 %v229, %v2299
        %v2356 = vmul.f32 %v230, %v2300
        %v2357 = vmul.f32 %v231, %v2301
        %v2358 = vmul.f32 %v232, %v2302
        %v2367 = vlaneseq
        %v2368 = vshrl.u32 %v2367, 7
        %v2369 = vsub.s32 0, %v2368
        %v2370 = vrot.slane %v2351, %v2369
        %v2371 = vlaneseq
        %v2372 = vshrl.u32 %v2371, 7
        %v2373 = vsub.s32 0, %v2372
        %v2374 = vrot.slane %v2352, %v2373
        %v2375 = vlaneseq
        %v2376 = vshrl.u32 %v2375, 7
        %v2377 = vsub.s32 0, %v2376
        %v2378 = vrot.slane %v2353, %v2377
        %v2379 = vlaneseq
        %v2380 = vshrl.u32 %v2379, 7
        %v2381 = vsub.s32 0, %v2380
        %v2382 = vrot.slane %v2354, %v2381
        %v2383 = vlaneseq
        %v2384 = vshrl.u32 %v2383, 7
        %v2385 = vsub.s32 0, %v2384
        %v2386 = vrot.slane %v2355, %v2385
        %v2387 = vlaneseq
        %v2388 = vshrl.u32 %v2387, 7
        %v2389 = vsub.s32 0, %v2388
        %v2390 = vrot.slane %v2356, %v2389
        %v2391 = vlaneseq
        %v2392 = vshrl.u32 %v2391, 7
        %v2393 = vsub.s32 0, %v2392
        %v2394 = vrot.slane %v2357, %v2393
        %v2395 = vlaneseq
        %v2396 = vshrl.u32 %v2395, 7
        %v2397 = vsub.s32 0, %v2396
        %v2398 = vrot.slane %v2358, %v2397
        %2399 = vset.pattern.permute.xlu0 21
        %2400 = vperm.xlu0 %2399, %v2370
        %v2401 = vpop.permute.xlu0 %2400
        %2403 = vset.pattern.permute.xlu0 21
        %2404 = vperm.xlu0 %2403, %v2374
        %v2405 = vpop.permute.xlu0 %2404
        %2407 = vset.pattern.permute.xlu0 21
        %2408 = vperm.xlu0 %2407, %v2378
        %v2409 = vpop.permute.xlu0 %2408
        %2411 = vset.pattern.permute.xlu0 21
        %2412 = vperm.xlu0 %2411, %v2382
        %v2413 = vpop.permute.xlu0 %2412
        %2415 = vset.pattern.permute.xlu0 21
        %2416 = vperm.xlu0 %2415, %v2386
        %v2417 = vpop.permute.xlu0 %2416
        %2419 = vset.pattern.permute.xlu0 21
        %2420 = vperm.xlu0 %2419, %v2390
        %v2421 = vpop.permute.xlu0 %2420
        %2423 = vset.pattern.permute.xlu0 21
        %2424 = vperm.xlu0 %2423, %v2394
        %v2425 = vpop.permute.xlu0 %2424
        %2427 = vset.pattern.permute.xlu0 21
        %2428 = vperm.xlu0 %2427, %v2398
        %v2429 = vpop.permute.xlu0 %2428
        %v2431 = vsub.f32 %v2335, %v2401
        %v2432 = vsub.f32 %v2336, %v2401
        %v2433 = vsub.f32 %v2337, %v2405
        %v2434 = vsub.f32 %v2338, %v2405
        %v2435 = vsub.f32 %v2339, %v2409
        %v2436 = vsub.f32 %v2340, %v2409
        %v2437 = vsub.f32 %v2341, %v2413
        %v2438 = vsub.f32 %v2342, %v2413
        %v2439 = vsub.f32 %v2343, %v2417
        %v2440 = vsub.f32 %v2344, %v2417
        %v2441 = vsub.f32 %v2345, %v2421
        %v2442 = vsub.f32 %v2346, %v2421
        %v2443 = vsub.f32 %v2347, %v2425
        %v2444 = vsub.f32 %v2348, %v2425
        %v2445 = vsub.f32 %v2349, %v2429
        %v2446 = vsub.f32 %v2350, %v2429
        %2447 = vset.pattern.permute.xlu0 22
        %2448 = vperm.xlu0 %2447, %v504
        %v2449 = vpop.permute.xlu0 %2448
        %2451 = vset.pattern.permute.xlu0 22
        %2452 = vperm.xlu0 %2451, %v508
        %v2453 = vpop.permute.xlu0 %2452
        %2455 = vset.pattern.permute.xlu0 22
        %2456 = vperm.xlu0 %2455, %v512
        %v2457 = vpop.permute.xlu0 %2456
        %2459 = vset.pattern.permute.xlu0 22
        %2460 = vperm.xlu0 %2459, %v516
        %v2461 = vpop.permute.xlu0 %2460
        %2463 = vset.pattern.permute.xlu0 22
        %2464 = vperm.xlu0 %2463, %v520
        %v2465 = vpop.permute.xlu0 %2464
        %2467 = vset.pattern.permute.xlu0 22
        %2468 = vperm.xlu0 %2467, %v524
        %v2469 = vpop.permute.xlu0 %2468
        %2471 = vset.pattern.permute.xlu0 22
        %2472 = vperm.xlu0 %2471, %v528
        %v2473 = vpop.permute.xlu0 %2472
        %2475 = vset.pattern.permute.xlu0 22
        %2476 = vperm.xlu0 %2475, %v532
        %v2477 = vpop.permute.xlu0 %2476
        %v2479 = vmul.f32 %v2431, %v2449
        %v2480 = vmul.f32 %v2432, %v2449
        %v2481 = vmul.f32 %v2433, %v2453
        %v2482 = vmul.f32 %v2434, %v2453
        %v2483 = vmul.f32 %v2435, %v2457
        %v2484 = vmul.f32 %v2436, %v2457
        %v2485 = vmul.f32 %v2437, %v2461
        %v2486 = vmul.f32 %v2438, %v2461
        %v2487 = vmul.f32 %v2439, %v2465
        %v2488 = vmul.f32 %v2440, %v2465
        %v2489 = vmul.f32 %v2441, %v2469
        %v2490 = vmul.f32 %v2442, %v2469
        %v2491 = vmul.f32 %v2443, %v2473
        %v2492 = vmul.f32 %v2444, %v2473
        %v2493 = vmul.f32 %v2445, %v2477
        %v2494 = vmul.f32 %v2446, %v2477
        %2495 = vset.pattern.permute.xlu0 23
        %2496 = vperm.xlu0 %2495, %v938
        %v2497 = vpop.permute.xlu0 %2496
        %2499 = vset.pattern.permute.xlu0 23
        %2500 = vperm.xlu0 %2499, %v942
        %v2501 = vpop.permute.xlu0 %2500
        %2503 = vset.pattern.permute.xlu0 23
        %2504 = vperm.xlu0 %2503, %v946
        %v2505 = vpop.permute.xlu0 %2504
        %2507 = vset.pattern.permute.xlu0 23
        %2508 = vperm.xlu0 %2507, %v950
        %v2509 = vpop.permute.xlu0 %2508
        %2511 = vset.pattern.permute.xlu0 23
        %2512 = vperm.xlu0 %2511, %v954
        %v2513 = vpop.permute.xlu0 %2512
        %2515 = vset.pattern.permute.xlu0 23
        %2516 = vperm.xlu0 %2515, %v958
        %v2517 = vpop.permute.xlu0 %2516
        %2519 = vset.pattern.permute.xlu0 23
        %2520 = vperm.xlu0 %2519, %v962
        %v2521 = vpop.permute.xlu0 %2520
        %2523 = vset.pattern.permute.xlu0 23
        %2524 = vperm.xlu0 %2523, %v966
        %v2525 = vpop.permute.xlu0 %2524
        %v2527 = vmul.f32 %v209, %v2497
        %v2528 = vmul.f32 %v210, %v2497
        %v2529 = vmul.f32 %v211, %v2501
        %v2530 = vmul.f32 %v212, %v2501
        %v2531 = vmul.f32 %v213, %v2505
        %v2532 = vmul.f32 %v214, %v2505
        %v2533 = vmul.f32 %v215, %v2509
        %v2534 = vmul.f32 %v216, %v2509
        %v2535 = vmul.f32 %v217, %v2513
        %v2536 = vmul.f32 %v218, %v2513
        %v2537 = vmul.f32 %v219, %v2517
        %v2538 = vmul.f32 %v220, %v2517
        %v2539 = vmul.f32 %v221, %v2521
        %v2540 = vmul.f32 %v222, %v2521
        %v2541 = vmul.f32 %v223, %v2525
        %v2542 = vmul.f32 %v224, %v2525
        %v2543 = vadd.f32 %v2479, %v2527
        %v2544 = vadd.f32 %v2480, %v2528
        %v2545 = vadd.f32 %v2481, %v2529
        %v2546 = vadd.f32 %v2482, %v2530
        %v2547 = vadd.f32 %v2483, %v2531
        %v2548 = vadd.f32 %v2484, %v2532
        %v2549 = vadd.f32 %v2485, %v2533
        %v2550 = vadd.f32 %v2486, %v2534
        %v2551 = vadd.f32 %v2487, %v2535
        %v2552 = vadd.f32 %v2488, %v2536
        %v2553 = vadd.f32 %v2489, %v2537
        %v2554 = vadd.f32 %v2490, %v2538
        %v2555 = vadd.f32 %v2491, %v2539
        %v2556 = vadd.f32 %v2492, %v2540
        %v2557 = vadd.f32 %v2493, %v2541
        %v2558 = vadd.f32 %v2494, %v2542
        %2559 = vst.msk [vmem:[#allocation3 + $0x1] sm:$0xff] %vm853, %v1231
        %2560 = vst.msk [vmem:[#allocation3 + $0x9] sm:$0xff] %vm853, %v1232
        %2561 = vst.msk [vmem:[#allocation3 + $0x19] sm:$0xff] %vm853, %v1233
        %2562 = vst.msk [vmem:[#allocation3 + $0x21] sm:$0xff] %vm853, %v1234
        %2563 = vst.msk [vmem:[#allocation3 + $0x31] sm:$0xff] %vm853, %v1235
        %2564 = vst.msk [vmem:[#allocation3 + $0x39] sm:$0xff] %vm853, %v1236
        %2565 = vst.msk [vmem:[#allocation3 + $0x49] sm:$0xff] %vm853, %v1237
        %2566 = vst.msk [vmem:[#allocation3 + $0x51] sm:$0xff] %vm853, %v1238
        %2567 = vst.msk [vmem:[#allocation3 + $0x61] sm:$0xff] %vm853, %v1239
        %2568 = vst.msk [vmem:[#allocation3 + $0x69] sm:$0xff] %vm853, %v1240
        %2569 = vst.msk [vmem:[#allocation3 + $0x79] sm:$0xff] %vm853, %v1241
        %2570 = vst.msk [vmem:[#allocation3 + $0x81] sm:$0xff] %vm853, %v1242
        %2571 = vst.msk [vmem:[#allocation3 + $0x91] sm:$0xff] %vm853, %v1243
        %2572 = vst.msk [vmem:[#allocation3 + $0x99] sm:$0xff] %vm853, %v1244
        %2573 = vst.msk [vmem:[#allocation3 + $0xa9] sm:$0xff] %vm853, %v1245
        %2574 = vst.msk [vmem:[#allocation3 + $0xb1] sm:$0xff] %vm853, %v1246
        %vm2575 = vcmask 123905
        %2576 = vst.msk [vmem:[#allocation3 - $0x1] sm:$0x2] %vm2575, %v1231
        %2577 = vst.msk [vmem:[#allocation3 + $0x17] sm:$0x2] %vm2575, %v1233
        %2578 = vst.msk [vmem:[#allocation3 + $0x2f] sm:$0x2] %vm2575, %v1235
        %2579 = vst.msk [vmem:[#allocation3 + $0x47] sm:$0x2] %vm2575, %v1237
        %2580 = vst.msk [vmem:[#allocation3 + $0x5f] sm:$0x2] %vm2575, %v1239
        %2581 = vst.msk [vmem:[#allocation3 + $0x77] sm:$0x2] %vm2575, %v1241
        %2582 = vst.msk [vmem:[#allocation3 + $0x8f] sm:$0x2] %vm2575, %v1243
        %2583 = vst.msk [vmem:[#allocation3 + $0xa7] sm:$0x2] %vm2575, %v1245
        %vm2584 = vcmask 129030
        %2585 = vst.msk [vmem:[#allocation3 + $0xb] sm:$0x40] %vm2584, %v1232
        %2586 = vst.msk [vmem:[#allocation3 + $0x23] sm:$0x40] %vm2584, %v1234
        %2587 = vst.msk [vmem:[#allocation3 + $0x3b] sm:$0x40] %vm2584, %v1236
        %2588 = vst.msk [vmem:[#allocation3 + $0x53] sm:$0x40] %vm2584, %v1238
        %2589 = vst.msk [vmem:[#allocation3 + $0x6b] sm:$0x40] %vm2584, %v1240
        %2590 = vst.msk [vmem:[#allocation3 + $0x83] sm:$0x40] %vm2584, %v1242
        %2591 = vst.msk [vmem:[#allocation3 + $0x9b] sm:$0x40] %vm2584, %v1244
        %2592 = vst.msk [vmem:[#allocation3 + $0xb3] sm:$0x40] %vm2584, %v1246
        %v2593 = vld [vmem:[#allocation3] sm:$0xff]
        %v2594 = vld [vmem:[#allocation3 + $0x8] sm:$0xff]
        %v2595 = vld [vmem:[#allocation3 + $0x18] sm:$0xff]
        %v2596 = vld [vmem:[#allocation3 + $0x20] sm:$0xff]
        %v2597 = vld [vmem:[#allocation3 + $0x30] sm:$0xff]
        %v2598 = vld [vmem:[#allocation3 + $0x38] sm:$0xff]
        %v2599 = vld [vmem:[#allocation3 + $0x48] sm:$0xff]
        %v2600 = vld [vmem:[#allocation3 + $0x50] sm:$0xff]
        %v2601 = vld [vmem:[#allocation3 + $0x60] sm:$0xff]
        %v2602 = vld [vmem:[#allocation3 + $0x68] sm:$0xff]
        %v2603 = vld [vmem:[#allocation3 + $0x78] sm:$0xff]
        %v2604 = vld [vmem:[#allocation3 + $0x80] sm:$0xff]
        %v2605 = vld [vmem:[#allocation3 + $0x90] sm:$0xff]
        %v2606 = vld [vmem:[#allocation3 + $0x98] sm:$0xff]
        %v2607 = vld [vmem:[#allocation3 + $0xa8] sm:$0xff]
        %v2608 = vld [vmem:[#allocation3 + $0xb0] sm:$0xff]
        %2609 = vset.pattern.permute.xlu0 3
        %2610 = vperm.xlu0 %2609, %v504
        %v2611 = vpop.permute.xlu0 %2610
        %2613 = vset.pattern.permute.xlu0 3
        %2614 = vperm.xlu0 %2613, %v508
        %v2615 = vpop.permute.xlu0 %2614
        %2617 = vset.pattern.permute.xlu0 3
        %2618 = vperm.xlu0 %2617, %v512
        %v2619 = vpop.permute.xlu0 %2618
        %2621 = vset.pattern.permute.xlu0 3
        %2622 = vperm.xlu0 %2621, %v516
        %v2623 = vpop.permute.xlu0 %2622
        %2625 = vset.pattern.permute.xlu0 3
        %2626 = vperm.xlu0 %2625, %v520
        %v2627 = vpop.permute.xlu0 %2626
        %2629 = vset.pattern.permute.xlu0 3
        %2630 = vperm.xlu0 %2629, %v524
        %v2631 = vpop.permute.xlu0 %2630
        %2633 = vset.pattern.permute.xlu0 3
        %2634 = vperm.xlu0 %2633, %v528
        %v2635 = vpop.permute.xlu0 %2634
        %2637 = vset.pattern.permute.xlu0 3
        %2638 = vperm.xlu0 %2637, %v532
        %v2639 = vpop.permute.xlu0 %2638
        %v2641 = vmul.f32 %v2611, %v2593
        %v2642 = vmul.f32 %v2611, %v2594
        %v2643 = vmul.f32 %v2615, %v2595
        %v2644 = vmul.f32 %v2615, %v2596
        %v2645 = vmul.f32 %v2619, %v2597
        %v2646 = vmul.f32 %v2619, %v2598
        %v2647 = vmul.f32 %v2623, %v2599
        %v2648 = vmul.f32 %v2623, %v2600
        %v2649 = vmul.f32 %v2627, %v2601
        %v2650 = vmul.f32 %v2627, %v2602
        %v2651 = vmul.f32 %v2631, %v2603
        %v2652 = vmul.f32 %v2631, %v2604
        %v2653 = vmul.f32 %v2635, %v2605
        %v2654 = vmul.f32 %v2635, %v2606
        %v2655 = vmul.f32 %v2639, %v2607
        %v2656 = vmul.f32 %v2639, %v2608
        %v2657 = vadd.f32 %v2641, 0.0
        %v2658 = vadd.f32 %v2642, 0.0
        %v2659 = vadd.f32 %v2643, 0.0
        %v2660 = vadd.f32 %v2644, 0.0
        %v2661 = vadd.f32 %v2645, 0.0
        %v2662 = vadd.f32 %v2646, 0.0
        %v2663 = vadd.f32 %v2647, 0.0
        %v2664 = vadd.f32 %v2648, 0.0
        %v2665 = vadd.f32 %v2649, 0.0
        %v2666 = vadd.f32 %v2650, 0.0
        %v2667 = vadd.f32 %v2651, 0.0
        %v2668 = vadd.f32 %v2652, 0.0
        %v2669 = vadd.f32 %v2653, 0.0
        %v2670 = vadd.f32 %v2654, 0.0
        %v2671 = vadd.f32 %v2655, 0.0
        %v2672 = vadd.f32 %v2656, 0.0
        %v2673 = vld [vmem:[#allocation3 + $0x1] sm:$0xff]
        %v2674 = vld [vmem:[#allocation3 + $0x9] sm:$0xff]
        %v2675 = vld [vmem:[#allocation3 + $0x19] sm:$0xff]
        %v2676 = vld [vmem:[#allocation3 + $0x21] sm:$0xff]
        %v2677 = vld [vmem:[#allocation3 + $0x31] sm:$0xff]
        %v2678 = vld [vmem:[#allocation3 + $0x39] sm:$0xff]
        %v2679 = vld [vmem:[#allocation3 + $0x49] sm:$0xff]
        %v2680 = vld [vmem:[#allocation3 + $0x51] sm:$0xff]
        %v2681 = vld [vmem:[#allocation3 + $0x61] sm:$0xff]
        %v2682 = vld [vmem:[#allocation3 + $0x69] sm:$0xff]
        %v2683 = vld [vmem:[#allocation3 + $0x79] sm:$0xff]
        %v2684 = vld [vmem:[#allocation3 + $0x81] sm:$0xff]
        %v2685 = vld [vmem:[#allocation3 + $0x91] sm:$0xff]
        %v2686 = vld [vmem:[#allocation3 + $0x99] sm:$0xff]
        %v2687 = vld [vmem:[#allocation3 + $0xa9] sm:$0xff]
        %v2688 = vld [vmem:[#allocation3 + $0xb1] sm:$0xff]
        %2689 = vset.pattern.permute.xlu0 4
        %2690 = vperm.xlu0 %2689, %v504
        %v2691 = vpop.permute.xlu0 %2690
        %2693 = vset.pattern.permute.xlu0 4
        %2694 = vperm.xlu0 %2693, %v508
        %v2695 = vpop.permute.xlu0 %2694
        %2697 = vset.pattern.permute.xlu0 4
        %2698 = vperm.xlu0 %2697, %v512
        %v2699 = vpop.permute.xlu0 %2698
        %2701 = vset.pattern.permute.xlu0 4
        %2702 = vperm.xlu0 %2701, %v516
        %v2703 = vpop.permute.xlu0 %2702
        %2705 = vset.pattern.permute.xlu0 4
        %2706 = vperm.xlu0 %2705, %v520
        %v2707 = vpop.permute.xlu0 %2706
        %2709 = vset.pattern.permute.xlu0 4
        %2710 = vperm.xlu0 %2709, %v524
        %v2711 = vpop.permute.xlu0 %2710
        %2713 = vset.pattern.permute.xlu0 4
        %2714 = vperm.xlu0 %2713, %v528
        %v2715 = vpop.permute.xlu0 %2714
        %2717 = vset.pattern.permute.xlu0 4
        %2718 = vperm.xlu0 %2717, %v532
        %v2719 = vpop.permute.xlu0 %2718
        %v2721 = vmul.f32 %v2691, %v2673
        %v2722 = vmul.f32 %v2691, %v2674
        %v2723 = vmul.f32 %v2695, %v2675
        %v2724 = vmul.f32 %v2695, %v2676
        %v2725 = vmul.f32 %v2699, %v2677
        %v2726 = vmul.f32 %v2699, %v2678
        %v2727 = vmul.f32 %v2703, %v2679
        %v2728 = vmul.f32 %v2703, %v2680
        %v2729 = vmul.f32 %v2707, %v2681
        %v2730 = vmul.f32 %v2707, %v2682
        %v2731 = vmul.f32 %v2711, %v2683
        %v2732 = vmul.f32 %v2711, %v2684
        %v2733 = vmul.f32 %v2715, %v2685
        %v2734 = vmul.f32 %v2715, %v2686
        %v2735 = vmul.f32 %v2719, %v2687
        %v2736 = vmul.f32 %v2719, %v2688
        %v2737 = vadd.f32 %v2657, %v2721
        %v2738 = vadd.f32 %v2658, %v2722
        %v2739 = vadd.f32 %v2659, %v2723
        %v2740 = vadd.f32 %v2660, %v2724
        %v2741 = vadd.f32 %v2661, %v2725
        %v2742 = vadd.f32 %v2662, %v2726
        %v2743 = vadd.f32 %v2663, %v2727
        %v2744 = vadd.f32 %v2664, %v2728
        %v2745 = vadd.f32 %v2665, %v2729
        %v2746 = vadd.f32 %v2666, %v2730
        %v2747 = vadd.f32 %v2667, %v2731
        %v2748 = vadd.f32 %v2668, %v2732
        %v2749 = vadd.f32 %v2669, %v2733
        %v2750 = vadd.f32 %v2670, %v2734
        %v2751 = vadd.f32 %v2671, %v2735
        %v2752 = vadd.f32 %v2672, %v2736
        %v2753 = vld [vmem:[#allocation3 + $0x2] sm:$0xff]
        %v2754 = vld [vmem:[#allocation3 + $0xa] sm:$0xff]
        %v2755 = vld [vmem:[#allocation3 + $0x1a] sm:$0xff]
        %v2756 = vld [vmem:[#allocation3 + $0x22] sm:$0xff]
        %v2757 = vld [vmem:[#allocation3 + $0x32] sm:$0xff]
        %v2758 = vld [vmem:[#allocation3 + $0x3a] sm:$0xff]
        %v2759 = vld [vmem:[#allocation3 + $0x4a] sm:$0xff]
        %v2760 = vld [vmem:[#allocation3 + $0x52] sm:$0xff]
        %v2761 = vld [vmem:[#allocation3 + $0x62] sm:$0xff]
        %v2762 = vld [vmem:[#allocation3 + $0x6a] sm:$0xff]
        %v2763 = vld [vmem:[#allocation3 + $0x7a] sm:$0xff]
        %v2764 = vld [vmem:[#allocation3 + $0x82] sm:$0xff]
        %v2765 = vld [vmem:[#allocation3 + $0x92] sm:$0xff]
        %v2766 = vld [vmem:[#allocation3 + $0x9a] sm:$0xff]
        %v2767 = vld [vmem:[#allocation3 + $0xaa] sm:$0xff]
        %v2768 = vld [vmem:[#allocation3 + $0xb2] sm:$0xff]
        %2769 = vset.pattern.permute.xlu0 5
        %2770 = vperm.xlu0 %2769, %v504
        %v2771 = vpop.permute.xlu0 %2770
        %2773 = vset.pattern.permute.xlu0 5
        %2774 = vperm.xlu0 %2773, %v508
        %v2775 = vpop.permute.xlu0 %2774
        %2777 = vset.pattern.permute.xlu0 5
        %2778 = vperm.xlu0 %2777, %v512
        %v2779 = vpop.permute.xlu0 %2778
        %2781 = vset.pattern.permute.xlu0 5
        %2782 = vperm.xlu0 %2781, %v516
        %v2783 = vpop.permute.xlu0 %2782
        %2785 = vset.pattern.permute.xlu0 5
        %2786 = vperm.xlu0 %2785, %v520
        %v2787 = vpop.permute.xlu0 %2786
        %2789 = vset.pattern.permute.xlu0 5
        %2790 = vperm.xlu0 %2789, %v524
        %v2791 = vpop.permute.xlu0 %2790
        %2793 = vset.pattern.permute.xlu0 5
        %2794 = vperm.xlu0 %2793, %v528
        %v2795 = vpop.permute.xlu0 %2794
        %2797 = vset.pattern.permute.xlu0 5
        %2798 = vperm.xlu0 %2797, %v532
        %v2799 = vpop.permute.xlu0 %2798
        %v2801 = vmul.f32 %v2771, %v2753
        %v2802 = vmul.f32 %v2771, %v2754
        %v2803 = vmul.f32 %v2775, %v2755
        %v2804 = vmul.f32 %v2775, %v2756
        %v2805 = vmul.f32 %v2779, %v2757
        %v2806 = vmul.f32 %v2779, %v2758
        %v2807 = vmul.f32 %v2783, %v2759
        %v2808 = vmul.f32 %v2783, %v2760
        %v2809 = vmul.f32 %v2787, %v2761
        %v2810 = vmul.f32 %v2787, %v2762
        %v2811 = vmul.f32 %v2791, %v2763
        %v2812 = vmul.f32 %v2791, %v2764
        %v2813 = vmul.f32 %v2795, %v2765
        %v2814 = vmul.f32 %v2795, %v2766
        %v2815 = vmul.f32 %v2799, %v2767
        %v2816 = vmul.f32 %v2799, %v2768
        %v2817 = vadd.f32 %v2737, %v2801
        %v2818 = vadd.f32 %v2738, %v2802
        %v2819 = vadd.f32 %v2739, %v2803
        %v2820 = vadd.f32 %v2740, %v2804
        %v2821 = vadd.f32 %v2741, %v2805
        %v2822 = vadd.f32 %v2742, %v2806
        %v2823 = vadd.f32 %v2743, %v2807
        %v2824 = vadd.f32 %v2744, %v2808
        %v2825 = vadd.f32 %v2745, %v2809
        %v2826 = vadd.f32 %v2746, %v2810
        %v2827 = vadd.f32 %v2747, %v2811
        %v2828 = vadd.f32 %v2748, %v2812
        %v2829 = vadd.f32 %v2749, %v2813
        %v2830 = vadd.f32 %v2750, %v2814
        %v2831 = vadd.f32 %v2751, %v2815
        %v2832 = vadd.f32 %v2752, %v2816
        %v2833 = vsel %vm853, %v1231, 0.0
        %v2834 = vsel %vm853, %v1232, 0.0
        %v2835 = vadd.f32 %v2833, %v2834
        %v2836 = vrot.slane %v2835, 4
        %v2837 = vadd.f32 %v2835, %v2836
        %v2838 = vrot.slane %v2837, 2
        %v2839 = vadd.f32 %v2837, %v2838
        %v2840 = vrot.slane %v2839, 1
        %v2841 = vadd.f32 %v2839, %v2840
        %v2842 = vsel %vm853, %v1233, 0.0
        %v2843 = vsel %vm853, %v1234, 0.0
        %v2844 = vadd.f32 %v2842, %v2843
        %v2845 = vrot.slane %v2844, 4
        %v2846 = vadd.f32 %v2844, %v2845
        %v2847 = vrot.slane %v2846, 2
        %v2848 = vadd.f32 %v2846, %v2847
        %v2849 = vrot.slane %v2848, 1
        %v2850 = vadd.f32 %v2848, %v2849
        %v2851 = vsel %vm853, %v1235, 0.0
        %v2852 = vsel %vm853, %v1236, 0.0
        %v2853 = vadd.f32 %v2851, %v2852
        %v2854 = vrot.slane %v2853, 4
        %v2855 = vadd.f32 %v2853, %v2854
        %v2856 = vrot.slane %v2855, 2
        %v2857 = vadd.f32 %v2855, %v2856
        %v2858 = vrot.slane %v2857, 1
        %v2859 = vadd.f32 %v2857, %v2858
        %v2860 = vsel %vm853, %v1237, 0.0
        %v2861 = vsel %vm853, %v1238, 0.0
        %v2862 = vadd.f32 %v2860, %v2861
        %v2863 = vrot.slane %v2862, 4
        %v2864 = vadd.f32 %v2862, %v2863
        %v2865 = vrot.slane %v2864, 2
        %v2866 = vadd.f32 %v2864, %v2865
        %v2867 = vrot.slane %v2866, 1
        %v2868 = vadd.f32 %v2866, %v2867
        %v2869 = vsel %vm853, %v1239, 0.0
        %v2870 = vsel %vm853, %v1240, 0.0
        %v2871 = vadd.f32 %v2869, %v2870
        %v2872 = vrot.slane %v2871, 4
        %v2873 = vadd.f32 %v2871, %v2872
        %v2874 = vrot.slane %v2873, 2
        %v2875 = vadd.f32 %v2873, %v2874
        %v2876 = vrot.slane %v2875, 1
        %v2877 = vadd.f32 %v2875, %v2876
        %v2878 = vsel %vm853, %v1241, 0.0
        %v2879 = vsel %vm853, %v1242, 0.0
        %v2880 = vadd.f32 %v2878, %v2879
        %v2881 = vrot.slane %v2880, 4
        %v2882 = vadd.f32 %v2880, %v2881
        %v2883 = vrot.slane %v2882, 2
        %v2884 = vadd.f32 %v2882, %v2883
        %v2885 = vrot.slane %v2884, 1
        %v2886 = vadd.f32 %v2884, %v2885
        %v2887 = vsel %vm853, %v1243, 0.0
        %v2888 = vsel %vm853, %v1244, 0.0
        %v2889 = vadd.f32 %v2887, %v2888
        %v2890 = vrot.slane %v2889, 4
        %v2891 = vadd.f32 %v2889, %v2890
        %v2892 = vrot.slane %v2891, 2
        %v2893 = vadd.f32 %v2891, %v2892
        %v2894 = vrot.slane %v2893, 1
        %v2895 = vadd.f32 %v2893, %v2894
        %v2896 = vsel %vm853, %v1245, 0.0
        %v2897 = vsel %vm853, %v1246, 0.0
        %v2898 = vadd.f32 %v2896, %v2897
        %v2899 = vrot.slane %v2898, 4
        %v2900 = vadd.f32 %v2898, %v2899
        %v2901 = vrot.slane %v2900, 2
        %v2902 = vadd.f32 %v2900, %v2901
        %v2903 = vrot.slane %v2902, 1
        %v2904 = vadd.f32 %v2902, %v2903
        %v2905 = vmul.f32 %v2841, %v902
        %v2906 = vmul.f32 %v2850, %v902
        %v2907 = vmul.f32 %v2859, %v902
        %v2908 = vmul.f32 %v2868, %v902
        %v2909 = vmul.f32 %v2877, %v902
        %v2910 = vmul.f32 %v2886, %v902
        %v2911 = vmul.f32 %v2895, %v902
        %v2912 = vmul.f32 %v2904, %v902
        %2913 = vset.pattern.permute.xlu0 18
        %2914 = vperm.xlu0 %2913, %v938
        %v2915 = vpop.permute.xlu0 %2914
        %2917 = vset.pattern.permute.xlu0 18
        %2918 = vperm.xlu0 %2917, %v942
        %v2919 = vpop.permute.xlu0 %2918
        %2921 = vset.pattern.permute.xlu0 18
        %2922 = vperm.xlu0 %2921, %v946
        %v2923 = vpop.permute.xlu0 %2922
        %2925 = vset.pattern.permute.xlu0 18
        %2926 = vperm.xlu0 %2925, %v950
        %v2927 = vpop.permute.xlu0 %2926
        %2929 = vset.pattern.permute.xlu0 18
        %2930 = vperm.xlu0 %2929, %v954
        %v2931 = vpop.permute.xlu0 %2930
        %2933 = vset.pattern.permute.xlu0 18
        %2934 = vperm.xlu0 %2933, %v958
        %v2935 = vpop.permute.xlu0 %2934
        %2937 = vset.pattern.permute.xlu0 18
        %2938 = vperm.xlu0 %2937, %v962
        %v2939 = vpop.permute.xlu0 %2938
        %2941 = vset.pattern.permute.xlu0 18
        %2942 = vperm.xlu0 %2941, %v966
        %v2943 = vpop.permute.xlu0 %2942
        %v2945 = vmul.f32 %v2817, %v2915
        %v2946 = vmul.f32 %v2818, %v2915
        %v2947 = vmul.f32 %v2819, %v2919
        %v2948 = vmul.f32 %v2820, %v2919
        %v2949 = vmul.f32 %v2821, %v2923
        %v2950 = vmul.f32 %v2822, %v2923
        %v2951 = vmul.f32 %v2823, %v2927
        %v2952 = vmul.f32 %v2824, %v2927
        %v2953 = vmul.f32 %v2825, %v2931
        %v2954 = vmul.f32 %v2826, %v2931
        %v2955 = vmul.f32 %v2827, %v2935
        %v2956 = vmul.f32 %v2828, %v2935
        %v2957 = vmul.f32 %v2829, %v2939
        %v2958 = vmul.f32 %v2830, %v2939
        %v2959 = vmul.f32 %v2831, %v2943
        %v2960 = vmul.f32 %v2832, %v2943
        %2961 = vset.pattern.permute.xlu0 18
        %2962 = vperm.xlu0 %2961, %v225
        %v2963 = vpop.permute.xlu0 %2962
        %v2965 = vlaneseq
        %v2966 = vshrl.u32 %v2965, 7
        %v2967 = vsub.s32 0, %v2966
        %v2968 = vrot.slane %v2963, %v2967
        %2969 = vset.pattern.permute.xlu0 18
        %2970 = vperm.xlu0 %2969, %v226
        %v2971 = vpop.permute.xlu0 %2970
        %v2973 = vlaneseq
        %v2974 = vshrl.u32 %v2973, 7
        %v2975 = vsub.s32 0, %v2974
        %v2976 = vrot.slane %v2971, %v2975
        %2977 = vset.pattern.permute.xlu0 18
        %2978 = vperm.xlu0 %2977, %v227
        %v2979 = vpop.permute.xlu0 %2978
        %v2981 = vlaneseq
        %v2982 = vshrl.u32 %v2981, 7
        %v2983 = vsub.s32 0, %v2982
        %v2984 = vrot.slane %v2979, %v2983
        %2985 = vset.pattern.permute.xlu0 18
        %2986 = vperm.xlu0 %2985, %v228
        %v2987 = vpop.permute.xlu0 %2986
        %v2989 = vlaneseq
        %v2990 = vshrl.u32 %v2989, 7
        %v2991 = vsub.s32 0, %v2990
        %v2992 = vrot.slane %v2987, %v2991
        %2993 = vset.pattern.permute.xlu0 18
        %2994 = vperm.xlu0 %2993, %v229
        %v2995 = vpop.permute.xlu0 %2994
        %v2997 = vlaneseq
        %v2998 = vshrl.u32 %v2997, 7
        %v2999 = vsub.s32 0, %v2998
        %v3000 = vrot.slane %v2995, %v2999
        %3001 = vset.pattern.permute.xlu0 18
        %3002 = vperm.xlu0 %3001, %v230
        %v3003 = vpop.permute.xlu0 %3002
        %v3005 = vlaneseq
        %v3006 = vshrl.u32 %v3005, 7
        %v3007 = vsub.s32 0, %v3006
        %v3008 = vrot.slane %v3003, %v3007
        %3009 = vset.pattern.permute.xlu0 18
        %3010 = vperm.xlu0 %3009, %v231
        %v3011 = vpop.permute.xlu0 %3010
        %v3013 = vlaneseq
        %v3014 = vshrl.u32 %v3013, 7
        %v3015 = vsub.s32 0, %v3014
        %v3016 = vrot.slane %v3011, %v3015
        %3017 = vset.pattern.permute.xlu0 18
        %3018 = vperm.xlu0 %3017, %v232
        %v3019 = vpop.permute.xlu0 %3018
        %v3021 = vlaneseq
        %v3022 = vshrl.u32 %v3021, 7
        %v3023 = vsub.s32 0, %v3022
        %v3024 = vrot.slane %v3019, %v3023
        %v3025 = vmul.f32 %v2968, %v2905
        %v3026 = vmul.f32 %v2976, %v2906
        %v3027 = vmul.f32 %v2984, %v2907
        %v3028 = vmul.f32 %v2992, %v2908
        %v3029 = vmul.f32 %v3000, %v2909
        %v3030 = vmul.f32 %v3008, %v2910
        %v3031 = vmul.f32 %v3016, %v2911
        %v3032 = vmul.f32 %v3024, %v2912
        %v3033 = vsub.f32 %v2945, %v3025
        %v3034 = vsub.f32 %v2946, %v3025
        %v3035 = vsub.f32 %v2947, %v3026
        %v3036 = vsub.f32 %v2948, %v3026
        %v3037 = vsub.f32 %v2949, %v3027
        %v3038 = vsub.f32 %v2950, %v3027
        %v3039 = vsub.f32 %v2951, %v3028
        %v3040 = vsub.f32 %v2952, %v3028
        %v3041 = vsub.f32 %v2953, %v3029
        %v3042 = vsub.f32 %v2954, %v3029
        %v3043 = vsub.f32 %v2955, %v3030
        %v3044 = vsub.f32 %v2956, %v3030
        %v3045 = vsub.f32 %v2957, %v3031
        %v3046 = vsub.f32 %v2958, %v3031
        %v3047 = vsub.f32 %v2959, %v3032
        %v3048 = vsub.f32 %v2960, %v3032
        %3049 = vset.pattern.permute.xlu0 19
        %3050 = vperm.xlu0 %3049, %v504
        %v3051 = vpop.permute.xlu0 %3050
        %3053 = vset.pattern.permute.xlu0 19
        %3054 = vperm.xlu0 %3053, %v508
        %v3055 = vpop.permute.xlu0 %3054
        %3057 = vset.pattern.permute.xlu0 19
        %3058 = vperm.xlu0 %3057, %v512
        %v3059 = vpop.permute.xlu0 %3058
        %3061 = vset.pattern.permute.xlu0 19
        %3062 = vperm.xlu0 %3061, %v516
        %v3063 = vpop.permute.xlu0 %3062
        %3065 = vset.pattern.permute.xlu0 19
        %3066 = vperm.xlu0 %3065, %v520
        %v3067 = vpop.permute.xlu0 %3066
        %3069 = vset.pattern.permute.xlu0 19
        %3070 = vperm.xlu0 %3069, %v524
        %v3071 = vpop.permute.xlu0 %3070
        %3073 = vset.pattern.permute.xlu0 19
        %3074 = vperm.xlu0 %3073, %v528
        %v3075 = vpop.permute.xlu0 %3074
        %3077 = vset.pattern.permute.xlu0 19
        %3078 = vperm.xlu0 %3077, %v532
        %v3079 = vpop.permute.xlu0 %3078
        %v3081 = vmul.f32 %v3033, %v3051
        %v3082 = vmul.f32 %v3034, %v3051
        %v3083 = vmul.f32 %v3035, %v3055
        %v3084 = vmul.f32 %v3036, %v3055
        %v3085 = vmul.f32 %v3037, %v3059
        %v3086 = vmul.f32 %v3038, %v3059
        %v3087 = vmul.f32 %v3039, %v3063
        %v3088 = vmul.f32 %v3040, %v3063
        %v3089 = vmul.f32 %v3041, %v3067
        %v3090 = vmul.f32 %v3042, %v3067
        %v3091 = vmul.f32 %v3043, %v3071
        %v3092 = vmul.f32 %v3044, %v3071
        %v3093 = vmul.f32 %v3045, %v3075
        %v3094 = vmul.f32 %v3046, %v3075
        %v3095 = vmul.f32 %v3047, %v3079
        %v3096 = vmul.f32 %v3048, %v3079
        %3097 = vset.pattern.permute.xlu0 20
        %3098 = vperm.xlu0 %3097, %v938
        %v3099 = vpop.permute.xlu0 %3098
        %3101 = vset.pattern.permute.xlu0 20
        %3102 = vperm.xlu0 %3101, %v942
        %v3103 = vpop.permute.xlu0 %3102
        %3105 = vset.pattern.permute.xlu0 20
        %3106 = vperm.xlu0 %3105, %v946
        %v3107 = vpop.permute.xlu0 %3106
        %3109 = vset.pattern.permute.xlu0 20
        %3110 = vperm.xlu0 %3109, %v950
        %v3111 = vpop.permute.xlu0 %3110
        %3113 = vset.pattern.permute.xlu0 20
        %3114 = vperm.xlu0 %3113, %v954
        %v3115 = vpop.permute.xlu0 %3114
        %3117 = vset.pattern.permute.xlu0 20
        %3118 = vperm.xlu0 %3117, %v958
        %v3119 = vpop.permute.xlu0 %3118
        %3121 = vset.pattern.permute.xlu0 20
        %3122 = vperm.xlu0 %3121, %v962
        %v3123 = vpop.permute.xlu0 %3122
        %3125 = vset.pattern.permute.xlu0 20
        %3126 = vperm.xlu0 %3125, %v966
        %v3127 = vpop.permute.xlu0 %3126
        %v3129 = vmul.f32 %v1231, %v3099
        %v3130 = vmul.f32 %v1232, %v3099
        %v3131 = vmul.f32 %v1233, %v3103
        %v3132 = vmul.f32 %v1234, %v3103
        %v3133 = vmul.f32 %v1235, %v3107
        %v3134 = vmul.f32 %v1236, %v3107
        %v3135 = vmul.f32 %v1237, %v3111
        %v3136 = vmul.f32 %v1238, %v3111
        %v3137 = vmul.f32 %v1239, %v3115
        %v3138 = vmul.f32 %v1240, %v3115
        %v3139 = vmul.f32 %v1241, %v3119
        %v3140 = vmul.f32 %v1242, %v3119
        %v3141 = vmul.f32 %v1243, %v3123
        %v3142 = vmul.f32 %v1244, %v3123
        %v3143 = vmul.f32 %v1245, %v3127
        %v3144 = vmul.f32 %v1246, %v3127
        %v3145 = vadd.f32 %v3081, %v3129
        %v3146 = vadd.f32 %v3082, %v3130
        %v3147 = vadd.f32 %v3083, %v3131
        %v3148 = vadd.f32 %v3084, %v3132
        %v3149 = vadd.f32 %v3085, %v3133
        %v3150 = vadd.f32 %v3086, %v3134
        %v3151 = vadd.f32 %v3087, %v3135
        %v3152 = vadd.f32 %v3088, %v3136
        %v3153 = vadd.f32 %v3089, %v3137
        %v3154 = vadd.f32 %v3090, %v3138
        %v3155 = vadd.f32 %v3091, %v3139
        %v3156 = vadd.f32 %v3092, %v3140
        %v3157 = vadd.f32 %v3093, %v3141
        %v3158 = vadd.f32 %v3094, %v3142
        %v3159 = vadd.f32 %v3095, %v3143
        %v3160 = vadd.f32 %v3096, %v3144
        %3161 = vset.pattern.permute.xlu0 24
        %3162 = vperm.xlu0 %3161, %v504
        %v3163 = vpop.permute.xlu0 %3162
        %3165 = vset.pattern.permute.xlu0 24
        %3166 = vperm.xlu0 %3165, %v508
        %v3167 = vpop.permute.xlu0 %3166
        %3169 = vset.pattern.permute.xlu0 24
        %3170 = vperm.xlu0 %3169, %v512
        %v3171 = vpop.permute.xlu0 %3170
        %3173 = vset.pattern.permute.xlu0 24
        %3174 = vperm.xlu0 %3173, %v516
        %v3175 = vpop.permute.xlu0 %3174
        %3177 = vset.pattern.permute.xlu0 24
        %3178 = vperm.xlu0 %3177, %v520
        %v3179 = vpop.permute.xlu0 %3178
        %3181 = vset.pattern.permute.xlu0 24
        %3182 = vperm.xlu0 %3181, %v524
        %v3183 = vpop.permute.xlu0 %3182
        %3185 = vset.pattern.permute.xlu0 24
        %3186 = vperm.xlu0 %3185, %v528
        %v3187 = vpop.permute.xlu0 %3186
        %3189 = vset.pattern.permute.xlu0 24
        %3190 = vperm.xlu0 %3189, %v532
        %v3191 = vpop.permute.xlu0 %3190
        %v3193 = vmul.f32 %v3163, %v3145
        %v3194 = vmul.f32 %v3163, %v3146
        %v3195 = vmul.f32 %v3167, %v3147
        %v3196 = vmul.f32 %v3167, %v3148
        %v3197 = vmul.f32 %v3171, %v3149
        %v3198 = vmul.f32 %v3171, %v3150
        %v3199 = vmul.f32 %v3175, %v3151
        %v3200 = vmul.f32 %v3175, %v3152
        %v3201 = vmul.f32 %v3179, %v3153
        %v3202 = vmul.f32 %v3179, %v3154
        %v3203 = vmul.f32 %v3183, %v3155
        %v3204 = vmul.f32 %v3183, %v3156
        %v3205 = vmul.f32 %v3187, %v3157
        %v3206 = vmul.f32 %v3187, %v3158
        %v3207 = vmul.f32 %v3191, %v3159
        %v3208 = vmul.f32 %v3191, %v3160
        %3209 = vset.pattern.permute.xlu0 25
        %3210 = vperm.xlu0 %3209, %v504
        %v3211 = vpop.permute.xlu0 %3210
        %3213 = vset.pattern.permute.xlu0 25
        %3214 = vperm.xlu0 %3213, %v508
        %v3215 = vpop.permute.xlu0 %3214
        %3217 = vset.pattern.permute.xlu0 25
        %3218 = vperm.xlu0 %3217, %v512
        %v3219 = vpop.permute.xlu0 %3218
        %3221 = vset.pattern.permute.xlu0 25
        %3222 = vperm.xlu0 %3221, %v516
        %v3223 = vpop.permute.xlu0 %3222
        %3225 = vset.pattern.permute.xlu0 25
        %3226 = vperm.xlu0 %3225, %v520
        %v3227 = vpop.permute.xlu0 %3226
        %3229 = vset.pattern.permute.xlu0 25
        %3230 = vperm.xlu0 %3229, %v524
        %v3231 = vpop.permute.xlu0 %3230
        %3233 = vset.pattern.permute.xlu0 25
        %3234 = vperm.xlu0 %3233, %v528
        %v3235 = vpop.permute.xlu0 %3234
        %3237 = vset.pattern.permute.xlu0 25
        %3238 = vperm.xlu0 %3237, %v532
        %v3239 = vpop.permute.xlu0 %3238
        %v3241 = vmul.f32 %v3211, %v209
        %v3242 = vmul.f32 %v3211, %v210
        %v3243 = vmul.f32 %v3215, %v211
        %v3244 = vmul.f32 %v3215, %v212
        %v3245 = vmul.f32 %v3219, %v213
        %v3246 = vmul.f32 %v3219, %v214
        %v3247 = vmul.f32 %v3223, %v215
        %v3248 = vmul.f32 %v3223, %v216
        %v3249 = vmul.f32 %v3227, %v217
        %v3250 = vmul.f32 %v3227, %v218
        %v3251 = vmul.f32 %v3231, %v219
        %v3252 = vmul.f32 %v3231, %v220
        %v3253 = vmul.f32 %v3235, %v221
        %v3254 = vmul.f32 %v3235, %v222
        %v3255 = vmul.f32 %v3239, %v223
        %v3256 = vmul.f32 %v3239, %v224
        %v3257 = vadd.f32 %v3193, %v3241
        %v3258 = vadd.f32 %v3194, %v3242
        %v3259 = vadd.f32 %v3195, %v3243
        %v3260 = vadd.f32 %v3196, %v3244
        %v3261 = vadd.f32 %v3197, %v3245
        %v3262 = vadd.f32 %v3198, %v3246
        %v3263 = vadd.f32 %v3199, %v3247
        %v3264 = vadd.f32 %v3200, %v3248
        %v3265 = vadd.f32 %v3201, %v3249
        %v3266 = vadd.f32 %v3202, %v3250
        %v3267 = vadd.f32 %v3203, %v3251
        %v3268 = vadd.f32 %v3204, %v3252
        %v3269 = vadd.f32 %v3205, %v3253
        %v3270 = vadd.f32 %v3206, %v3254
        %v3271 = vadd.f32 %v3207, %v3255
        %v3272 = vadd.f32 %v3208, %v3256
        %v3273 = vadd.f32 %v3257, %v2543
        %v3274 = vadd.f32 %v3258, %v2544
        %v3275 = vadd.f32 %v3259, %v2545
        %v3276 = vadd.f32 %v3260, %v2546
        %v3277 = vadd.f32 %v3261, %v2547
        %v3278 = vadd.f32 %v3262, %v2548
        %v3279 = vadd.f32 %v3263, %v2549
        %v3280 = vadd.f32 %v3264, %v2550
        %v3281 = vadd.f32 %v3265, %v2551
        %v3282 = vadd.f32 %v3266, %v2552
        %v3283 = vadd.f32 %v3267, %v2553
        %v3284 = vadd.f32 %v3268, %v2554
        %v3285 = vadd.f32 %v3269, %v2555
        %v3286 = vadd.f32 %v3270, %v2556
        %v3287 = vadd.f32 %v3271, %v2557
        %v3288 = vadd.f32 %v3272, %v2558
        %3289 = vst.msk [vmem:[%s187] sm:$0xff] %vm853, %v3273
        %3290 = vst.msk [vmem:[%s187 + $0x8] sm:$0xff] %vm853, %v3274
        %3291 = vst.msk [vmem:[%s187 + $0x10] sm:$0xff] %vm853, %v3275
        %3292 = vst.msk [vmem:[%s187 + $0x18] sm:$0xff] %vm853, %v3276
        %3293 = vst.msk [vmem:[%s187 + $0x20] sm:$0xff] %vm853, %v3277
        %3294 = vst.msk [vmem:[%s187 + $0x28] sm:$0xff] %vm853, %v3278
        %3295 = vst.msk [vmem:[%s187 + $0x30] sm:$0xff] %vm853, %v3279
        %3296 = vst.msk [vmem:[%s187 + $0x38] sm:$0xff] %vm853, %v3280
        %3297 = vst.msk [vmem:[%s187 + $0x40] sm:$0xff] %vm853, %v3281
        %3298 = vst.msk [vmem:[%s187 + $0x48] sm:$0xff] %vm853, %v3282
        %3299 = vst.msk [vmem:[%s187 + $0x50] sm:$0xff] %vm853, %v3283
        %3300 = vst.msk [vmem:[%s187 + $0x58] sm:$0xff] %vm853, %v3284
        %3301 = vst.msk [vmem:[%s187 + $0x60] sm:$0xff] %vm853, %v3285
        %3302 = vst.msk [vmem:[%s187 + $0x68] sm:$0xff] %vm853, %v3286
        %3303 = vst.msk [vmem:[%s187 + $0x70] sm:$0xff] %vm853, %v3287
        %3304 = vst.msk [vmem:[%s187 + $0x78] sm:$0xff] %vm853, %v3288
        %s3305 = sand.u32 %s94, 1
        %s3306 = scalar_lea.sflag [#allocation5], %s3305
        %s3307 = sand.u32 %s94, 1
        %s3308 = smul.addr %s3307, 128
        %s3309 = scalar_lea.vmem [#allocation4], %s3308
        // Predicated region
        $region29: #{multi_shape_kernel_forward.1} parent=27 // pred_check
          %p3310 = pneg %p104
        $region30: #{multi_shape_kernel_forward.1} parent=27 // pred_check_branch
          %3312 = sbr.rel (%p3310) target = $region32
        $region31: #{multi_shape_kernel_forward.1} parent=27 // pred_region
          %s3313 = smul.u32 8, %s21
          %s3315 = ssub.s32 2048, 2048
          %3316 = vsyncadd %s3306, %s3315
          %s3317 = smul.addr %s3313, 2
          %s3318 = smul.addr %s20, 16
          %s3319 = sadd.s32 %s3317, %s3318
          %s3320 = smul.addr %s3319, 128
          %s3321 = scalar_lea.hbm %s2, %s3320
          %s3322 = sshll.u32 %s3309, 4
          %s3323 = int_to_ptr.vmem [resolvable:$true] %s3322
          %3328 = dma.vmem_to_hbm [thread:$0]  %s3323, 2048, %s3321, %s3306, 128, 128, 8
        $region32: #{multi_shape_kernel_forward.1} parent=27 // pred_fallthru
          _
      $region28: #{multi_shape_kernel_forward.1} parent=5 // pred_fallthru
        _
      %p3329 = scmp.le.s32.totalorder 2, %s11
      // Predicated region
      $region33: #{multi_shape_kernel_forward.1} parent=5 // pred_check
        %p3330 = pneg %p3329
      $region34: #{multi_shape_kernel_forward.1} parent=5 // pred_check_branch
        %3332 = sbr.rel (%p3330) target = $region36
      $region35: #{multi_shape_kernel_forward.1} parent=5 // pred_region
        %s3333 = ssub.s32 %s11, 2
        // Predicated region
        $region37: #{multi_shape_kernel_forward.1} parent=35 // pred_check
          %p3334 = pneg %p110
        $region38: #{multi_shape_kernel_forward.1} parent=35 // pred_check_branch
          %3336 = sbr.rel (%p3334) target = $region40
        $region39: #{multi_shape_kernel_forward.1} parent=35 // pred_region
          %s3337 = sand.u32 %s95, 1
          %s3338 = scalar_lea.sflag [#allocation5], %s3337
          %s3339 = sand.u32 %s95, 1
          %s3340 = smul.addr %s3339, 128
          %s3341 = scalar_lea.vmem [#allocation4], %s3340
          %3342 = dma.done %s3338, 2048
        $region40: #{multi_shape_kernel_forward.1} parent=35 // pred_fallthru
          _
      $region36: #{multi_shape_kernel_forward.1} parent=5 // pred_fallthru
        _
    $region6: #{multi_shape_kernel_forward.1} parent=1 // loop_footer
      %s15 = sadd.s32 1, %s11
    $region7: #{multi_shape_kernel_forward.1} parent=1 // loop_footer_branch
      %10 = sbr.rel target = $region3
    $region8: #{multi_shape_kernel_forward.1} parent=1 // loop_exit
      _
    %3343 = vsyncpa [#allocation5], 1
    %s3344 = scalar_lea.sflag [#allocation5], 1
    %3345 = vsyncpa %s3344, 1

</llo_original>
